<compile_context>
chip_gen: v6e
topology: v6e:2x2x1
jax: 0.10.0
libtpu: 0.0.40
codegen_flags: <defaults>
</compile_context>

<pallas_src>
import functools

import jax
import jax.numpy as jnp
from jax.experimental import pallas as pl
from jax.experimental.pallas import tpu as pltpu


def gru_kernel(gi_ref, h0_ref, w_hh_ref, b_hn_ref, hs_ref, *, mxu_dtype):
    """Whole GRU recurrence in one grid step.

    gi_ref:   (S*F*B, 3H) f32  precomputed x*W_ih + b_ih + [b_hr, b_hz, 0]
    h0_ref:   (B, H)      f32  initial hidden state
    w_hh_ref: (H, 3H)     f32  W_hh transposed (gate order r, z, n)
    b_hn_ref: (1, H)      f32  b_hn (must stay inside the r* multiply)
    hs_ref:   (S, B, H)   f32  hidden state after each inner sequence
                               (outs = Linear(hs) is done in XLA afterwards)
    """
    S, B, H = hs_ref.shape
    F = gi_ref.shape[0] // (S * B)

    w_hh = w_hh_ref[...].astype(mxu_dtype)                  # cast once, reused every step
    b_hn = jnp.broadcast_to(b_hn_ref[...], (B, H))          # hoisted out of the unrolled loop

    # ---- serial recurrence, fully unrolled (S*F = 21, static) ----
    h = h0_ref[...]                                          # (B, H) f32 carried in vregs
    for i in range(S):
        for t in range(F):
            base = (i * F + t) * B
            gi = gi_ref[base:base + B, :]                    # one aligned vld per step
            gh = jnp.dot(h.astype(mxu_dtype), w_hh,
                         preferred_element_type=jnp.float32)  # (B, 3H) MXU
            rz = jax.nn.sigmoid(gi[:, :2 * H] + gh[:, :2 * H])
            r = rz[:, :H]
            z = rz[:, H:]
            n = jnp.tanh(gi[:, 2 * H:] + r * (gh[:, 2 * H:] + b_hn))
            h = n + z * (h - n)
        hs_ref[i, :, :] = h.astype(hs_ref.dtype)             # hidden after sequence i


def gru_forward(state, hidden, params, *, mxu_dtype=jnp.bfloat16):
    """state: (S, B, F) f32, hidden: (1, B, H) f32 -> (outs (S, B, O), hidden (1, B, H))."""
    S, B, F = state.shape
    H = params["w_hh"].shape[0]

    # ---- XLA prologue (h-independent, off the serial chain) ----
    # b_ih (all gates) + b_hh for r, z pre-summed; b_hn stays inside the r* multiply.
    b_gi = params["b_ih"] + jnp.concatenate(
        [params["b_hh"][:, :2 * H], jnp.zeros((1, H), jnp.float32)], axis=1)
    b_hn = params["b_hh"][:, 2 * H:]

    # input_size == 1, so W_ih @ x is a broadcast multiply; do it densely in XLA.
    x = jnp.transpose(state, (0, 2, 1)).reshape(S * F * B, 1)      # time-major per outer step
    gi = x * params["w_ih"] + b_gi                                  # (S*F*B, 3H) f32

    h0 = hidden[0]                                                  # (B, H)

    kernel = functools.partial(gru_kernel, mxu_dtype=mxu_dtype)

    h_states = pl.pallas_call(
        kernel,
        out_shape=jax.ShapeDtypeStruct((S, B, H), jnp.float32),
        grid_spec=pltpu.PrefetchScalarGridSpec(
            num_scalar_prefetch=0,
            grid=(1,),                                              # single invocation
            in_specs=[
                pl.BlockSpec((S * F * B, 3 * H), lambda i: (0, 0)),  # precomputed gi, one DMA
                pl.BlockSpec((B, H), lambda i: (0, 0)),              # h0
                pl.BlockSpec((H, 3 * H), lambda i: (0, 0)),          # W_hh^T
                pl.BlockSpec((1, H), lambda i: (0, 0)),              # b_hn
            ],
            out_specs=pl.BlockSpec((S, B, H), lambda i: (0, 0, 0)),  # lane-dense hidden slab
        ),
        compiler_params=pltpu.CompilerParams(
            dimension_semantics=("arbitrary",)),
    )(gi, h0, params["w_hh"], b_hn)

    # ---- XLA epilogue: hoisted final Linear (one batched matmul) ----
    outs = jnp.dot(h_states, params["w_lin"]) + params["b_lin"]     # (S, B, O)
    return outs, h_states[S - 1][None]


def init_params(key, hidden_size, output_dim):
    """Deterministic init mimicking PyTorch's U(-1/sqrt(H), 1/sqrt(H))."""
    H, O = hidden_size, output_dim
    k = 1.0 / jnp.sqrt(jnp.float32(H))
    ks = jax.random.split(key, 6)
    u = lambda kk, shape: jax.random.uniform(kk, shape, jnp.float32, -k, k)
    return {
        "w_ih": u(ks[0], (1, 3 * H)),       # weight_ih_l0 (3H, 1) transposed
        "w_hh": u(ks[1], (H, 3 * H)),       # weight_hh_l0 (3H, H) transposed
        "b_ih": u(ks[2], (1, 3 * H)),
        "b_hh": u(ks[3], (1, 3 * H)),
        "w_lin": u(ks[4], (H, O)),          # linear.weight (O, H) transposed
        "b_lin": u(ks[5], (1, O)),
    }


def gru_forward_ref(state, hidden, p):
    """Pure-JAX f32 reference matching torch.nn.GRU semantics (1 layer, 1 dir)."""
    S, B, F = state.shape
    H = p["w_hh"].shape[0]
    h = hidden[0]
    outs = []
    for i in range(S):
        for t in range(F):
            x = state[i, :, t:t + 1]                      # (B, 1)
            gi = x * p["w_ih"] + p["b_ih"]
            gh = h @ p["w_hh"] + p["b_hh"]
            r = jax.nn.sigmoid(gi[:, :H] + gh[:, :H])
            z = jax.nn.sigmoid(gi[:, H:2 * H] + gh[:, H:2 * H])
            n = jnp.tanh(gi[:, 2 * H:] + r * gh[:, 2 * H:])
            h = (1.0 - z) * n + z * h
        outs.append(h @ p["w_lin"] + p["b_lin"])
    return jnp.stack(outs, 0), h[None]


if __name__ == "__main__":
    # Small shapes consistent with the module's forward:
    # state (S=3, B=16, F=7), hidden (1, B, H=32), output_dim=4, num_layers=1.
    S, B, F = 3, 16, 7
    hidden_size, output_dim, num_layers = 32, 4, 1

    key = jax.random.PRNGKey(0)
    k_state, k_param = jax.random.split(key)
    state = jax.random.normal(k_state, (S, B, F), jnp.float32)
    hidden = jnp.zeros((num_layers, B, hidden_size), jnp.float32)  # init_h_state
    params = init_params(k_param, hidden_size, output_dim)

    outs_ref, h_ref = gru_forward_ref(state, hidden, params)

    # f32 MXU-operand path — tight check.
    outs32, h32 = gru_forward(state, hidden, params, mxu_dtype=jnp.float32)
    jax.block_until_ready((outs32, h32))
    assert outs32.shape == (S, B, output_dim)
    assert h32.shape == (num_layers, B, hidden_size)
    assert jnp.allclose(outs32, outs_ref, atol=1e-4, rtol=1e-4)
    assert jnp.allclose(h32, h_ref, atol=1e-4, rtol=1e-4)

    # bf16 MXU-operand path (default) — looser tolerance because bf16 operand
    # rounding compounds over the 21-step recurrence.
    outs, h_out = gru_forward(state, hidden, params)
    jax.block_until_ready((outs, h_out))
    assert outs.shape == (S, B, output_dim)
    assert h_out.shape == (num_layers, B, hidden_size)
    assert jnp.allclose(outs, outs_ref, atol=5e-2, rtol=5e-2)
    assert jnp.allclose(h_out, h_ref, atol=5e-2, rtol=5e-2)

    print("KERNEL_OK")
</pallas_src>

<mosaic_0001>
module attributes {stable_mosaic.version = 11 : i64} {
  func.func @gru_kernel(%arg0: i32, %arg1: memref<336x96xf32, #tpu.memory_space<vmem>>, %arg2: memref<16x32xf32, #tpu.memory_space<vmem>>, %arg3: memref<32x96xf32, #tpu.memory_space<vmem>>, %arg4: memref<1x32xf32, #tpu.memory_space<vmem>>, %arg5: memref<3x16x32xf32, #tpu.memory_space<vmem>>) attributes {dimension_semantics = [#tpu.dimension_semantics<arbitrary>], iteration_bounds = array<i64: 1>, scalar_prefetch = 0 : i64, scratch_operands = 0 : i64, tpu.core_type = #tpu.core_type<tc>, window_params = [{pipeline_mode = #tpu.pipeline_mode<synchronous>, transform_indices = @transform_0, window_bounds = array<i64: 336, 96>}, {pipeline_mode = #tpu.pipeline_mode<synchronous>, transform_indices = @transform_1, window_bounds = array<i64: 16, 32>}, {pipeline_mode = #tpu.pipeline_mode<synchronous>, transform_indices = @transform_2, window_bounds = array<i64: 32, 96>}, {pipeline_mode = #tpu.pipeline_mode<synchronous>, transform_indices = @transform_3, window_bounds = array<i64: 1, 32>}, {pipeline_mode = #tpu.pipeline_mode<synchronous>, transform_indices = @transform_4, window_bounds = array<i64: 3, 16, 32>}]} {
    %c0 = arith.constant 0 : index
    %c0_0 = arith.constant 0 : index
    %0 = vector.load %arg3[%c0, %c0_0] : memref<32x96xf32, #tpu.memory_space<vmem>>, vector<32x96xf32>
    %c0_1 = arith.constant 0 : index
    %c0_2 = arith.constant 0 : index
    %1 = vector.load %arg4[%c0_1, %c0_2] : memref<1x32xf32, #tpu.memory_space<vmem>>, vector<1x32xf32>
    %2 = vector.shape_cast %1 : vector<1x32xf32> to vector<1x32xf32>
    %3 = vector.broadcast %2 : vector<1x32xf32> to vector<16x32xf32>
    %c0_3 = arith.constant 0 : index
    %c0_4 = arith.constant 0 : index
    %4 = vector.load %arg2[%c0_3, %c0_4] : memref<16x32xf32, #tpu.memory_space<vmem>>, vector<16x32xf32>
    %c0_5 = arith.constant 0 : index
    %c0_6 = arith.constant 0 : index
    %5 = vector.load %arg1[%c0_5, %c0_6] : memref<336x96xf32, #tpu.memory_space<vmem>>, vector<16x96xf32>
    %cst = arith.constant dense<0.000000e+00> : vector<16x96xf32>
    %6 = tpu.matmul %4, %0, %cst {dimension_numbers = #tpu.dot_dimension_numbers<[1], [0], [0], [1], [0, 0, 1, 1], [], []>} : vector<16x32xf32>, vector<32x96xf32>, vector<16x96xf32> -> vector<16x96xf32>
    %7 = vector.extract_strided_slice %5 {offsets = [0, 0], sizes = [16, 64], strides = [1, 1]} : vector<16x96xf32> to vector<16x64xf32>
    %8 = vector.extract_strided_slice %6 {offsets = [0, 0], sizes = [16, 64], strides = [1, 1]} : vector<16x96xf32> to vector<16x64xf32>
    %9 = arith.addf %7, %8 : vector<16x64xf32>
    %10 = arith.negf %9 : vector<16x64xf32>
    %11 = math.exp %10 : vector<16x64xf32>
    %cst_7 = arith.constant 1.000000e+00 : f32
    %12 = vector.broadcast %cst_7 : f32 to vector<16x64xf32>
    %13 = arith.addf %12, %11 : vector<16x64xf32>
    %14 = arith.divf %12, %13 : vector<16x64xf32>
    %15 = vector.extract_strided_slice %14 {offsets = [0, 0], sizes = [16, 32], strides = [1, 1]} : vector<16x64xf32> to vector<16x32xf32>
    %16 = vector.extract_strided_slice %14 {offsets = [0, 32], sizes = [16, 32], strides = [1, 1]} : vector<16x64xf32> to vector<16x32xf32>
    %17 = vector.extract_strided_slice %5 {offsets = [0, 64], sizes = [16, 32], strides = [1, 1]} : vector<16x96xf32> to vector<16x32xf32>
    %18 = vector.extract_strided_slice %6 {offsets = [0, 64], sizes = [16, 32], strides = [1, 1]} : vector<16x96xf32> to vector<16x32xf32>
    %19 = arith.addf %18, %3 : vector<16x32xf32>
    %20 = arith.mulf %15, %19 : vector<16x32xf32>
    %21 = arith.addf %17, %20 : vector<16x32xf32>
    %22 = math.tanh %21 : vector<16x32xf32>
    %23 = arith.subf %4, %22 : vector<16x32xf32>
    %24 = arith.mulf %16, %23 : vector<16x32xf32>
    %25 = arith.addf %22, %24 : vector<16x32xf32>
    %c16 = arith.constant 16 : index
    %c0_8 = arith.constant 0 : index
    %26 = vector.load %arg1[%c16, %c0_8] : memref<336x96xf32, #tpu.memory_space<vmem>>, vector<16x96xf32>
    %cst_9 = arith.constant dense<0.000000e+00> : vector<16x96xf32>
    %27 = tpu.matmul %25, %0, %cst_9 {dimension_numbers = #tpu.dot_dimension_numbers<[1], [0], [0], [1], [0, 0, 1, 1], [], []>} : vector<16x32xf32>, vector<32x96xf32>, vector<16x96xf32> -> vector<16x96xf32>
    %28 = vector.extract_strided_slice %26 {offsets = [0, 0], sizes = [16, 64], strides = [1, 1]} : vector<16x96xf32> to vector<16x64xf32>
    %29 = vector.extract_strided_slice %27 {offsets = [0, 0], sizes = [16, 64], strides = [1, 1]} : vector<16x96xf32> to vector<16x64xf32>
    %30 = arith.addf %28, %29 : vector<16x64xf32>
    %31 = arith.negf %30 : vector<16x64xf32>
    %32 = math.exp %31 : vector<16x64xf32>
    %cst_10 = arith.constant 1.000000e+00 : f32
    %33 = vector.broadcast %cst_10 : f32 to vector<16x64xf32>
    %34 = arith.addf %33, %32 : vector<16x64xf32>
    %35 = arith.divf %33, %34 : vector<16x64xf32>
    %36 = vector.extract_strided_slice %35 {offsets = [0, 0], sizes = [16, 32], strides = [1, 1]} : vector<16x64xf32> to vector<16x32xf32>
    %37 = vector.extract_strided_slice %35 {offsets = [0, 32], sizes = [16, 32], strides = [1, 1]} : vector<16x64xf32> to vector<16x32xf32>
    %38 = vector.extract_strided_slice %26 {offsets = [0, 64], sizes = [16, 32], strides = [1, 1]} : vector<16x96xf32> to vector<16x32xf32>
    %39 = vector.extract_strided_slice %27 {offsets = [0, 64], sizes = [16, 32], strides = [1, 1]} : vector<16x96xf32> to vector<16x32xf32>
    %40 = arith.addf %39, %3 : vector<16x32xf32>
    %41 = arith.mulf %36, %40 : vector<16x32xf32>
    %42 = arith.addf %38, %41 : vector<16x32xf32>
    %43 = math.tanh %42 : vector<16x32xf32>
    %44 = arith.subf %25, %43 : vector<16x32xf32>
    %45 = arith.mulf %37, %44 : vector<16x32xf32>
    %46 = arith.addf %43, %45 : vector<16x32xf32>
    %c32 = arith.constant 32 : index
    %c0_11 = arith.constant 0 : index
    %47 = vector.load %arg1[%c32, %c0_11] : memref<336x96xf32, #tpu.memory_space<vmem>>, vector<16x96xf32>
    %cst_12 = arith.constant dense<0.000000e+00> : vector<16x96xf32>
    %48 = tpu.matmul %46, %0, %cst_12 {dimension_numbers = #tpu.dot_dimension_numbers<[1], [0], [0], [1], [0, 0, 1, 1], [], []>} : vector<16x32xf32>, vector<32x96xf32>, vector<16x96xf32> -> vector<16x96xf32>
    %49 = vector.extract_strided_slice %47 {offsets = [0, 0], sizes = [16, 64], strides = [1, 1]} : vector<16x96xf32> to vector<16x64xf32>
    %50 = vector.extract_strided_slice %48 {offsets = [0, 0], sizes = [16, 64], strides = [1, 1]} : vector<16x96xf32> to vector<16x64xf32>
    %51 = arith.addf %49, %50 : vector<16x64xf32>
    %52 = arith.negf %51 : vector<16x64xf32>
    %53 = math.exp %52 : vector<16x64xf32>
    %cst_13 = arith.constant 1.000000e+00 : f32
    %54 = vector.broadcast %cst_13 : f32 to vector<16x64xf32>
    %55 = arith.addf %54, %53 : vector<16x64xf32>
    %56 = arith.divf %54, %55 : vector<16x64xf32>
    %57 = vector.extract_strided_slice %56 {offsets = [0, 0], sizes = [16, 32], strides = [1, 1]} : vector<16x64xf32> to vector<16x32xf32>
    %58 = vector.extract_strided_slice %56 {offsets = [0, 32], sizes = [16, 32], strides = [1, 1]} : vector<16x64xf32> to vector<16x32xf32>
    %59 = vector.extract_strided_slice %47 {offsets = [0, 64], sizes = [16, 32], strides = [1, 1]} : vector<16x96xf32> to vector<16x32xf32>
    %60 = vector.extract_strided_slice %48 {offsets = [0, 64], sizes = [16, 32], strides = [1, 1]} : vector<16x96xf32> to vector<16x32xf32>
    %61 = arith.addf %60, %3 : vector<16x32xf32>
    %62 = arith.mulf %57, %61 : vector<16x32xf32>
    %63 = arith.addf %59, %62 : vector<16x32xf32>
    %64 = math.tanh %63 : vector<16x32xf32>
    %65 = arith.subf %46, %64 : vector<16x32xf32>
    %66 = arith.mulf %58, %65 : vector<16x32xf32>
    %67 = arith.addf %64, %66 : vector<16x32xf32>
    %c48 = arith.constant 48 : index
    %c0_14 = arith.constant 0 : index
    %68 = vector.load %arg1[%c48, %c0_14] : memref<336x96xf32, #tpu.memory_space<vmem>>, vector<16x96xf32>
    %cst_15 = arith.constant dense<0.000000e+00> : vector<16x96xf32>
    %69 = tpu.matmul %67, %0, %cst_15 {dimension_numbers = #tpu.dot_dimension_numbers<[1], [0], [0], [1], [0, 0, 1, 1], [], []>} : vector<16x32xf32>, vector<32x96xf32>, vector<16x96xf32> -> vector<16x96xf32>
    %70 = vector.extract_strided_slice %68 {offsets = [0, 0], sizes = [16, 64], strides = [1, 1]} : vector<16x96xf32> to vector<16x64xf32>
    %71 = vector.extract_strided_slice %69 {offsets = [0, 0], sizes = [16, 64], strides = [1, 1]} : vector<16x96xf32> to vector<16x64xf32>
    %72 = arith.addf %70, %71 : vector<16x64xf32>
    %73 = arith.negf %72 : vector<16x64xf32>
    %74 = math.exp %73 : vector<16x64xf32>
    %cst_16 = arith.constant 1.000000e+00 : f32
    %75 = vector.broadcast %cst_16 : f32 to vector<16x64xf32>
    %76 = arith.addf %75, %74 : vector<16x64xf32>
    %77 = arith.divf %75, %76 : vector<16x64xf32>
    %78 = vector.extract_strided_slice %77 {offsets = [0, 0], sizes = [16, 32], strides = [1, 1]} : vector<16x64xf32> to vector<16x32xf32>
    %79 = vector.extract_strided_slice %77 {offsets = [0, 32], sizes = [16, 32], strides = [1, 1]} : vector<16x64xf32> to vector<16x32xf32>
    %80 = vector.extract_strided_slice %68 {offsets = [0, 64], sizes = [16, 32], strides = [1, 1]} : vector<16x96xf32> to vector<16x32xf32>
    %81 = vector.extract_strided_slice %69 {offsets = [0, 64], sizes = [16, 32], strides = [1, 1]} : vector<16x96xf32> to vector<16x32xf32>
    %82 = arith.addf %81, %3 : vector<16x32xf32>
    %83 = arith.mulf %78, %82 : vector<16x32xf32>
    %84 = arith.addf %80, %83 : vector<16x32xf32>
    %85 = math.tanh %84 : vector<16x32xf32>
    %86 = arith.subf %67, %85 : vector<16x32xf32>
    %87 = arith.mulf %79, %86 : vector<16x32xf32>
    %88 = arith.addf %85, %87 : vector<16x32xf32>
    %c64 = arith.constant 64 : index
    %c0_17 = arith.constant 0 : index
    %89 = vector.load %arg1[%c64, %c0_17] : memref<336x96xf32, #tpu.memory_space<vmem>>, vector<16x96xf32>
    %cst_18 = arith.constant dense<0.000000e+00> : vector<16x96xf32>
    %90 = tpu.matmul %88, %0, %cst_18 {dimension_numbers = #tpu.dot_dimension_numbers<[1], [0], [0], [1], [0, 0, 1, 1], [], []>} : vector<16x32xf32>, vector<32x96xf32>, vector<16x96xf32> -> vector<16x96xf32>
    %91 = vector.extract_strided_slice %89 {offsets = [0, 0], sizes = [16, 64], strides = [1, 1]} : vector<16x96xf32> to vector<16x64xf32>
    %92 = vector.extract_strided_slice %90 {offsets = [0, 0], sizes = [16, 64], strides = [1, 1]} : vector<16x96xf32> to vector<16x64xf32>
    %93 = arith.addf %91, %92 : vector<16x64xf32>
    %94 = arith.negf %93 : vector<16x64xf32>
    %95 = math.exp %94 : vector<16x64xf32>
    %cst_19 = arith.constant 1.000000e+00 : f32
    %96 = vector.broadcast %cst_19 : f32 to vector<16x64xf32>
    %97 = arith.addf %96, %95 : vector<16x64xf32>
    %98 = arith.divf %96, %97 : vector<16x64xf32>
    %99 = vector.extract_strided_slice %98 {offsets = [0, 0], sizes = [16, 32], strides = [1, 1]} : vector<16x64xf32> to vector<16x32xf32>
    %100 = vector.extract_strided_slice %98 {offsets = [0, 32], sizes = [16, 32], strides = [1, 1]} : vector<16x64xf32> to vector<16x32xf32>
    %101 = vector.extract_strided_slice %89 {offsets = [0, 64], sizes = [16, 32], strides = [1, 1]} : vector<16x96xf32> to vector<16x32xf32>
    %102 = vector.extract_strided_slice %90 {offsets = [0, 64], sizes = [16, 32], strides = [1, 1]} : vector<16x96xf32> to vector<16x32xf32>
    %103 = arith.addf %102, %3 : vector<16x32xf32>
    %104 = arith.mulf %99, %103 : vector<16x32xf32>
    %105 = arith.addf %101, %104 : vector<16x32xf32>
    %106 = math.tanh %105 : vector<16x32xf32>
    %107 = arith.subf %88, %106 : vector<16x32xf32>
    %108 = arith.mulf %100, %107 : vector<16x32xf32>
    %109 = arith.addf %106, %108 : vector<16x32xf32>
    %c80 = arith.constant 80 : index
    %c0_20 = arith.constant 0 : index
    %110 = vector.load %arg1[%c80, %c0_20] : memref<336x96xf32, #tpu.memory_space<vmem>>, vector<16x96xf32>
    %cst_21 = arith.constant dense<0.000000e+00> : vector<16x96xf32>
    %111 = tpu.matmul %109, %0, %cst_21 {dimension_numbers = #tpu.dot_dimension_numbers<[1], [0], [0], [1], [0, 0, 1, 1], [], []>} : vector<16x32xf32>, vector<32x96xf32>, vector<16x96xf32> -> vector<16x96xf32>
    %112 = vector.extract_strided_slice %110 {offsets = [0, 0], sizes = [16, 64], strides = [1, 1]} : vector<16x96xf32> to vector<16x64xf32>
    %113 = vector.extract_strided_slice %111 {offsets = [0, 0], sizes = [16, 64], strides = [1, 1]} : vector<16x96xf32> to vector<16x64xf32>
    %114 = arith.addf %112, %113 : vector<16x64xf32>
    %115 = arith.negf %114 : vector<16x64xf32>
    %116 = math.exp %115 : vector<16x64xf32>
    %cst_22 = arith.constant 1.000000e+00 : f32
    %117 = vector.broadcast %cst_22 : f32 to vector<16x64xf32>
    %118 = arith.addf %117, %116 : vector<16x64xf32>
    %119 = arith.divf %117, %118 : vector<16x64xf32>
    %120 = vector.extract_strided_slice %119 {offsets = [0, 0], sizes = [16, 32], strides = [1, 1]} : vector<16x64xf32> to vector<16x32xf32>
    %121 = vector.extract_strided_slice %119 {offsets = [0, 32], sizes = [16, 32], strides = [1, 1]} : vector<16x64xf32> to vector<16x32xf32>
    %122 = vector.extract_strided_slice %110 {offsets = [0, 64], sizes = [16, 32], strides = [1, 1]} : vector<16x96xf32> to vector<16x32xf32>
    %123 = vector.extract_strided_slice %111 {offsets = [0, 64], sizes = [16, 32], strides = [1, 1]} : vector<16x96xf32> to vector<16x32xf32>
    %124 = arith.addf %123, %3 : vector<16x32xf32>
    %125 = arith.mulf %120, %124 : vector<16x32xf32>
    %126 = arith.addf %122, %125 : vector<16x32xf32>
    %127 = math.tanh %126 : vector<16x32xf32>
    %128 = arith.subf %109, %127 : vector<16x32xf32>
    %129 = arith.mulf %121, %128 : vector<16x32xf32>
    %130 = arith.addf %127, %129 : vector<16x32xf32>
    %c96 = arith.constant 96 : index
    %c0_23 = arith.constant 0 : index
    %131 = vector.load %arg1[%c96, %c0_23] : memref<336x96xf32, #tpu.memory_space<vmem>>, vector<16x96xf32>
    %cst_24 = arith.constant dense<0.000000e+00> : vector<16x96xf32>
    %132 = tpu.matmul %130, %0, %cst_24 {dimension_numbers = #tpu.dot_dimension_numbers<[1], [0], [0], [1], [0, 0, 1, 1], [], []>} : vector<16x32xf32>, vector<32x96xf32>, vector<16x96xf32> -> vector<16x96xf32>
    %133 = vector.extract_strided_slice %131 {offsets = [0, 0], sizes = [16, 64], strides = [1, 1]} : vector<16x96xf32> to vector<16x64xf32>
    %134 = vector.extract_strided_slice %132 {offsets = [0, 0], sizes = [16, 64], strides = [1, 1]} : vector<16x96xf32> to vector<16x64xf32>
    %135 = arith.addf %133, %134 : vector<16x64xf32>
    %136 = arith.negf %135 : vector<16x64xf32>
    %137 = math.exp %136 : vector<16x64xf32>
    %cst_25 = arith.constant 1.000000e+00 : f32
    %138 = vector.broadcast %cst_25 : f32 to vector<16x64xf32>
    %139 = arith.addf %138, %137 : vector<16x64xf32>
    %140 = arith.divf %138, %139 : vector<16x64xf32>
    %141 = vector.extract_strided_slice %140 {offsets = [0, 0], sizes = [16, 32], strides = [1, 1]} : vector<16x64xf32> to vector<16x32xf32>
    %142 = vector.extract_strided_slice %140 {offsets = [0, 32], sizes = [16, 32], strides = [1, 1]} : vector<16x64xf32> to vector<16x32xf32>
    %143 = vector.extract_strided_slice %131 {offsets = [0, 64], sizes = [16, 32], strides = [1, 1]} : vector<16x96xf32> to vector<16x32xf32>
    %144 = vector.extract_strided_slice %132 {offsets = [0, 64], sizes = [16, 32], strides = [1, 1]} : vector<16x96xf32> to vector<16x32xf32>
    %145 = arith.addf %144, %3 : vector<16x32xf32>
    %146 = arith.mulf %141, %145 : vector<16x32xf32>
    %147 = arith.addf %143, %146 : vector<16x32xf32>
    %148 = math.tanh %147 : vector<16x32xf32>
    %149 = arith.subf %130, %148 : vector<16x32xf32>
    %150 = arith.mulf %142, %149 : vector<16x32xf32>
    %151 = arith.addf %148, %150 : vector<16x32xf32>
    %c0_26 = arith.constant 0 : index
    %c0_27 = arith.constant 0 : index
    %c0_28 = arith.constant 0 : index
    %152 = vector.load %arg5[%c0_26, %c0_27, %c0_28] : memref<3x16x32xf32, #tpu.memory_space<vmem>>, vector<1x16x32xf32>
    %153 = vector.shape_cast %152 : vector<1x16x32xf32> to vector<16x32xf32>
    %154 = vector.shape_cast %151 : vector<16x32xf32> to vector<1x16x32xf32>
    tpu.vector_store %arg5[%c0_26, %c0_27, %c0_28], %154 {strides = array<i32>} : memref<3x16x32xf32, #tpu.memory_space<vmem>>, vector<1x16x32xf32>,
    %c112 = arith.constant 112 : index
    %c0_29 = arith.constant 0 : index
    %155 = vector.load %arg1[%c112, %c0_29] : memref<336x96xf32, #tpu.memory_space<vmem>>, vector<16x96xf32>
    %cst_30 = arith.constant dense<0.000000e+00> : vector<16x96xf32>
    %156 = tpu.matmul %151, %0, %cst_30 {dimension_numbers = #tpu.dot_dimension_numbers<[1], [0], [0], [1], [0, 0, 1, 1], [], []>} : vector<16x32xf32>, vector<32x96xf32>, vector<16x96xf32> -> vector<16x96xf32>
    %157 = vector.extract_strided_slice %155 {offsets = [0, 0], sizes = [16, 64], strides = [1, 1]} : vector<16x96xf32> to vector<16x64xf32>
    %158 = vector.extract_strided_slice %156 {offsets = [0, 0], sizes = [16, 64], strides = [1, 1]} : vector<16x96xf32> to vector<16x64xf32>
    %159 = arith.addf %157, %158 : vector<16x64xf32>
    %160 = arith.negf %159 : vector<16x64xf32>
    %161 = math.exp %160 : vector<16x64xf32>
    %cst_31 = arith.constant 1.000000e+00 : f32
    %162 = vector.broadcast %cst_31 : f32 to vector<16x64xf32>
    %163 = arith.addf %162, %161 : vector<16x64xf32>
    %164 = arith.divf %162, %163 : vector<16x64xf32>
    %165 = vector.extract_strided_slice %164 {offsets = [0, 0], sizes = [16, 32], strides = [1, 1]} : vector<16x64xf32> to vector<16x32xf32>
    %166 = vector.extract_strided_slice %164 {offsets = [0, 32], sizes = [16, 32], strides = [1, 1]} : vector<16x64xf32> to vector<16x32xf32>
    %167 = vector.extract_strided_slice %155 {offsets = [0, 64], sizes = [16, 32], strides = [1, 1]} : vector<16x96xf32> to vector<16x32xf32>
    %168 = vector.extract_strided_slice %156 {offsets = [0, 64], sizes = [16, 32], strides = [1, 1]} : vector<16x96xf32> to vector<16x32xf32>
    %169 = arith.addf %168, %3 : vector<16x32xf32>
    %170 = arith.mulf %165, %169 : vector<16x32xf32>
    %171 = arith.addf %167, %170 : vector<16x32xf32>
    %172 = math.tanh %171 : vector<16x32xf32>
    %173 = arith.subf %151, %172 : vector<16x32xf32>
    %174 = arith.mulf %166, %173 : vector<16x32xf32>
    %175 = arith.addf %172, %174 : vector<16x32xf32>
    %c128 = arith.constant 128 : index
    %c0_32 = arith.constant 0 : index
    %176 = vector.load %arg1[%c128, %c0_32] : memref<336x96xf32, #tpu.memory_space<vmem>>, vector<16x96xf32>
    %cst_33 = arith.constant dense<0.000000e+00> : vector<16x96xf32>
    %177 = tpu.matmul %175, %0, %cst_33 {dimension_numbers = #tpu.dot_dimension_numbers<[1], [0], [0], [1], [0, 0, 1, 1], [], []>} : vector<16x32xf32>, vector<32x96xf32>, vector<16x96xf32> -> vector<16x96xf32>
    %178 = vector.extract_strided_slice %176 {offsets = [0, 0], sizes = [16, 64], strides = [1, 1]} : vector<16x96xf32> to vector<16x64xf32>
    %179 = vector.extract_strided_slice %177 {offsets = [0, 0], sizes = [16, 64], strides = [1, 1]} : vector<16x96xf32> to vector<16x64xf32>
    %180 = arith.addf %178, %179 : vector<16x64xf32>
    %181 = arith.negf %180 : vector<16x64xf32>
    %182 = math.exp %181 : vector<16x64xf32>
    %cst_34 = arith.constant 1.000000e+00 : f32
    %183 = vector.broadcast %cst_34 : f32 to vector<16x64xf32>
    %184 = arith.addf %183, %182 : vector<16x64xf32>
    %185 = arith.divf %183, %184 : vector<16x64xf32>
    %186 = vector.extract_strided_slice %185 {offsets = [0, 0], sizes = [16, 32], strides = [1, 1]} : vector<16x64xf32> to vector<16x32xf32>
    %187 = vector.extract_strided_slice %185 {offsets = [0, 32], sizes = [16, 32], strides = [1, 1]} : vector<16x64xf32> to vector<16x32xf32>
    %188 = vector.extract_strided_slice %176 {offsets = [0, 64], sizes = [16, 32], strides = [1, 1]} : vector<16x96xf32> to vector<16x32xf32>
    %189 = vector.extract_strided_slice %177 {offsets = [0, 64], sizes = [16, 32], strides = [1, 1]} : vector<16x96xf32> to vector<16x32xf32>
    %190 = arith.addf %189, %3 : vector<16x32xf32>
    %191 = arith.mulf %186, %190 : vector<16x32xf32>
    %192 = arith.addf %188, %191 : vector<16x32xf32>
    %193 = math.tanh %192 : vector<16x32xf32>
    %194 = arith.subf %175, %193 : vector<16x32xf32>
    %195 = arith.mulf %187, %194 : vector<16x32xf32>
    %196 = arith.addf %193, %195 : vector<16x32xf32>
    %c144 = arith.constant 144 : index
    %c0_35 = arith.constant 0 : index
    %197 = vector.load %arg1[%c144, %c0_35] : memref<336x96xf32, #tpu.memory_space<vmem>>, vector<16x96xf32>
    %cst_36 = arith.constant dense<0.000000e+00> : vector<16x96xf32>
    %198 = tpu.matmul %196, %0, %cst_36 {dimension_numbers = #tpu.dot_dimension_numbers<[1], [0], [0], [1], [0, 0, 1, 1], [], []>} : vector<16x32xf32>, vector<32x96xf32>, vector<16x96xf32> -> vector<16x96xf32>
    %199 = vector.extract_strided_slice %197 {offsets = [0, 0], sizes = [16, 64], strides = [1, 1]} : vector<16x96xf32> to vector<16x64xf32>
    %200 = vector.extract_strided_slice %198 {offsets = [0, 0], sizes = [16, 64], strides = [1, 1]} : vector<16x96xf32> to vector<16x64xf32>
    %201 = arith.addf %199, %200 : vector<16x64xf32>
    %202 = arith.negf %201 : vector<16x64xf32>
    %203 = math.exp %202 : vector<16x64xf32>
    %cst_37 = arith.constant 1.000000e+00 : f32
    %204 = vector.broadcast %cst_37 : f32 to vector<16x64xf32>
    %205 = arith.addf %204, %203 : vector<16x64xf32>
    %206 = arith.divf %204, %205 : vector<16x64xf32>
    %207 = vector.extract_strided_slice %206 {offsets = [0, 0], sizes = [16, 32], strides = [1, 1]} : vector<16x64xf32> to vector<16x32xf32>
    %208 = vector.extract_strided_slice %206 {offsets = [0, 32], sizes = [16, 32], strides = [1, 1]} : vector<16x64xf32> to vector<16x32xf32>
    %209 = vector.extract_strided_slice %197 {offsets = [0, 64], sizes = [16, 32], strides = [1, 1]} : vector<16x96xf32> to vector<16x32xf32>
    %210 = vector.extract_strided_slice %198 {offsets = [0, 64], sizes = [16, 32], strides = [1, 1]} : vector<16x96xf32> to vector<16x32xf32>
    %211 = arith.addf %210, %3 : vector<16x32xf32>
    %212 = arith.mulf %207, %211 : vector<16x32xf32>
    %213 = arith.addf %209, %212 : vector<16x32xf32>
    %214 = math.tanh %213 : vector<16x32xf32>
    %215 = arith.subf %196, %214 : vector<16x32xf32>
    %216 = arith.mulf %208, %215 : vector<16x32xf32>
    %217 = arith.addf %214, %216 : vector<16x32xf32>
    %c160 = arith.constant 160 : index
    %c0_38 = arith.constant 0 : index
    %218 = vector.load %arg1[%c160, %c0_38] : memref<336x96xf32, #tpu.memory_space<vmem>>, vector<16x96xf32>
    %cst_39 = arith.constant dense<0.000000e+00> : vector<16x96xf32>
    %219 = tpu.matmul %217, %0, %cst_39 {dimension_numbers = #tpu.dot_dimension_numbers<[1], [0], [0], [1], [0, 0, 1, 1], [], []>} : vector<16x32xf32>, vector<32x96xf32>, vector<16x96xf32> -> vector<16x96xf32>
    %220 = vector.extract_strided_slice %218 {offsets = [0, 0], sizes = [16, 64], strides = [1, 1]} : vector<16x96xf32> to vector<16x64xf32>
    %221 = vector.extract_strided_slice %219 {offsets = [0, 0], sizes = [16, 64], strides = [1, 1]} : vector<16x96xf32> to vector<16x64xf32>
    %222 = arith.addf %220, %221 : vector<16x64xf32>
    %223 = arith.negf %222 : vector<16x64xf32>
    %224 = math.exp %223 : vector<16x64xf32>
    %cst_40 = arith.constant 1.000000e+00 : f32
    %225 = vector.broadcast %cst_40 : f32 to vector<16x64xf32>
    %226 = arith.addf %225, %224 : vector<16x64xf32>
    %227 = arith.divf %225, %226 : vector<16x64xf32>
    %228 = vector.extract_strided_slice %227 {offsets = [0, 0], sizes = [16, 32], strides = [1, 1]} : vector<16x64xf32> to vector<16x32xf32>
    %229 = vector.extract_strided_slice %227 {offsets = [0, 32], sizes = [16, 32], strides = [1, 1]} : vector<16x64xf32> to vector<16x32xf32>
    %230 = vector.extract_strided_slice %218 {offsets = [0, 64], sizes = [16, 32], strides = [1, 1]} : vector<16x96xf32> to vector<16x32xf32>
    %231 = vector.extract_strided_slice %219 {offsets = [0, 64], sizes = [16, 32], strides = [1, 1]} : vector<16x96xf32> to vector<16x32xf32>
    %232 = arith.addf %231, %3 : vector<16x32xf32>
    %233 = arith.mulf %228, %232 : vector<16x32xf32>
    %234 = arith.addf %230, %233 : vector<16x32xf32>
    %235 = math.tanh %234 : vector<16x32xf32>
    %236 = arith.subf %217, %235 : vector<16x32xf32>
    %237 = arith.mulf %229, %236 : vector<16x32xf32>
    %238 = arith.addf %235, %237 : vector<16x32xf32>
    %c176 = arith.constant 176 : index
    %c0_41 = arith.constant 0 : index
    %239 = vector.load %arg1[%c176, %c0_41] : memref<336x96xf32, #tpu.memory_space<vmem>>, vector<16x96xf32>
    %cst_42 = arith.constant dense<0.000000e+00> : vector<16x96xf32>
    %240 = tpu.matmul %238, %0, %cst_42 {dimension_numbers = #tpu.dot_dimension_numbers<[1], [0], [0], [1], [0, 0, 1, 1], [], []>} : vector<16x32xf32>, vector<32x96xf32>, vector<16x96xf32> -> vector<16x96xf32>
    %241 = vector.extract_strided_slice %239 {offsets = [0, 0], sizes = [16, 64], strides = [1, 1]} : vector<16x96xf32> to vector<16x64xf32>
    %242 = vector.extract_strided_slice %240 {offsets = [0, 0], sizes = [16, 64], strides = [1, 1]} : vector<16x96xf32> to vector<16x64xf32>
    %243 = arith.addf %241, %242 : vector<16x64xf32>
    %244 = arith.negf %243 : vector<16x64xf32>
    %245 = math.exp %244 : vector<16x64xf32>
    %cst_43 = arith.constant 1.000000e+00 : f32
    %246 = vector.broadcast %cst_43 : f32 to vector<16x64xf32>
    %247 = arith.addf %246, %245 : vector<16x64xf32>
    %248 = arith.divf %246, %247 : vector<16x64xf32>
    %249 = vector.extract_strided_slice %248 {offsets = [0, 0], sizes = [16, 32], strides = [1, 1]} : vector<16x64xf32> to vector<16x32xf32>
    %250 = vector.extract_strided_slice %248 {offsets = [0, 32], sizes = [16, 32], strides = [1, 1]} : vector<16x64xf32> to vector<16x32xf32>
    %251 = vector.extract_strided_slice %239 {offsets = [0, 64], sizes = [16, 32], strides = [1, 1]} : vector<16x96xf32> to vector<16x32xf32>
    %252 = vector.extract_strided_slice %240 {offsets = [0, 64], sizes = [16, 32], strides = [1, 1]} : vector<16x96xf32> to vector<16x32xf32>
    %253 = arith.addf %252, %3 : vector<16x32xf32>
    %254 = arith.mulf %249, %253 : vector<16x32xf32>
    %255 = arith.addf %251, %254 : vector<16x32xf32>
    %256 = math.tanh %255 : vector<16x32xf32>
    %257 = arith.subf %238, %256 : vector<16x32xf32>
    %258 = arith.mulf %250, %257 : vector<16x32xf32>
    %259 = arith.addf %256, %258 : vector<16x32xf32>
    %c192 = arith.constant 192 : index
    %c0_44 = arith.constant 0 : index
    %260 = vector.load %arg1[%c192, %c0_44] : memref<336x96xf32, #tpu.memory_space<vmem>>, vector<16x96xf32>
    %cst_45 = arith.constant dense<0.000000e+00> : vector<16x96xf32>
    %261 = tpu.matmul %259, %0, %cst_45 {dimension_numbers = #tpu.dot_dimension_numbers<[1], [0], [0], [1], [0, 0, 1, 1], [], []>} : vector<16x32xf32>, vector<32x96xf32>, vector<16x96xf32> -> vector<16x96xf32>
    %262 = vector.extract_strided_slice %260 {offsets = [0, 0], sizes = [16, 64], strides = [1, 1]} : vector<16x96xf32> to vector<16x64xf32>
    %263 = vector.extract_strided_slice %261 {offsets = [0, 0], sizes = [16, 64], strides = [1, 1]} : vector<16x96xf32> to vector<16x64xf32>
    %264 = arith.addf %262, %263 : vector<16x64xf32>
    %265 = arith.negf %264 : vector<16x64xf32>
    %266 = math.exp %265 : vector<16x64xf32>
    %cst_46 = arith.constant 1.000000e+00 : f32
    %267 = vector.broadcast %cst_46 : f32 to vector<16x64xf32>
    %268 = arith.addf %267, %266 : vector<16x64xf32>
    %269 = arith.divf %267, %268 : vector<16x64xf32>
    %270 = vector.extract_strided_slice %269 {offsets = [0, 0], sizes = [16, 32], strides = [1, 1]} : vector<16x64xf32> to vector<16x32xf32>
    %271 = vector.extract_strided_slice %269 {offsets = [0, 32], sizes = [16, 32], strides = [1, 1]} : vector<16x64xf32> to vector<16x32xf32>
    %272 = vector.extract_strided_slice %260 {offsets = [0, 64], sizes = [16, 32], strides = [1, 1]} : vector<16x96xf32> to vector<16x32xf32>
    %273 = vector.extract_strided_slice %261 {offsets = [0, 64], sizes = [16, 32], strides = [1, 1]} : vector<16x96xf32> to vector<16x32xf32>
    %274 = arith.addf %273, %3 : vector<16x32xf32>
    %275 = arith.mulf %270, %274 : vector<16x32xf32>
    %276 = arith.addf %272, %275 : vector<16x32xf32>
    %277 = math.tanh %276 : vector<16x32xf32>
    %278 = arith.subf %259, %277 : vector<16x32xf32>
    %279 = arith.mulf %271, %278 : vector<16x32xf32>
    %280 = arith.addf %277, %279 : vector<16x32xf32>
    %c208 = arith.constant 208 : index
    %c0_47 = arith.constant 0 : index
    %281 = vector.load %arg1[%c208, %c0_47] : memref<336x96xf32, #tpu.memory_space<vmem>>, vector<16x96xf32>
    %cst_48 = arith.constant dense<0.000000e+00> : vector<16x96xf32>
    %282 = tpu.matmul %280, %0, %cst_48 {dimension_numbers = #tpu.dot_dimension_numbers<[1], [0], [0], [1], [0, 0, 1, 1], [], []>} : vector<16x32xf32>, vector<32x96xf32>, vector<16x96xf32> -> vector<16x96xf32>
    %283 = vector.extract_strided_slice %281 {offsets = [0, 0], sizes = [16, 64], strides = [1, 1]} : vector<16x96xf32> to vector<16x64xf32>
    %284 = vector.extract_strided_slice %282 {offsets = [0, 0], sizes = [16, 64], strides = [1, 1]} : vector<16x96xf32> to vector<16x64xf32>
    %285 = arith.addf %283, %284 : vector<16x64xf32>
    %286 = arith.negf %285 : vector<16x64xf32>
    %287 = math.exp %286 : vector<16x64xf32>
    %cst_49 = arith.constant 1.000000e+00 : f32
    %288 = vector.broadcast %cst_49 : f32 to vector<16x64xf32>
    %289 = arith.addf %288, %287 : vector<16x64xf32>
    %290 = arith.divf %288, %289 : vector<16x64xf32>
    %291 = vector.extract_strided_slice %290 {offsets = [0, 0], sizes = [16, 32], strides = [1, 1]} : vector<16x64xf32> to vector<16x32xf32>
    %292 = vector.extract_strided_slice %290 {offsets = [0, 32], sizes = [16, 32], strides = [1, 1]} : vector<16x64xf32> to vector<16x32xf32>
    %293 = vector.extract_strided_slice %281 {offsets = [0, 64], sizes = [16, 32], strides = [1, 1]} : vector<16x96xf32> to vector<16x32xf32>
    %294 = vector.extract_strided_slice %282 {offsets = [0, 64], sizes = [16, 32], strides = [1, 1]} : vector<16x96xf32> to vector<16x32xf32>
    %295 = arith.addf %294, %3 : vector<16x32xf32>
    %296 = arith.mulf %291, %295 : vector<16x32xf32>
    %297 = arith.addf %293, %296 : vector<16x32xf32>
    %298 = math.tanh %297 : vector<16x32xf32>
    %299 = arith.subf %280, %298 : vector<16x32xf32>
    %300 = arith.mulf %292, %299 : vector<16x32xf32>
    %301 = arith.addf %298, %300 : vector<16x32xf32>
    %c1 = arith.constant 1 : index
    %c0_50 = arith.constant 0 : index
    %c0_51 = arith.constant 0 : index
    %302 = vector.load %arg5[%c1, %c0_50, %c0_51] : memref<3x16x32xf32, #tpu.memory_space<vmem>>, vector<1x16x32xf32>
    %303 = vector.shape_cast %302 : vector<1x16x32xf32> to vector<16x32xf32>
    %304 = vector.shape_cast %301 : vector<16x32xf32> to vector<1x16x32xf32>
    tpu.vector_store %arg5[%c1, %c0_50, %c0_51], %304 {strides = array<i32>} : memref<3x16x32xf32, #tpu.memory_space<vmem>>, vector<1x16x32xf32>,
    %c224 = arith.constant 224 : index
    %c0_52 = arith.constant 0 : index
    %305 = vector.load %arg1[%c224, %c0_52] : memref<336x96xf32, #tpu.memory_space<vmem>>, vector<16x96xf32>
    %cst_53 = arith.constant dense<0.000000e+00> : vector<16x96xf32>
    %306 = tpu.matmul %301, %0, %cst_53 {dimension_numbers = #tpu.dot_dimension_numbers<[1], [0], [0], [1], [0, 0, 1, 1], [], []>} : vector<16x32xf32>, vector<32x96xf32>, vector<16x96xf32> -> vector<16x96xf32>
    %307 = vector.extract_strided_slice %305 {offsets = [0, 0], sizes = [16, 64], strides = [1, 1]} : vector<16x96xf32> to vector<16x64xf32>
    %308 = vector.extract_strided_slice %306 {offsets = [0, 0], sizes = [16, 64], strides = [1, 1]} : vector<16x96xf32> to vector<16x64xf32>
    %309 = arith.addf %307, %308 : vector<16x64xf32>
    %310 = arith.negf %309 : vector<16x64xf32>
    %311 = math.exp %310 : vector<16x64xf32>
    %cst_54 = arith.constant 1.000000e+00 : f32
    %312 = vector.broadcast %cst_54 : f32 to vector<16x64xf32>
    %313 = arith.addf %312, %311 : vector<16x64xf32>
    %314 = arith.divf %312, %313 : vector<16x64xf32>
    %315 = vector.extract_strided_slice %314 {offsets = [0, 0], sizes = [16, 32], strides = [1, 1]} : vector<16x64xf32> to vector<16x32xf32>
    %316 = vector.extract_strided_slice %314 {offsets = [0, 32], sizes = [16, 32], strides = [1, 1]} : vector<16x64xf32> to vector<16x32xf32>
    %317 = vector.extract_strided_slice %305 {offsets = [0, 64], sizes = [16, 32], strides = [1, 1]} : vector<16x96xf32> to vector<16x32xf32>
    %318 = vector.extract_strided_slice %306 {offsets = [0, 64], sizes = [16, 32], strides = [1, 1]} : vector<16x96xf32> to vector<16x32xf32>
    %319 = arith.addf %318, %3 : vector<16x32xf32>
    %320 = arith.mulf %315, %319 : vector<16x32xf32>
    %321 = arith.addf %317, %320 : vector<16x32xf32>
    %322 = math.tanh %321 : vector<16x32xf32>
    %323 = arith.subf %301, %322 : vector<16x32xf32>
    %324 = arith.mulf %316, %323 : vector<16x32xf32>
    %325 = arith.addf %322, %324 : vector<16x32xf32>
    %c240 = arith.constant 240 : index
    %c0_55 = arith.constant 0 : index
    %326 = vector.load %arg1[%c240, %c0_55] : memref<336x96xf32, #tpu.memory_space<vmem>>, vector<16x96xf32>
    %cst_56 = arith.constant dense<0.000000e+00> : vector<16x96xf32>
    %327 = tpu.matmul %325, %0, %cst_56 {dimension_numbers = #tpu.dot_dimension_numbers<[1], [0], [0], [1], [0, 0, 1, 1], [], []>} : vector<16x32xf32>, vector<32x96xf32>, vector<16x96xf32> -> vector<16x96xf32>
    %328 = vector.extract_strided_slice %326 {offsets = [0, 0], sizes = [16, 64], strides = [1, 1]} : vector<16x96xf32> to vector<16x64xf32>
    %329 = vector.extract_strided_slice %327 {offsets = [0, 0], sizes = [16, 64], strides = [1, 1]} : vector<16x96xf32> to vector<16x64xf32>
    %330 = arith.addf %328, %329 : vector<16x64xf32>
    %331 = arith.negf %330 : vector<16x64xf32>
    %332 = math.exp %331 : vector<16x64xf32>
    %cst_57 = arith.constant 1.000000e+00 : f32
    %333 = vector.broadcast %cst_57 : f32 to vector<16x64xf32>
    %334 = arith.addf %333, %332 : vector<16x64xf32>
    %335 = arith.divf %333, %334 : vector<16x64xf32>
    %336 = vector.extract_strided_slice %335 {offsets = [0, 0], sizes = [16, 32], strides = [1, 1]} : vector<16x64xf32> to vector<16x32xf32>
    %337 = vector.extract_strided_slice %335 {offsets = [0, 32], sizes = [16, 32], strides = [1, 1]} : vector<16x64xf32> to vector<16x32xf32>
    %338 = vector.extract_strided_slice %326 {offsets = [0, 64], sizes = [16, 32], strides = [1, 1]} : vector<16x96xf32> to vector<16x32xf32>
    %339 = vector.extract_strided_slice %327 {offsets = [0, 64], sizes = [16, 32], strides = [1, 1]} : vector<16x96xf32> to vector<16x32xf32>
    %340 = arith.addf %339, %3 : vector<16x32xf32>
    %341 = arith.mulf %336, %340 : vector<16x32xf32>
    %342 = arith.addf %338, %341 : vector<16x32xf32>
    %343 = math.tanh %342 : vector<16x32xf32>
    %344 = arith.subf %325, %343 : vector<16x32xf32>
    %345 = arith.mulf %337, %344 : vector<16x32xf32>
    %346 = arith.addf %343, %345 : vector<16x32xf32>
    %c256 = arith.constant 256 : index
    %c0_58 = arith.constant 0 : index
    %347 = vector.load %arg1[%c256, %c0_58] : memref<336x96xf32, #tpu.memory_space<vmem>>, vector<16x96xf32>
    %cst_59 = arith.constant dense<0.000000e+00> : vector<16x96xf32>
    %348 = tpu.matmul %346, %0, %cst_59 {dimension_numbers = #tpu.dot_dimension_numbers<[1], [0], [0], [1], [0, 0, 1, 1], [], []>} : vector<16x32xf32>, vector<32x96xf32>, vector<16x96xf32> -> vector<16x96xf32>
    %349 = vector.extract_strided_slice %347 {offsets = [0, 0], sizes = [16, 64], strides = [1, 1]} : vector<16x96xf32> to vector<16x64xf32>
    %350 = vector.extract_strided_slice %348 {offsets = [0, 0], sizes = [16, 64], strides = [1, 1]} : vector<16x96xf32> to vector<16x64xf32>
    %351 = arith.addf %349, %350 : vector<16x64xf32>
    %352 = arith.negf %351 : vector<16x64xf32>
    %353 = math.exp %352 : vector<16x64xf32>
    %cst_60 = arith.constant 1.000000e+00 : f32
    %354 = vector.broadcast %cst_60 : f32 to vector<16x64xf32>
    %355 = arith.addf %354, %353 : vector<16x64xf32>
    %356 = arith.divf %354, %355 : vector<16x64xf32>
    %357 = vector.extract_strided_slice %356 {offsets = [0, 0], sizes = [16, 32], strides = [1, 1]} : vector<16x64xf32> to vector<16x32xf32>
    %358 = vector.extract_strided_slice %356 {offsets = [0, 32], sizes = [16, 32], strides = [1, 1]} : vector<16x64xf32> to vector<16x32xf32>
    %359 = vector.extract_strided_slice %347 {offsets = [0, 64], sizes = [16, 32], strides = [1, 1]} : vector<16x96xf32> to vector<16x32xf32>
    %360 = vector.extract_strided_slice %348 {offsets = [0, 64], sizes = [16, 32], strides = [1, 1]} : vector<16x96xf32> to vector<16x32xf32>
    %361 = arith.addf %360, %3 : vector<16x32xf32>
    %362 = arith.mulf %357, %361 : vector<16x32xf32>
    %363 = arith.addf %359, %362 : vector<16x32xf32>
    %364 = math.tanh %363 : vector<16x32xf32>
    %365 = arith.subf %346, %364 : vector<16x32xf32>
    %366 = arith.mulf %358, %365 : vector<16x32xf32>
    %367 = arith.addf %364, %366 : vector<16x32xf32>
    %c272 = arith.constant 272 : index
    %c0_61 = arith.constant 0 : index
    %368 = vector.load %arg1[%c272, %c0_61] : memref<336x96xf32, #tpu.memory_space<vmem>>, vector<16x96xf32>
    %cst_62 = arith.constant dense<0.000000e+00> : vector<16x96xf32>
    %369 = tpu.matmul %367, %0, %cst_62 {dimension_numbers = #tpu.dot_dimension_numbers<[1], [0], [0], [1], [0, 0, 1, 1], [], []>} : vector<16x32xf32>, vector<32x96xf32>, vector<16x96xf32> -> vector<16x96xf32>
    %370 = vector.extract_strided_slice %368 {offsets = [0, 0], sizes = [16, 64], strides = [1, 1]} : vector<16x96xf32> to vector<16x64xf32>
    %371 = vector.extract_strided_slice %369 {offsets = [0, 0], sizes = [16, 64], strides = [1, 1]} : vector<16x96xf32> to vector<16x64xf32>
    %372 = arith.addf %370, %371 : vector<16x64xf32>
    %373 = arith.negf %372 : vector<16x64xf32>
    %374 = math.exp %373 : vector<16x64xf32>
    %cst_63 = arith.constant 1.000000e+00 : f32
    %375 = vector.broadcast %cst_63 : f32 to vector<16x64xf32>
    %376 = arith.addf %375, %374 : vector<16x64xf32>
    %377 = arith.divf %375, %376 : vector<16x64xf32>
    %378 = vector.extract_strided_slice %377 {offsets = [0, 0], sizes = [16, 32], strides = [1, 1]} : vector<16x64xf32> to vector<16x32xf32>
    %379 = vector.extract_strided_slice %377 {offsets = [0, 32], sizes = [16, 32], strides = [1, 1]} : vector<16x64xf32> to vector<16x32xf32>
    %380 = vector.extract_strided_slice %368 {offsets = [0, 64], sizes = [16, 32], strides = [1, 1]} : vector<16x96xf32> to vector<16x32xf32>
    %381 = vector.extract_strided_slice %369 {offsets = [0, 64], sizes = [16, 32], strides = [1, 1]} : vector<16x96xf32> to vector<16x32xf32>
    %382 = arith.addf %381, %3 : vector<16x32xf32>
    %383 = arith.mulf %378, %382 : vector<16x32xf32>
    %384 = arith.addf %380, %383 : vector<16x32xf32>
    %385 = math.tanh %384 : vector<16x32xf32>
    %386 = arith.subf %367, %385 : vector<16x32xf32>
    %387 = arith.mulf %379, %386 : vector<16x32xf32>
    %388 = arith.addf %385, %387 : vector<16x32xf32>
    %c288 = arith.constant 288 : index
    %c0_64 = arith.constant 0 : index
    %389 = vector.load %arg1[%c288, %c0_64] : memref<336x96xf32, #tpu.memory_space<vmem>>, vector<16x96xf32>
    %cst_65 = arith.constant dense<0.000000e+00> : vector<16x96xf32>
    %390 = tpu.matmul %388, %0, %cst_65 {dimension_numbers = #tpu.dot_dimension_numbers<[1], [0], [0], [1], [0, 0, 1, 1], [], []>} : vector<16x32xf32>, vector<32x96xf32>, vector<16x96xf32> -> vector<16x96xf32>
    %391 = vector.extract_strided_slice %389 {offsets = [0, 0], sizes = [16, 64], strides = [1, 1]} : vector<16x96xf32> to vector<16x64xf32>
    %392 = vector.extract_strided_slice %390 {offsets = [0, 0], sizes = [16, 64], strides = [1, 1]} : vector<16x96xf32> to vector<16x64xf32>
    %393 = arith.addf %391, %392 : vector<16x64xf32>
    %394 = arith.negf %393 : vector<16x64xf32>
    %395 = math.exp %394 : vector<16x64xf32>
    %cst_66 = arith.constant 1.000000e+00 : f32
    %396 = vector.broadcast %cst_66 : f32 to vector<16x64xf32>
    %397 = arith.addf %396, %395 : vector<16x64xf32>
    %398 = arith.divf %396, %397 : vector<16x64xf32>
    %399 = vector.extract_strided_slice %398 {offsets = [0, 0], sizes = [16, 32], strides = [1, 1]} : vector<16x64xf32> to vector<16x32xf32>
    %400 = vector.extract_strided_slice %398 {offsets = [0, 32], sizes = [16, 32], strides = [1, 1]} : vector<16x64xf32> to vector<16x32xf32>
    %401 = vector.extract_strided_slice %389 {offsets = [0, 64], sizes = [16, 32], strides = [1, 1]} : vector<16x96xf32> to vector<16x32xf32>
    %402 = vector.extract_strided_slice %390 {offsets = [0, 64], sizes = [16, 32], strides = [1, 1]} : vector<16x96xf32> to vector<16x32xf32>
    %403 = arith.addf %402, %3 : vector<16x32xf32>
    %404 = arith.mulf %399, %403 : vector<16x32xf32>
    %405 = arith.addf %401, %404 : vector<16x32xf32>
    %406 = math.tanh %405 : vector<16x32xf32>
    %407 = arith.subf %388, %406 : vector<16x32xf32>
    %408 = arith.mulf %400, %407 : vector<16x32xf32>
    %409 = arith.addf %406, %408 : vector<16x32xf32>
    %c304 = arith.constant 304 : index
    %c0_67 = arith.constant 0 : index
    %410 = vector.load %arg1[%c304, %c0_67] : memref<336x96xf32, #tpu.memory_space<vmem>>, vector<16x96xf32>
    %cst_68 = arith.constant dense<0.000000e+00> : vector<16x96xf32>
    %411 = tpu.matmul %409, %0, %cst_68 {dimension_numbers = #tpu.dot_dimension_numbers<[1], [0], [0], [1], [0, 0, 1, 1], [], []>} : vector<16x32xf32>, vector<32x96xf32>, vector<16x96xf32> -> vector<16x96xf32>
    %412 = vector.extract_strided_slice %410 {offsets = [0, 0], sizes = [16, 64], strides = [1, 1]} : vector<16x96xf32> to vector<16x64xf32>
    %413 = vector.extract_strided_slice %411 {offsets = [0, 0], sizes = [16, 64], strides = [1, 1]} : vector<16x96xf32> to vector<16x64xf32>
    %414 = arith.addf %412, %413 : vector<16x64xf32>
    %415 = arith.negf %414 : vector<16x64xf32>
    %416 = math.exp %415 : vector<16x64xf32>
    %cst_69 = arith.constant 1.000000e+00 : f32
    %417 = vector.broadcast %cst_69 : f32 to vector<16x64xf32>
    %418 = arith.addf %417, %416 : vector<16x64xf32>
    %419 = arith.divf %417, %418 : vector<16x64xf32>
    %420 = vector.extract_strided_slice %419 {offsets = [0, 0], sizes = [16, 32], strides = [1, 1]} : vector<16x64xf32> to vector<16x32xf32>
    %421 = vector.extract_strided_slice %419 {offsets = [0, 32], sizes = [16, 32], strides = [1, 1]} : vector<16x64xf32> to vector<16x32xf32>
    %422 = vector.extract_strided_slice %410 {offsets = [0, 64], sizes = [16, 32], strides = [1, 1]} : vector<16x96xf32> to vector<16x32xf32>
    %423 = vector.extract_strided_slice %411 {offsets = [0, 64], sizes = [16, 32], strides = [1, 1]} : vector<16x96xf32> to vector<16x32xf32>
    %424 = arith.addf %423, %3 : vector<16x32xf32>
    %425 = arith.mulf %420, %424 : vector<16x32xf32>
    %426 = arith.addf %422, %425 : vector<16x32xf32>
    %427 = math.tanh %426 : vector<16x32xf32>
    %428 = arith.subf %409, %427 : vector<16x32xf32>
    %429 = arith.mulf %421, %428 : vector<16x32xf32>
    %430 = arith.addf %427, %429 : vector<16x32xf32>
    %c320 = arith.constant 320 : index
    %c0_70 = arith.constant 0 : index
    %431 = vector.load %arg1[%c320, %c0_70] : memref<336x96xf32, #tpu.memory_space<vmem>>, vector<16x96xf32>
    %cst_71 = arith.constant dense<0.000000e+00> : vector<16x96xf32>
    %432 = tpu.matmul %430, %0, %cst_71 {dimension_numbers = #tpu.dot_dimension_numbers<[1], [0], [0], [1], [0, 0, 1, 1], [], []>} : vector<16x32xf32>, vector<32x96xf32>, vector<16x96xf32> -> vector<16x96xf32>
    %433 = vector.extract_strided_slice %431 {offsets = [0, 0], sizes = [16, 64], strides = [1, 1]} : vector<16x96xf32> to vector<16x64xf32>
    %434 = vector.extract_strided_slice %432 {offsets = [0, 0], sizes = [16, 64], strides = [1, 1]} : vector<16x96xf32> to vector<16x64xf32>
    %435 = arith.addf %433, %434 : vector<16x64xf32>
    %436 = arith.negf %435 : vector<16x64xf32>
    %437 = math.exp %436 : vector<16x64xf32>
    %cst_72 = arith.constant 1.000000e+00 : f32
    %438 = vector.broadcast %cst_72 : f32 to vector<16x64xf32>
    %439 = arith.addf %438, %437 : vector<16x64xf32>
    %440 = arith.divf %438, %439 : vector<16x64xf32>
    %441 = vector.extract_strided_slice %440 {offsets = [0, 0], sizes = [16, 32], strides = [1, 1]} : vector<16x64xf32> to vector<16x32xf32>
    %442 = vector.extract_strided_slice %440 {offsets = [0, 32], sizes = [16, 32], strides = [1, 1]} : vector<16x64xf32> to vector<16x32xf32>
    %443 = vector.extract_strided_slice %431 {offsets = [0, 64], sizes = [16, 32], strides = [1, 1]} : vector<16x96xf32> to vector<16x32xf32>
    %444 = vector.extract_strided_slice %432 {offsets = [0, 64], sizes = [16, 32], strides = [1, 1]} : vector<16x96xf32> to vector<16x32xf32>
    %445 = arith.addf %444, %3 : vector<16x32xf32>
    %446 = arith.mulf %441, %445 : vector<16x32xf32>
    %447 = arith.addf %443, %446 : vector<16x32xf32>
    %448 = math.tanh %447 : vector<16x32xf32>
    %449 = arith.subf %430, %448 : vector<16x32xf32>
    %450 = arith.mulf %442, %449 : vector<16x32xf32>
    %451 = arith.addf %448, %450 : vector<16x32xf32>
    %c2 = arith.constant 2 : index
    %c0_73 = arith.constant 0 : index
    %c0_74 = arith.constant 0 : index
    %452 = vector.load %arg5[%c2, %c0_73, %c0_74] : memref<3x16x32xf32, #tpu.memory_space<vmem>>, vector<1x16x32xf32>
    %453 = vector.shape_cast %452 : vector<1x16x32xf32> to vector<16x32xf32>
    %454 = vector.shape_cast %451 : vector<16x32xf32> to vector<1x16x32xf32>
    tpu.vector_store %arg5[%c2, %c0_73, %c0_74], %454 {strides = array<i32>} : memref<3x16x32xf32, #tpu.memory_space<vmem>>, vector<1x16x32xf32>,
    return
  }
  func.func @transform_0(%arg0: i32) -> (i32, i32) {
    %c0_i32 = arith.constant 0 : i32
    %c0_i32_0 = arith.constant 0 : i32
    %c0_i32_1 = arith.constant 0 : i32
    return %c0_i32, %c0_i32_0 : i32, i32
  }
  func.func @transform_1(%arg0: i32) -> (i32, i32) {
    %c0_i32 = arith.constant 0 : i32
    %c0_i32_0 = arith.constant 0 : i32
    %c0_i32_1 = arith.constant 0 : i32
    return %c0_i32, %c0_i32_0 : i32, i32
  }
  func.func @transform_2(%arg0: i32) -> (i32, i32) {
    %c0_i32 = arith.constant 0 : i32
    %c0_i32_0 = arith.constant 0 : i32
    %c0_i32_1 = arith.constant 0 : i32
    return %c0_i32, %c0_i32_0 : i32, i32
  }
  func.func @transform_3(%arg0: i32) -> (i32, i32) {
    %c0_i32 = arith.constant 0 : i32
    %c0_i32_0 = arith.constant 0 : i32
    %c0_i32_1 = arith.constant 0 : i32
    return %c0_i32, %c0_i32_0 : i32, i32
  }
  func.func @transform_4(%arg0: i32) -> (i32, i32, i32) {
    %c0_i32 = arith.constant 0 : i32
    %c0_i32_0 = arith.constant 0 : i32
    %c0_i32_1 = arith.constant 0 : i32
    %c0_i32_2 = arith.constant 0 : i32
    return %c0_i32, %c0_i32_0, %c0_i32_1 : i32, i32, i32
  }
}

</mosaic_0001>

<llo_original>
// kernel: tpu_custom_call.1
$region0: #{tpu_custom_call.1}
  #allocation0 [shape = 'u32[]', space=smem, size = 0x4, offset = 0x4, fixed_abs, tag = 'smem constant byte address 0x4 - core index']
  #allocation1 [shape = 'u32[144,128]{1,0:T(1,128)}', space=vmem, size = 0x12000, scoped, tag = 'internal scratch']
  %s0 = inlined_call_operand.vmem [shape: f32[336,96], index: 0, kind: input, shape index: {}]
  %s1 = inlined_call_operand.vmem [shape: f32[16,32], index: 1, kind: input, shape index: {}]
  %s2 = inlined_call_operand.vmem [shape: f32[32,96], index: 2, kind: input, shape index: {}]
  %s3 = inlined_call_operand.vmem [shape: f32[1,32], index: 3, kind: input, shape index: {}]
  %s4 = inlined_call_operand.hbm [shape: f32[3,16,32], index: 4, kind: output, shape index: {}]
  %s5 = sld [smem:[#allocation0]]
  $region26: #{tpu_custom_call.1} parent=0
    _
  %s7 = ssub.s32 1, %s5
  %s8 = scalar_select 0, %s7, %s5
  $region1: #{tpu_custom_call.1} parent=0
    #allocation2 [shape = 'u8[24576]{0}', space=vmem, size = 0x6000, scoped, tag = 'output window, operand 0, single buffered']
    #allocation3 [shape = 's32[1]{0}', space=sflag, size = 0x4, scoped, tag = 'scoped memory for tpu_custom_call.1']
    %9 = vsyncpa [#allocation3], 0
    // Predicated region
    $region2: #{tpu_custom_call.1} parent=1 // pred_check
      _
    $region3: #{tpu_custom_call.1} parent=1 // pred_check_branch
      %11 = sbr.rel (0) target = $region5
    $region4: #{tpu_custom_call.1} parent=1 // pred_region
      _
    $region5: #{tpu_custom_call.1} parent=1 // pred_fallthru
      _
    // Predicated region
    $region6: #{tpu_custom_call.1} parent=1 // pred_check
      _
    $region7: #{tpu_custom_call.1} parent=1 // pred_check_branch
      %13 = sbr.rel (0) target = $region9
    $region8: #{tpu_custom_call.1} parent=1 // pred_region
      _
    $region9: #{tpu_custom_call.1} parent=1 // pred_fallthru
      _
    // Predicated region
    $region10: #{tpu_custom_call.1} parent=1 // pred_check
      _
    $region11: #{tpu_custom_call.1} parent=1 // pred_check_branch
      %15 = sbr.rel (0) target = $region13
    $region12: #{tpu_custom_call.1} parent=1 // pred_region
      _
    $region13: #{tpu_custom_call.1} parent=1 // pred_fallthru
      _
    // Predicated region
    $region14: #{tpu_custom_call.1} parent=1 // pred_check
      _
    $region15: #{tpu_custom_call.1} parent=1 // pred_check_branch
      %17 = sbr.rel (0) target = $region17
    $region16: #{tpu_custom_call.1} parent=1 // pred_region
      _
    $region17: #{tpu_custom_call.1} parent=1 // pred_fallthru
      _
    %v18 = vld [vmem:[%s2] sm:$0xff]
    %v19 = vld [vmem:[%s2 + $0x8] sm:$0xff]
    %v20 = vld [vmem:[%s2 + $0x10] sm:$0xff]
    %v21 = vld [vmem:[%s2 + $0x18] sm:$0xff]
    %v22 = vld [vmem:[%s3] sm:$0x1]
    %v24 = vlaneseq
    %v25 = vshrl.u32 %v24, 7
    %v26 = vsub.s32 0, %v25
    %v27 = vrot.slane %v22, %v26
    %v28 = vld [vmem:[%s1] sm:$0xff]
    %v29 = vld [vmem:[%s1 + $0x8] sm:$0xff]
    %v30 = vld [vmem:[%s0] sm:$0xff]
    %v31 = vld [vmem:[%s0 + $0x8] sm:$0xff]
    %vm32 = vcmask 261120
    %v34 = vsel %vm32, %v28, 0
    %v37 = vsel %vm32, %v29, 0
    %39 = vmatprep.subr.mxu0 0.0
    %40 = vmatpush1.msra.mxu0 0.0
    %41 = vmatprep.subr.mxu0 0.0
    %42 = vmatpush1.msra.mxu0 0.0
    %43 = vmatprep.subr.mxu0 0.0
    %44 = vmatpush1.msra.mxu0 0.0
    %45 = vmatprep.subr.mxu0 0.0
    %46 = vmatpush1.msra.mxu0 0.0
    %47 = vmatprep.subr.mxu0 0.0
    %48 = vmatpush1.msra.mxu0 0.0
    %49 = vmatprep.subr.mxu0 0.0
    %50 = vmatpush1.msra.mxu0 0.0
    %51 = vmatprep.subr.mxu0 0.0
    %52 = vmatpush1.msra.mxu0 0.0
    %53 = vmatprep.subr.mxu0 0.0
    %54 = vmatpush1.msra.mxu0 0.0
    %55 = vmatprep.subr.mxu0 0.0
    %56 = vmatpush1.msra.mxu0 0.0
    %57 = vmatprep.subr.mxu0 0.0
    %58 = vmatpush1.msra.mxu0 0.0
    %59 = vmatprep.subr.mxu0 0.0
    %60 = vmatpush1.msra.mxu0 0.0
    %61 = vmatprep.subr.mxu0 0.0
    %62 = vmatpush1.msra.mxu0 0.0
    %63 = vmatprep.subr.mxu0 0.0
    %64 = vmatpush1.msra.mxu0 %v21
    %65 = vmatprep.subr.mxu0 0.0
    %66 = vmatpush1.msra.mxu0 %v20
    %67 = vmatprep.subr.mxu0 0.0
    %68 = vmatpush1.msra.mxu0 %v19
    %69 = vmatprep.subr.mxu0 0.0
    %70 = vmatpush1.msra.mxu0 %v18
    %71 = vmatprep.subr.mxu0 0.0
    %72 = vmatpush2.msra.mxu0 0.0
    %73 = vmatprep.subr.mxu0 0.0
    %74 = vmatpush2.msra.mxu0 0.0
    %75 = vmatprep.subr.mxu0 0.0
    %76 = vmatpush2.msra.mxu0 0.0
    %77 = vmatprep.subr.mxu0 0.0
    %78 = vmatpush2.msra.mxu0 0.0
    %79 = vmatprep.subr.mxu0 0.0
    %80 = vmatpush2.msra.mxu0 0.0
    %81 = vmatprep.subr.mxu0 0.0
    %82 = vmatpush2.msra.mxu0 0.0
    %83 = vmatprep.subr.mxu0 0.0
    %84 = vmatpush2.msra.mxu0 0.0
    %85 = vmatprep.subr.mxu0 0.0
    %86 = vmatpush2.msra.mxu0 0.0
    %87 = vmatprep.subr.mxu0 0.0
    %88 = vmatpush2.msra.mxu0 0.0
    %89 = vmatprep.subr.mxu0 0.0
    %90 = vmatpush2.msra.mxu0 0.0
    %91 = vmatprep.subr.mxu0 0.0
    %92 = vmatpush2.msra.mxu0 0.0
    %93 = vmatprep.subr.mxu0 0.0
    %94 = vmatpush2.msra.mxu0 0.0
    %95 = vmatprep.subr.mxu0 0.0
    %96 = vmatpush2.msra.mxu0 0.0
    %97 = vmatprep.subr.mxu0 0.0
    %98 = vmatpush2.msra.mxu0 0.0
    %99 = vmatprep.subr.mxu0 0.0
    %100 = vmatpush2.msra.mxu0 0.0
    %101 = vmatprep.subr.mxu0 0.0
    %102 = vmatpush2.msra.mxu0 0.0
    %103 = vmatprep.mubr.f32.mxu0 0.0
    %104 = vmatmul.mubr.f32.gmra.mxu0 %v34
    %v105 = vpop.f32.mrf.mxu0
    %v106 = vadd.f32 0.0, %v105
    %v107 = vpop.f32.mrf.mxu0
    %108 = vmatprep.mubr.f32.mxu0 0.0
    %109 = vmatmul.mubr.f32.gmra.mxu0 %v37
    %v110 = vpop.f32.mrf.mxu0
    %v111 = vadd.f32 0.0, %v110
    %v112 = vpop.f32.mrf.mxu0
    %113 = vdwg.mxu0
    %v114 = vadd.f32 %v30, %v106
    %v115 = vadd.f32 %v31, %v111
    %v116 = vxor.u32 %v114, 2147483648
    %v117 = vxor.u32 %v115, 2147483648
    %v118 = vmul.f32 %v116, 1.442695
    %v119 = vpow.pop %v118
    %v120 = vmul.f32 %v117, 1.442695
    %v121 = vpow.pop %v120
    %v122 = vadd.f32 %v119, 1.0
    %v123 = vadd.f32 %v121, 1.0
    %v124 = vrcp.pop %v122
    %v125 = vmul.f32 1.0, %v124
    %v126 = vrcp.pop %v123
    %v127 = vmul.f32 1.0, %v126
    %128 = vrot.lane.b32.xlu0 %v27, 64
    %v129 = vpop.permute.xlu0 %128
    %v131 = vadd.f32 %v106, %v129
    %v132 = vadd.f32 %v111, %v129
    %135 = vrot.lane.b32.xlu0 %v131, 64
    %v136 = vpop.permute.xlu0 %135
    %137 = vrot.lane.b32.xlu0 %v132, 64
    %v138 = vpop.permute.xlu0 %137
    %v141 = vmul.f32 %v125, %v136
    %v142 = vmul.f32 %v127, %v138
    %145 = vrot.lane.b32.xlu0 %v141, 64
    %v146 = vpop.permute.xlu0 %145
    %147 = vrot.lane.b32.xlu0 %v142, 64
    %v148 = vpop.permute.xlu0 %147
    %v151 = vadd.f32 %v30, %v146
    %v152 = vadd.f32 %v31, %v148
    %v153 = vtanh.pop %v151
    %v154 = vtanh.pop %v152
    %157 = vrot.lane.b32.xlu0 %v153, 64
    %v158 = vpop.permute.xlu0 %157
    %159 = vrot.lane.b32.xlu0 %v154, 64
    %v160 = vpop.permute.xlu0 %159
    %v163 = vsub.f32 %v28, %v158
    %v164 = vsub.f32 %v29, %v160
    %167 = vrot.lane.b32.xlu0 %v163, 32
    %v168 = vpop.permute.xlu0 %167
    %169 = vrot.lane.b32.xlu0 %v164, 32
    %v170 = vpop.permute.xlu0 %169
    %v173 = vmul.f32 %v125, %v168
    %v174 = vmul.f32 %v127, %v170
    %177 = vrot.lane.b32.xlu0 %v173, 32
    %v178 = vpop.permute.xlu0 %177
    %179 = vrot.lane.b32.xlu0 %v174, 32
    %v180 = vpop.permute.xlu0 %179
    %v183 = vadd.f32 %v153, %v178
    %v184 = vadd.f32 %v154, %v180
    %v185 = vld [vmem:[%s0 + $0x10] sm:$0xff]
    %v186 = vld [vmem:[%s0 + $0x18] sm:$0xff]
    %189 = vrot.lane.b32.xlu0 %v183, 64
    %v190 = vpop.permute.xlu0 %189
    %191 = vrot.lane.b32.xlu0 %v184, 64
    %v192 = vpop.permute.xlu0 %191
    %v193 = vsel %vm32, %v190, 0
    %v195 = vsel %vm32, %v192, 0
    %197 = vmatprep.subr.mxu0 0.0
    %198 = vmatpush1.msra.mxu0 0.0
    %199 = vmatprep.subr.mxu0 0.0
    %200 = vmatpush1.msra.mxu0 0.0
    %201 = vmatprep.subr.mxu0 0.0
    %202 = vmatpush1.msra.mxu0 0.0
    %203 = vmatprep.subr.mxu0 0.0
    %204 = vmatpush1.msra.mxu0 0.0
    %205 = vmatprep.subr.mxu0 0.0
    %206 = vmatpush1.msra.mxu0 0.0
    %207 = vmatprep.subr.mxu0 0.0
    %208 = vmatpush1.msra.mxu0 0.0
    %209 = vmatprep.subr.mxu0 0.0
    %210 = vmatpush1.msra.mxu0 0.0
    %211 = vmatprep.subr.mxu0 0.0
    %212 = vmatpush1.msra.mxu0 0.0
    %213 = vmatprep.subr.mxu0 0.0
    %214 = vmatpush1.msra.mxu0 0.0
    %215 = vmatprep.subr.mxu0 0.0
    %216 = vmatpush1.msra.mxu0 0.0
    %217 = vmatprep.subr.mxu0 0.0
    %218 = vmatpush1.msra.mxu0 0.0
    %219 = vmatprep.subr.mxu0 0.0
    %220 = vmatpush1.msra.mxu0 0.0
    %221 = vmatprep.subr.mxu0 0.0
    %222 = vmatpush1.msra.mxu0 %v21
    %223 = vmatprep.subr.mxu0 0.0
    %224 = vmatpush1.msra.mxu0 %v20
    %225 = vmatprep.subr.mxu0 0.0
    %226 = vmatpush1.msra.mxu0 %v19
    %227 = vmatprep.subr.mxu0 0.0
    %228 = vmatpush1.msra.mxu0 %v18
    %229 = vmatprep.subr.mxu0 0.0
    %230 = vmatpush2.msra.mxu0 0.0
    %231 = vmatprep.subr.mxu0 0.0
    %232 = vmatpush2.msra.mxu0 0.0
    %233 = vmatprep.subr.mxu0 0.0
    %234 = vmatpush2.msra.mxu0 0.0
    %235 = vmatprep.subr.mxu0 0.0
    %236 = vmatpush2.msra.mxu0 0.0
    %237 = vmatprep.subr.mxu0 0.0
    %238 = vmatpush2.msra.mxu0 0.0
    %239 = vmatprep.subr.mxu0 0.0
    %240 = vmatpush2.msra.mxu0 0.0
    %241 = vmatprep.subr.mxu0 0.0
    %242 = vmatpush2.msra.mxu0 0.0
    %243 = vmatprep.subr.mxu0 0.0
    %244 = vmatpush2.msra.mxu0 0.0
    %245 = vmatprep.subr.mxu0 0.0
    %246 = vmatpush2.msra.mxu0 0.0
    %247 = vmatprep.subr.mxu0 0.0
    %248 = vmatpush2.msra.mxu0 0.0
    %249 = vmatprep.subr.mxu0 0.0
    %250 = vmatpush2.msra.mxu0 0.0
    %251 = vmatprep.subr.mxu0 0.0
    %252 = vmatpush2.msra.mxu0 0.0
    %253 = vmatprep.subr.mxu0 0.0
    %254 = vmatpush2.msra.mxu0 0.0
    %255 = vmatprep.subr.mxu0 0.0
    %256 = vmatpush2.msra.mxu0 0.0
    %257 = vmatprep.subr.mxu0 0.0
    %258 = vmatpush2.msra.mxu0 0.0
    %259 = vmatprep.subr.mxu0 0.0
    %260 = vmatpush2.msra.mxu0 0.0
    %261 = vmatprep.mubr.f32.mxu0 0.0
    %262 = vmatmul.mubr.f32.gmra.mxu0 %v193
    %v263 = vpop.f32.mrf.mxu0
    %v264 = vadd.f32 0.0, %v263
    %v265 = vpop.f32.mrf.mxu0
    %266 = vmatprep.mubr.f32.mxu0 0.0
    %267 = vmatmul.mubr.f32.gmra.mxu0 %v195
    %v268 = vpop.f32.mrf.mxu0
    %v269 = vadd.f32 0.0, %v268
    %v270 = vpop.f32.mrf.mxu0
    %271 = vdwg.mxu0
    %v272 = vadd.f32 %v185, %v264
    %v273 = vadd.f32 %v186, %v269
    %v274 = vxor.u32 %v272, 2147483648
    %v275 = vxor.u32 %v273, 2147483648
    %v276 = vmul.f32 %v274, 1.442695
    %v277 = vpow.pop %v276
    %v278 = vmul.f32 %v275, 1.442695
    %v279 = vpow.pop %v278
    %v280 = vadd.f32 %v277, 1.0
    %v281 = vadd.f32 %v279, 1.0
    %v282 = vrcp.pop %v280
    %v283 = vmul.f32 1.0, %v282
    %v284 = vrcp.pop %v281
    %v285 = vmul.f32 1.0, %v284
    %v286 = vadd.f32 %v264, %v129
    %v287 = vadd.f32 %v269, %v129
    %290 = vrot.lane.b32.xlu0 %v286, 64
    %v291 = vpop.permute.xlu0 %290
    %292 = vrot.lane.b32.xlu0 %v287, 64
    %v293 = vpop.permute.xlu0 %292
    %v296 = vmul.f32 %v283, %v291
    %v297 = vmul.f32 %v285, %v293
    %300 = vrot.lane.b32.xlu0 %v296, 64
    %v301 = vpop.permute.xlu0 %300
    %302 = vrot.lane.b32.xlu0 %v297, 64
    %v303 = vpop.permute.xlu0 %302
    %v306 = vadd.f32 %v185, %v301
    %v307 = vadd.f32 %v186, %v303
    %v308 = vtanh.pop %v306
    %v309 = vtanh.pop %v307
    %v310 = vsub.f32 %v183, %v308
    %v311 = vsub.f32 %v184, %v309
    %314 = vrot.lane.b32.xlu0 %v310, 96
    %v315 = vpop.permute.xlu0 %314
    %316 = vrot.lane.b32.xlu0 %v311, 96
    %v317 = vpop.permute.xlu0 %316
    %v320 = vmul.f32 %v283, %v315
    %v321 = vmul.f32 %v285, %v317
    %324 = vrot.lane.b32.xlu0 %v320, 32
    %v325 = vpop.permute.xlu0 %324
    %326 = vrot.lane.b32.xlu0 %v321, 32
    %v327 = vpop.permute.xlu0 %326
    %v330 = vadd.f32 %v308, %v325
    %v331 = vadd.f32 %v309, %v327
    %v332 = vld [vmem:[%s0 + $0x20] sm:$0xff]
    %v333 = vld [vmem:[%s0 + $0x28] sm:$0xff]
    %336 = vrot.lane.b32.xlu0 %v330, 64
    %v337 = vpop.permute.xlu0 %336
    %338 = vrot.lane.b32.xlu0 %v331, 64
    %v339 = vpop.permute.xlu0 %338
    %v340 = vsel %vm32, %v337, 0
    %v342 = vsel %vm32, %v339, 0
    %344 = vmatprep.subr.mxu0 0.0
    %345 = vmatpush1.msra.mxu0 0.0
    %346 = vmatprep.subr.mxu0 0.0
    %347 = vmatpush1.msra.mxu0 0.0
    %348 = vmatprep.subr.mxu0 0.0
    %349 = vmatpush1.msra.mxu0 0.0
    %350 = vmatprep.subr.mxu0 0.0
    %351 = vmatpush1.msra.mxu0 0.0
    %352 = vmatprep.subr.mxu0 0.0
    %353 = vmatpush1.msra.mxu0 0.0
    %354 = vmatprep.subr.mxu0 0.0
    %355 = vmatpush1.msra.mxu0 0.0
    %356 = vmatprep.subr.mxu0 0.0
    %357 = vmatpush1.msra.mxu0 0.0
    %358 = vmatprep.subr.mxu0 0.0
    %359 = vmatpush1.msra.mxu0 0.0
    %360 = vmatprep.subr.mxu0 0.0
    %361 = vmatpush1.msra.mxu0 0.0
    %362 = vmatprep.subr.mxu0 0.0
    %363 = vmatpush1.msra.mxu0 0.0
    %364 = vmatprep.subr.mxu0 0.0
    %365 = vmatpush1.msra.mxu0 0.0
    %366 = vmatprep.subr.mxu0 0.0
    %367 = vmatpush1.msra.mxu0 0.0
    %368 = vmatprep.subr.mxu0 0.0
    %369 = vmatpush1.msra.mxu0 %v21
    %370 = vmatprep.subr.mxu0 0.0
    %371 = vmatpush1.msra.mxu0 %v20
    %372 = vmatprep.subr.mxu0 0.0
    %373 = vmatpush1.msra.mxu0 %v19
    %374 = vmatprep.subr.mxu0 0.0
    %375 = vmatpush1.msra.mxu0 %v18
    %376 = vmatprep.subr.mxu0 0.0
    %377 = vmatpush2.msra.mxu0 0.0
    %378 = vmatprep.subr.mxu0 0.0
    %379 = vmatpush2.msra.mxu0 0.0
    %380 = vmatprep.subr.mxu0 0.0
    %381 = vmatpush2.msra.mxu0 0.0
    %382 = vmatprep.subr.mxu0 0.0
    %383 = vmatpush2.msra.mxu0 0.0
    %384 = vmatprep.subr.mxu0 0.0
    %385 = vmatpush2.msra.mxu0 0.0
    %386 = vmatprep.subr.mxu0 0.0
    %387 = vmatpush2.msra.mxu0 0.0
    %388 = vmatprep.subr.mxu0 0.0
    %389 = vmatpush2.msra.mxu0 0.0
    %390 = vmatprep.subr.mxu0 0.0
    %391 = vmatpush2.msra.mxu0 0.0
    %392 = vmatprep.subr.mxu0 0.0
    %393 = vmatpush2.msra.mxu0 0.0
    %394 = vmatprep.subr.mxu0 0.0
    %395 = vmatpush2.msra.mxu0 0.0
    %396 = vmatprep.subr.mxu0 0.0
    %397 = vmatpush2.msra.mxu0 0.0
    %398 = vmatprep.subr.mxu0 0.0
    %399 = vmatpush2.msra.mxu0 0.0
    %400 = vmatprep.subr.mxu0 0.0
    %401 = vmatpush2.msra.mxu0 0.0
    %402 = vmatprep.subr.mxu0 0.0
    %403 = vmatpush2.msra.mxu0 0.0
    %404 = vmatprep.subr.mxu0 0.0
    %405 = vmatpush2.msra.mxu0 0.0
    %406 = vmatprep.subr.mxu0 0.0
    %407 = vmatpush2.msra.mxu0 0.0
    %408 = vmatprep.mubr.f32.mxu0 0.0
    %409 = vmatmul.mubr.f32.gmra.mxu0 %v340
    %v410 = vpop.f32.mrf.mxu0
    %v411 = vadd.f32 0.0, %v410
    %v412 = vpop.f32.mrf.mxu0
    %413 = vmatprep.mubr.f32.mxu0 0.0
    %414 = vmatmul.mubr.f32.gmra.mxu0 %v342
    %v415 = vpop.f32.mrf.mxu0
    %v416 = vadd.f32 0.0, %v415
    %v417 = vpop.f32.mrf.mxu0
    %418 = vdwg.mxu0
    %v419 = vadd.f32 %v332, %v411
    %v420 = vadd.f32 %v333, %v416
    %v421 = vxor.u32 %v419, 2147483648
    %v422 = vxor.u32 %v420, 2147483648
    %v423 = vmul.f32 %v421, 1.442695
    %v424 = vpow.pop %v423
    %v425 = vmul.f32 %v422, 1.442695
    %v426 = vpow.pop %v425
    %v427 = vadd.f32 %v424, 1.0
    %v428 = vadd.f32 %v426, 1.0
    %v429 = vrcp.pop %v427
    %v430 = vmul.f32 1.0, %v429
    %v431 = vrcp.pop %v428
    %v432 = vmul.f32 1.0, %v431
    %v433 = vadd.f32 %v411, %v129
    %v434 = vadd.f32 %v416, %v129
    %437 = vrot.lane.b32.xlu0 %v433, 64
    %v438 = vpop.permute.xlu0 %437
    %439 = vrot.lane.b32.xlu0 %v434, 64
    %v440 = vpop.permute.xlu0 %439
    %v443 = vmul.f32 %v430, %v438
    %v444 = vmul.f32 %v432, %v440
    %447 = vrot.lane.b32.xlu0 %v443, 64
    %v448 = vpop.permute.xlu0 %447
    %449 = vrot.lane.b32.xlu0 %v444, 64
    %v450 = vpop.permute.xlu0 %449
    %v453 = vadd.f32 %v332, %v448
    %v454 = vadd.f32 %v333, %v450
    %v455 = vtanh.pop %v453
    %v456 = vtanh.pop %v454
    %v457 = vsub.f32 %v330, %v455
    %v458 = vsub.f32 %v331, %v456
    %461 = vrot.lane.b32.xlu0 %v457, 96
    %v462 = vpop.permute.xlu0 %461
    %463 = vrot.lane.b32.xlu0 %v458, 96
    %v464 = vpop.permute.xlu0 %463
    %v467 = vmul.f32 %v430, %v462
    %v468 = vmul.f32 %v432, %v464
    %471 = vrot.lane.b32.xlu0 %v467, 32
    %v472 = vpop.permute.xlu0 %471
    %473 = vrot.lane.b32.xlu0 %v468, 32
    %v474 = vpop.permute.xlu0 %473
    %v477 = vadd.f32 %v455, %v472
    %v478 = vadd.f32 %v456, %v474
    %v479 = vld [vmem:[%s0 + $0x30] sm:$0xff]
    %v480 = vld [vmem:[%s0 + $0x38] sm:$0xff]
    %483 = vrot.lane.b32.xlu0 %v477, 64
    %v484 = vpop.permute.xlu0 %483
    %485 = vrot.lane.b32.xlu0 %v478, 64
    %v486 = vpop.permute.xlu0 %485
    %v487 = vsel %vm32, %v484, 0
    %v489 = vsel %vm32, %v486, 0
    %491 = vmatprep.subr.mxu0 0.0
    %492 = vmatpush1.msra.mxu0 0.0
    %493 = vmatprep.subr.mxu0 0.0
    %494 = vmatpush1.msra.mxu0 0.0
    %495 = vmatprep.subr.mxu0 0.0
    %496 = vmatpush1.msra.mxu0 0.0
    %497 = vmatprep.subr.mxu0 0.0
    %498 = vmatpush1.msra.mxu0 0.0
    %499 = vmatprep.subr.mxu0 0.0
    %500 = vmatpush1.msra.mxu0 0.0
    %501 = vmatprep.subr.mxu0 0.0
    %502 = vmatpush1.msra.mxu0 0.0
    %503 = vmatprep.subr.mxu0 0.0
    %504 = vmatpush1.msra.mxu0 0.0
    %505 = vmatprep.subr.mxu0 0.0
    %506 = vmatpush1.msra.mxu0 0.0
    %507 = vmatprep.subr.mxu0 0.0
    %508 = vmatpush1.msra.mxu0 0.0
    %509 = vmatprep.subr.mxu0 0.0
    %510 = vmatpush1.msra.mxu0 0.0
    %511 = vmatprep.subr.mxu0 0.0
    %512 = vmatpush1.msra.mxu0 0.0
    %513 = vmatprep.subr.mxu0 0.0
    %514 = vmatpush1.msra.mxu0 0.0
    %515 = vmatprep.subr.mxu0 0.0
    %516 = vmatpush1.msra.mxu0 %v21
    %517 = vmatprep.subr.mxu0 0.0
    %518 = vmatpush1.msra.mxu0 %v20
    %519 = vmatprep.subr.mxu0 0.0
    %520 = vmatpush1.msra.mxu0 %v19
    %521 = vmatprep.subr.mxu0 0.0
    %522 = vmatpush1.msra.mxu0 %v18
    %523 = vmatprep.subr.mxu0 0.0
    %524 = vmatpush2.msra.mxu0 0.0
    %525 = vmatprep.subr.mxu0 0.0
    %526 = vmatpush2.msra.mxu0 0.0
    %527 = vmatprep.subr.mxu0 0.0
    %528 = vmatpush2.msra.mxu0 0.0
    %529 = vmatprep.subr.mxu0 0.0
    %530 = vmatpush2.msra.mxu0 0.0
    %531 = vmatprep.subr.mxu0 0.0
    %532 = vmatpush2.msra.mxu0 0.0
    %533 = vmatprep.subr.mxu0 0.0
    %534 = vmatpush2.msra.mxu0 0.0
    %535 = vmatprep.subr.mxu0 0.0
    %536 = vmatpush2.msra.mxu0 0.0
    %537 = vmatprep.subr.mxu0 0.0
    %538 = vmatpush2.msra.mxu0 0.0
    %539 = vmatprep.subr.mxu0 0.0
    %540 = vmatpush2.msra.mxu0 0.0
    %541 = vmatprep.subr.mxu0 0.0
    %542 = vmatpush2.msra.mxu0 0.0
    %543 = vmatprep.subr.mxu0 0.0
    %544 = vmatpush2.msra.mxu0 0.0
    %545 = vmatprep.subr.mxu0 0.0
    %546 = vmatpush2.msra.mxu0 0.0
    %547 = vmatprep.subr.mxu0 0.0
    %548 = vmatpush2.msra.mxu0 0.0
    %549 = vmatprep.subr.mxu0 0.0
    %550 = vmatpush2.msra.mxu0 0.0
    %551 = vmatprep.subr.mxu0 0.0
    %552 = vmatpush2.msra.mxu0 0.0
    %553 = vmatprep.subr.mxu0 0.0
    %554 = vmatpush2.msra.mxu0 0.0
    %555 = vmatprep.mubr.f32.mxu0 0.0
    %556 = vmatmul.mubr.f32.gmra.mxu0 %v487
    %v557 = vpop.f32.mrf.mxu0
    %v558 = vadd.f32 0.0, %v557
    %v559 = vpop.f32.mrf.mxu0
    %560 = vmatprep.mubr.f32.mxu0 0.0
    %561 = vmatmul.mubr.f32.gmra.mxu0 %v489
    %v562 = vpop.f32.mrf.mxu0
    %v563 = vadd.f32 0.0, %v562
    %v564 = vpop.f32.mrf.mxu0
    %565 = vdwg.mxu0
    %v566 = vadd.f32 %v479, %v558
    %v567 = vadd.f32 %v480, %v563
    %v568 = vxor.u32 %v566, 2147483648
    %v569 = vxor.u32 %v567, 2147483648
    %v570 = vmul.f32 %v568, 1.442695
    %v571 = vpow.pop %v570
    %v572 = vmul.f32 %v569, 1.442695
    %v573 = vpow.pop %v572
    %v574 = vadd.f32 %v571, 1.0
    %v575 = vadd.f32 %v573, 1.0
    %v576 = vrcp.pop %v574
    %v577 = vmul.f32 1.0, %v576
    %v578 = vrcp.pop %v575
    %v579 = vmul.f32 1.0, %v578
    %v580 = vadd.f32 %v558, %v129
    %v581 = vadd.f32 %v563, %v129
    %584 = vrot.lane.b32.xlu0 %v580, 64
    %v585 = vpop.permute.xlu0 %584
    %586 = vrot.lane.b32.xlu0 %v581, 64
    %v587 = vpop.permute.xlu0 %586
    %v590 = vmul.f32 %v577, %v585
    %v591 = vmul.f32 %v579, %v587
    %594 = vrot.lane.b32.xlu0 %v590, 64
    %v595 = vpop.permute.xlu0 %594
    %596 = vrot.lane.b32.xlu0 %v591, 64
    %v597 = vpop.permute.xlu0 %596
    %v600 = vadd.f32 %v479, %v595
    %v601 = vadd.f32 %v480, %v597
    %v602 = vtanh.pop %v600
    %v603 = vtanh.pop %v601
    %v604 = vsub.f32 %v477, %v602
    %v605 = vsub.f32 %v478, %v603
    %608 = vrot.lane.b32.xlu0 %v604, 96
    %v609 = vpop.permute.xlu0 %608
    %610 = vrot.lane.b32.xlu0 %v605, 96
    %v611 = vpop.permute.xlu0 %610
    %v614 = vmul.f32 %v577, %v609
    %v615 = vmul.f32 %v579, %v611
    %618 = vrot.lane.b32.xlu0 %v614, 32
    %v619 = vpop.permute.xlu0 %618
    %620 = vrot.lane.b32.xlu0 %v615, 32
    %v621 = vpop.permute.xlu0 %620
    %v624 = vadd.f32 %v602, %v619
    %v625 = vadd.f32 %v603, %v621
    %v626 = vld [vmem:[%s0 + $0x40] sm:$0xff]
    %v627 = vld [vmem:[%s0 + $0x48] sm:$0xff]
    %630 = vrot.lane.b32.xlu0 %v624, 64
    %v631 = vpop.permute.xlu0 %630
    %632 = vrot.lane.b32.xlu0 %v625, 64
    %v633 = vpop.permute.xlu0 %632
    %v634 = vsel %vm32, %v631, 0
    %v636 = vsel %vm32, %v633, 0
    %638 = vmatprep.subr.mxu0 0.0
    %639 = vmatpush1.msra.mxu0 0.0
    %640 = vmatprep.subr.mxu0 0.0
    %641 = vmatpush1.msra.mxu0 0.0
    %642 = vmatprep.subr.mxu0 0.0
    %643 = vmatpush1.msra.mxu0 0.0
    %644 = vmatprep.subr.mxu0 0.0
    %645 = vmatpush1.msra.mxu0 0.0
    %646 = vmatprep.subr.mxu0 0.0
    %647 = vmatpush1.msra.mxu0 0.0
    %648 = vmatprep.subr.mxu0 0.0
    %649 = vmatpush1.msra.mxu0 0.0
    %650 = vmatprep.subr.mxu0 0.0
    %651 = vmatpush1.msra.mxu0 0.0
    %652 = vmatprep.subr.mxu0 0.0
    %653 = vmatpush1.msra.mxu0 0.0
    %654 = vmatprep.subr.mxu0 0.0
    %655 = vmatpush1.msra.mxu0 0.0
    %656 = vmatprep.subr.mxu0 0.0
    %657 = vmatpush1.msra.mxu0 0.0
    %658 = vmatprep.subr.mxu0 0.0
    %659 = vmatpush1.msra.mxu0 0.0
    %660 = vmatprep.subr.mxu0 0.0
    %661 = vmatpush1.msra.mxu0 0.0
    %662 = vmatprep.subr.mxu0 0.0
    %663 = vmatpush1.msra.mxu0 %v21
    %664 = vmatprep.subr.mxu0 0.0
    %665 = vmatpush1.msra.mxu0 %v20
    %666 = vmatprep.subr.mxu0 0.0
    %667 = vmatpush1.msra.mxu0 %v19
    %668 = vmatprep.subr.mxu0 0.0
    %669 = vmatpush1.msra.mxu0 %v18
    %670 = vmatprep.subr.mxu0 0.0
    %671 = vmatpush2.msra.mxu0 0.0
    %672 = vmatprep.subr.mxu0 0.0
    %673 = vmatpush2.msra.mxu0 0.0
    %674 = vmatprep.subr.mxu0 0.0
    %675 = vmatpush2.msra.mxu0 0.0
    %676 = vmatprep.subr.mxu0 0.0
    %677 = vmatpush2.msra.mxu0 0.0
    %678 = vmatprep.subr.mxu0 0.0
    %679 = vmatpush2.msra.mxu0 0.0
    %680 = vmatprep.subr.mxu0 0.0
    %681 = vmatpush2.msra.mxu0 0.0
    %682 = vmatprep.subr.mxu0 0.0
    %683 = vmatpush2.msra.mxu0 0.0
    %684 = vmatprep.subr.mxu0 0.0
    %685 = vmatpush2.msra.mxu0 0.0
    %686 = vmatprep.subr.mxu0 0.0
    %687 = vmatpush2.msra.mxu0 0.0
    %688 = vmatprep.subr.mxu0 0.0
    %689 = vmatpush2.msra.mxu0 0.0
    %690 = vmatprep.subr.mxu0 0.0
    %691 = vmatpush2.msra.mxu0 0.0
    %692 = vmatprep.subr.mxu0 0.0
    %693 = vmatpush2.msra.mxu0 0.0
    %694 = vmatprep.subr.mxu0 0.0
    %695 = vmatpush2.msra.mxu0 0.0
    %696 = vmatprep.subr.mxu0 0.0
    %697 = vmatpush2.msra.mxu0 0.0
    %698 = vmatprep.subr.mxu0 0.0
    %699 = vmatpush2.msra.mxu0 0.0
    %700 = vmatprep.subr.mxu0 0.0
    %701 = vmatpush2.msra.mxu0 0.0
    %702 = vmatprep.mubr.f32.mxu0 0.0
    %703 = vmatmul.mubr.f32.gmra.mxu0 %v634
    %v704 = vpop.f32.mrf.mxu0
    %v705 = vadd.f32 0.0, %v704
    %v706 = vpop.f32.mrf.mxu0
    %707 = vmatprep.mubr.f32.mxu0 0.0
    %708 = vmatmul.mubr.f32.gmra.mxu0 %v636
    %v709 = vpop.f32.mrf.mxu0
    %v710 = vadd.f32 0.0, %v709
    %v711 = vpop.f32.mrf.mxu0
    %712 = vdwg.mxu0
    %v713 = vadd.f32 %v626, %v705
    %v714 = vadd.f32 %v627, %v710
    %v715 = vxor.u32 %v713, 2147483648
    %v716 = vxor.u32 %v714, 2147483648
    %v717 = vmul.f32 %v715, 1.442695
    %v718 = vpow.pop %v717
    %v719 = vmul.f32 %v716, 1.442695
    %v720 = vpow.pop %v719
    %v721 = vadd.f32 %v718, 1.0
    %v722 = vadd.f32 %v720, 1.0
    %v723 = vrcp.pop %v721
    %v724 = vmul.f32 1.0, %v723
    %v725 = vrcp.pop %v722
    %v726 = vmul.f32 1.0, %v725
    %v727 = vadd.f32 %v705, %v129
    %v728 = vadd.f32 %v710, %v129
    %731 = vrot.lane.b32.xlu0 %v727, 64
    %v732 = vpop.permute.xlu0 %731
    %733 = vrot.lane.b32.xlu0 %v728, 64
    %v734 = vpop.permute.xlu0 %733
    %v737 = vmul.f32 %v724, %v732
    %v738 = vmul.f32 %v726, %v734
    %741 = vrot.lane.b32.xlu0 %v737, 64
    %v742 = vpop.permute.xlu0 %741
    %743 = vrot.lane.b32.xlu0 %v738, 64
    %v744 = vpop.permute.xlu0 %743
    %v747 = vadd.f32 %v626, %v742
    %v748 = vadd.f32 %v627, %v744
    %v749 = vtanh.pop %v747
    %v750 = vtanh.pop %v748
    %v751 = vsub.f32 %v624, %v749
    %v752 = vsub.f32 %v625, %v750
    %755 = vrot.lane.b32.xlu0 %v751, 96
    %v756 = vpop.permute.xlu0 %755
    %757 = vrot.lane.b32.xlu0 %v752, 96
    %v758 = vpop.permute.xlu0 %757
    %v761 = vmul.f32 %v724, %v756
    %v762 = vmul.f32 %v726, %v758
    %765 = vrot.lane.b32.xlu0 %v761, 32
    %v766 = vpop.permute.xlu0 %765
    %767 = vrot.lane.b32.xlu0 %v762, 32
    %v768 = vpop.permute.xlu0 %767
    %v771 = vadd.f32 %v749, %v766
    %v772 = vadd.f32 %v750, %v768
    %v773 = vld [vmem:[%s0 + $0x50] sm:$0xff]
    %v774 = vld [vmem:[%s0 + $0x58] sm:$0xff]
    %777 = vrot.lane.b32.xlu0 %v771, 64
    %v778 = vpop.permute.xlu0 %777
    %779 = vrot.lane.b32.xlu0 %v772, 64
    %v780 = vpop.permute.xlu0 %779
    %v781 = vsel %vm32, %v778, 0
    %v783 = vsel %vm32, %v780, 0
    %785 = vmatprep.subr.mxu0 0.0
    %786 = vmatpush1.msra.mxu0 0.0
    %787 = vmatprep.subr.mxu0 0.0
    %788 = vmatpush1.msra.mxu0 0.0
    %789 = vmatprep.subr.mxu0 0.0
    %790 = vmatpush1.msra.mxu0 0.0
    %791 = vmatprep.subr.mxu0 0.0
    %792 = vmatpush1.msra.mxu0 0.0
    %793 = vmatprep.subr.mxu0 0.0
    %794 = vmatpush1.msra.mxu0 0.0
    %795 = vmatprep.subr.mxu0 0.0
    %796 = vmatpush1.msra.mxu0 0.0
    %797 = vmatprep.subr.mxu0 0.0
    %798 = vmatpush1.msra.mxu0 0.0
    %799 = vmatprep.subr.mxu0 0.0
    %800 = vmatpush1.msra.mxu0 0.0
    %801 = vmatprep.subr.mxu0 0.0
    %802 = vmatpush1.msra.mxu0 0.0
    %803 = vmatprep.subr.mxu0 0.0
    %804 = vmatpush1.msra.mxu0 0.0
    %805 = vmatprep.subr.mxu0 0.0
    %806 = vmatpush1.msra.mxu0 0.0
    %807 = vmatprep.subr.mxu0 0.0
    %808 = vmatpush1.msra.mxu0 0.0
    %809 = vmatprep.subr.mxu0 0.0
    %810 = vmatpush1.msra.mxu0 %v21
    %811 = vmatprep.subr.mxu0 0.0
    %812 = vmatpush1.msra.mxu0 %v20
    %813 = vmatprep.subr.mxu0 0.0
    %814 = vmatpush1.msra.mxu0 %v19
    %815 = vmatprep.subr.mxu0 0.0
    %816 = vmatpush1.msra.mxu0 %v18
    %817 = vmatprep.subr.mxu0 0.0
    %818 = vmatpush2.msra.mxu0 0.0
    %819 = vmatprep.subr.mxu0 0.0
    %820 = vmatpush2.msra.mxu0 0.0
    %821 = vmatprep.subr.mxu0 0.0
    %822 = vmatpush2.msra.mxu0 0.0
    %823 = vmatprep.subr.mxu0 0.0
    %824 = vmatpush2.msra.mxu0 0.0
    %825 = vmatprep.subr.mxu0 0.0
    %826 = vmatpush2.msra.mxu0 0.0
    %827 = vmatprep.subr.mxu0 0.0
    %828 = vmatpush2.msra.mxu0 0.0
    %829 = vmatprep.subr.mxu0 0.0
    %830 = vmatpush2.msra.mxu0 0.0
    %831 = vmatprep.subr.mxu0 0.0
    %832 = vmatpush2.msra.mxu0 0.0
    %833 = vmatprep.subr.mxu0 0.0
    %834 = vmatpush2.msra.mxu0 0.0
    %835 = vmatprep.subr.mxu0 0.0
    %836 = vmatpush2.msra.mxu0 0.0
    %837 = vmatprep.subr.mxu0 0.0
    %838 = vmatpush2.msra.mxu0 0.0
    %839 = vmatprep.subr.mxu0 0.0
    %840 = vmatpush2.msra.mxu0 0.0
    %841 = vmatprep.subr.mxu0 0.0
    %842 = vmatpush2.msra.mxu0 0.0
    %843 = vmatprep.subr.mxu0 0.0
    %844 = vmatpush2.msra.mxu0 0.0
    %845 = vmatprep.subr.mxu0 0.0
    %846 = vmatpush2.msra.mxu0 0.0
    %847 = vmatprep.subr.mxu0 0.0
    %848 = vmatpush2.msra.mxu0 0.0
    %849 = vmatprep.mubr.f32.mxu0 0.0
    %850 = vmatmul.mubr.f32.gmra.mxu0 %v781
    %v851 = vpop.f32.mrf.mxu0
    %v852 = vadd.f32 0.0, %v851
    %v853 = vpop.f32.mrf.mxu0
    %854 = vmatprep.mubr.f32.mxu0 0.0
    %855 = vmatmul.mubr.f32.gmra.mxu0 %v783
    %v856 = vpop.f32.mrf.mxu0
    %v857 = vadd.f32 0.0, %v856
    %v858 = vpop.f32.mrf.mxu0
    %859 = vdwg.mxu0
    %v860 = vadd.f32 %v773, %v852
    %v861 = vadd.f32 %v774, %v857
    %v862 = vxor.u32 %v860, 2147483648
    %v863 = vxor.u32 %v861, 2147483648
    %v864 = vmul.f32 %v862, 1.442695
    %v865 = vpow.pop %v864
    %v866 = vmul.f32 %v863, 1.442695
    %v867 = vpow.pop %v866
    %v868 = vadd.f32 %v865, 1.0
    %v869 = vadd.f32 %v867, 1.0
    %v870 = vrcp.pop %v868
    %v871 = vmul.f32 1.0, %v870
    %v872 = vrcp.pop %v869
    %v873 = vmul.f32 1.0, %v872
    %v874 = vadd.f32 %v852, %v129
    %v875 = vadd.f32 %v857, %v129
    %878 = vrot.lane.b32.xlu0 %v874, 64
    %v879 = vpop.permute.xlu0 %878
    %880 = vrot.lane.b32.xlu0 %v875, 64
    %v881 = vpop.permute.xlu0 %880
    %v884 = vmul.f32 %v871, %v879
    %v885 = vmul.f32 %v873, %v881
    %888 = vrot.lane.b32.xlu0 %v884, 64
    %v889 = vpop.permute.xlu0 %888
    %890 = vrot.lane.b32.xlu0 %v885, 64
    %v891 = vpop.permute.xlu0 %890
    %v894 = vadd.f32 %v773, %v889
    %v895 = vadd.f32 %v774, %v891
    %v896 = vtanh.pop %v894
    %v897 = vtanh.pop %v895
    %v898 = vsub.f32 %v771, %v896
    %v899 = vsub.f32 %v772, %v897
    %902 = vrot.lane.b32.xlu0 %v898, 96
    %v903 = vpop.permute.xlu0 %902
    %904 = vrot.lane.b32.xlu0 %v899, 96
    %v905 = vpop.permute.xlu0 %904
    %v908 = vmul.f32 %v871, %v903
    %v909 = vmul.f32 %v873, %v905
    %912 = vrot.lane.b32.xlu0 %v908, 32
    %v913 = vpop.permute.xlu0 %912
    %914 = vrot.lane.b32.xlu0 %v909, 32
    %v915 = vpop.permute.xlu0 %914
    %v918 = vadd.f32 %v896, %v913
    %v919 = vadd.f32 %v897, %v915
    %v920 = vld [vmem:[%s0 + $0x60] sm:$0xff]
    %v921 = vld [vmem:[%s0 + $0x68] sm:$0xff]
    %924 = vrot.lane.b32.xlu0 %v918, 64
    %v925 = vpop.permute.xlu0 %924
    %926 = vrot.lane.b32.xlu0 %v919, 64
    %v927 = vpop.permute.xlu0 %926
    %v928 = vsel %vm32, %v925, 0
    %v930 = vsel %vm32, %v927, 0
    %932 = vmatprep.subr.mxu0 0.0
    %933 = vmatpush1.msra.mxu0 0.0
    %934 = vmatprep.subr.mxu0 0.0
    %935 = vmatpush1.msra.mxu0 0.0
    %936 = vmatprep.subr.mxu0 0.0
    %937 = vmatpush1.msra.mxu0 0.0
    %938 = vmatprep.subr.mxu0 0.0
    %939 = vmatpush1.msra.mxu0 0.0
    %940 = vmatprep.subr.mxu0 0.0
    %941 = vmatpush1.msra.mxu0 0.0
    %942 = vmatprep.subr.mxu0 0.0
    %943 = vmatpush1.msra.mxu0 0.0
    %944 = vmatprep.subr.mxu0 0.0
    %945 = vmatpush1.msra.mxu0 0.0
    %946 = vmatprep.subr.mxu0 0.0
    %947 = vmatpush1.msra.mxu0 0.0
    %948 = vmatprep.subr.mxu0 0.0
    %949 = vmatpush1.msra.mxu0 0.0
    %950 = vmatprep.subr.mxu0 0.0
    %951 = vmatpush1.msra.mxu0 0.0
    %952 = vmatprep.subr.mxu0 0.0
    %953 = vmatpush1.msra.mxu0 0.0
    %954 = vmatprep.subr.mxu0 0.0
    %955 = vmatpush1.msra.mxu0 0.0
    %956 = vmatprep.subr.mxu0 0.0
    %957 = vmatpush1.msra.mxu0 %v21
    %958 = vmatprep.subr.mxu0 0.0
    %959 = vmatpush1.msra.mxu0 %v20
    %960 = vmatprep.subr.mxu0 0.0
    %961 = vmatpush1.msra.mxu0 %v19
    %962 = vmatprep.subr.mxu0 0.0
    %963 = vmatpush1.msra.mxu0 %v18
    %964 = vmatprep.subr.mxu0 0.0
    %965 = vmatpush2.msra.mxu0 0.0
    %966 = vmatprep.subr.mxu0 0.0
    %967 = vmatpush2.msra.mxu0 0.0
    %968 = vmatprep.subr.mxu0 0.0
    %969 = vmatpush2.msra.mxu0 0.0
    %970 = vmatprep.subr.mxu0 0.0
    %971 = vmatpush2.msra.mxu0 0.0
    %972 = vmatprep.subr.mxu0 0.0
    %973 = vmatpush2.msra.mxu0 0.0
    %974 = vmatprep.subr.mxu0 0.0
    %975 = vmatpush2.msra.mxu0 0.0
    %976 = vmatprep.subr.mxu0 0.0
    %977 = vmatpush2.msra.mxu0 0.0
    %978 = vmatprep.subr.mxu0 0.0
    %979 = vmatpush2.msra.mxu0 0.0
    %980 = vmatprep.subr.mxu0 0.0
    %981 = vmatpush2.msra.mxu0 0.0
    %982 = vmatprep.subr.mxu0 0.0
    %983 = vmatpush2.msra.mxu0 0.0
    %984 = vmatprep.subr.mxu0 0.0
    %985 = vmatpush2.msra.mxu0 0.0
    %986 = vmatprep.subr.mxu0 0.0
    %987 = vmatpush2.msra.mxu0 0.0
    %988 = vmatprep.subr.mxu0 0.0
    %989 = vmatpush2.msra.mxu0 0.0
    %990 = vmatprep.subr.mxu0 0.0
    %991 = vmatpush2.msra.mxu0 0.0
    %992 = vmatprep.subr.mxu0 0.0
    %993 = vmatpush2.msra.mxu0 0.0
    %994 = vmatprep.subr.mxu0 0.0
    %995 = vmatpush2.msra.mxu0 0.0
    %996 = vmatprep.mubr.f32.mxu0 0.0
    %997 = vmatmul.mubr.f32.gmra.mxu0 %v928
    %v998 = vpop.f32.mrf.mxu0
    %v999 = vadd.f32 0.0, %v998
    %v1000 = vpop.f32.mrf.mxu0
    %1001 = vmatprep.mubr.f32.mxu0 0.0
    %1002 = vmatmul.mubr.f32.gmra.mxu0 %v930
    %v1003 = vpop.f32.mrf.mxu0
    %v1004 = vadd.f32 0.0, %v1003
    %v1005 = vpop.f32.mrf.mxu0
    %1006 = vdwg.mxu0
    %v1007 = vadd.f32 %v920, %v999
    %v1008 = vadd.f32 %v921, %v1004
    %v1009 = vxor.u32 %v1007, 2147483648
    %v1010 = vxor.u32 %v1008, 2147483648
    %v1011 = vmul.f32 %v1009, 1.442695
    %v1012 = vpow.pop %v1011
    %v1013 = vmul.f32 %v1010, 1.442695
    %v1014 = vpow.pop %v1013
    %v1015 = vadd.f32 %v1012, 1.0
    %v1016 = vadd.f32 %v1014, 1.0
    %v1017 = vrcp.pop %v1015
    %v1018 = vmul.f32 1.0, %v1017
    %v1019 = vrcp.pop %v1016
    %v1020 = vmul.f32 1.0, %v1019
    %v1021 = vadd.f32 %v999, %v129
    %v1022 = vadd.f32 %v1004, %v129
    %1025 = vrot.lane.b32.xlu0 %v1021, 64
    %v1026 = vpop.permute.xlu0 %1025
    %1027 = vrot.lane.b32.xlu0 %v1022, 64
    %v1028 = vpop.permute.xlu0 %1027
    %v1031 = vmul.f32 %v1018, %v1026
    %v1032 = vmul.f32 %v1020, %v1028
    %1035 = vrot.lane.b32.xlu0 %v1031, 64
    %v1036 = vpop.permute.xlu0 %1035
    %1037 = vrot.lane.b32.xlu0 %v1032, 64
    %v1038 = vpop.permute.xlu0 %1037
    %v1041 = vadd.f32 %v920, %v1036
    %v1042 = vadd.f32 %v921, %v1038
    %v1043 = vtanh.pop %v1041
    %v1044 = vtanh.pop %v1042
    %v1045 = vsub.f32 %v918, %v1043
    %v1046 = vsub.f32 %v919, %v1044
    %1049 = vrot.lane.b32.xlu0 %v1045, 96
    %v1050 = vpop.permute.xlu0 %1049
    %1051 = vrot.lane.b32.xlu0 %v1046, 96
    %v1052 = vpop.permute.xlu0 %1051
    %v1055 = vmul.f32 %v1018, %v1050
    %v1056 = vmul.f32 %v1020, %v1052
    %1059 = vrot.lane.b32.xlu0 %v1055, 32
    %v1060 = vpop.permute.xlu0 %1059
    %1061 = vrot.lane.b32.xlu0 %v1056, 32
    %v1062 = vpop.permute.xlu0 %1061
    %v1065 = vadd.f32 %v1043, %v1060
    %v1066 = vadd.f32 %v1044, %v1062
    %1069 = vrot.lane.b32.xlu0 %v1065, 64
    %v1070 = vpop.permute.xlu0 %1069
    %1071 = vrot.lane.b32.xlu0 %v1066, 64
    %v1072 = vpop.permute.xlu0 %1071
    %1075 = vst.msk [vmem:[#allocation2] sm:$0xff] %vm32, %v1070
    %1076 = vst.msk [vmem:[#allocation2 + $0x8] sm:$0xff] %vm32, %v1072
    %v1077 = vld [vmem:[%s0 + $0x70] sm:$0xff]
    %v1078 = vld [vmem:[%s0 + $0x78] sm:$0xff]
    %v1079 = vsel %vm32, %v1070, 0
    %v1081 = vsel %vm32, %v1072, 0
    %1083 = vmatprep.subr.mxu0 0.0
    %1084 = vmatpush1.msra.mxu0 0.0
    %1085 = vmatprep.subr.mxu0 0.0
    %1086 = vmatpush1.msra.mxu0 0.0
    %1087 = vmatprep.subr.mxu0 0.0
    %1088 = vmatpush1.msra.mxu0 0.0
    %1089 = vmatprep.subr.mxu0 0.0
    %1090 = vmatpush1.msra.mxu0 0.0
    %1091 = vmatprep.subr.mxu0 0.0
    %1092 = vmatpush1.msra.mxu0 0.0
    %1093 = vmatprep.subr.mxu0 0.0
    %1094 = vmatpush1.msra.mxu0 0.0
    %1095 = vmatprep.subr.mxu0 0.0
    %1096 = vmatpush1.msra.mxu0 0.0
    %1097 = vmatprep.subr.mxu0 0.0
    %1098 = vmatpush1.msra.mxu0 0.0
    %1099 = vmatprep.subr.mxu0 0.0
    %1100 = vmatpush1.msra.mxu0 0.0
    %1101 = vmatprep.subr.mxu0 0.0
    %1102 = vmatpush1.msra.mxu0 0.0
    %1103 = vmatprep.subr.mxu0 0.0
    %1104 = vmatpush1.msra.mxu0 0.0
    %1105 = vmatprep.subr.mxu0 0.0
    %1106 = vmatpush1.msra.mxu0 0.0
    %1107 = vmatprep.subr.mxu0 0.0
    %1108 = vmatpush1.msra.mxu0 %v21
    %1109 = vmatprep.subr.mxu0 0.0
    %1110 = vmatpush1.msra.mxu0 %v20
    %1111 = vmatprep.subr.mxu0 0.0
    %1112 = vmatpush1.msra.mxu0 %v19
    %1113 = vmatprep.subr.mxu0 0.0
    %1114 = vmatpush1.msra.mxu0 %v18
    %1115 = vmatprep.subr.mxu0 0.0
    %1116 = vmatpush2.msra.mxu0 0.0
    %1117 = vmatprep.subr.mxu0 0.0
    %1118 = vmatpush2.msra.mxu0 0.0
    %1119 = vmatprep.subr.mxu0 0.0
    %1120 = vmatpush2.msra.mxu0 0.0
    %1121 = vmatprep.subr.mxu0 0.0
    %1122 = vmatpush2.msra.mxu0 0.0
    %1123 = vmatprep.subr.mxu0 0.0
    %1124 = vmatpush2.msra.mxu0 0.0
    %1125 = vmatprep.subr.mxu0 0.0
    %1126 = vmatpush2.msra.mxu0 0.0
    %1127 = vmatprep.subr.mxu0 0.0
    %1128 = vmatpush2.msra.mxu0 0.0
    %1129 = vmatprep.subr.mxu0 0.0
    %1130 = vmatpush2.msra.mxu0 0.0
    %1131 = vmatprep.subr.mxu0 0.0
    %1132 = vmatpush2.msra.mxu0 0.0
    %1133 = vmatprep.subr.mxu0 0.0
    %1134 = vmatpush2.msra.mxu0 0.0
    %1135 = vmatprep.subr.mxu0 0.0
    %1136 = vmatpush2.msra.mxu0 0.0
    %1137 = vmatprep.subr.mxu0 0.0
    %1138 = vmatpush2.msra.mxu0 0.0
    %1139 = vmatprep.subr.mxu0 0.0
    %1140 = vmatpush2.msra.mxu0 0.0
    %1141 = vmatprep.subr.mxu0 0.0
    %1142 = vmatpush2.msra.mxu0 0.0
    %1143 = vmatprep.subr.mxu0 0.0
    %1144 = vmatpush2.msra.mxu0 0.0
    %1145 = vmatprep.subr.mxu0 0.0
    %1146 = vmatpush2.msra.mxu0 0.0
    %1147 = vmatprep.mubr.f32.mxu0 0.0
    %1148 = vmatmul.mubr.f32.gmra.mxu0 %v1079
    %v1149 = vpop.f32.mrf.mxu0
    %v1150 = vadd.f32 0.0, %v1149
    %v1151 = vpop.f32.mrf.mxu0
    %1152 = vmatprep.mubr.f32.mxu0 0.0
    %1153 = vmatmul.mubr.f32.gmra.mxu0 %v1081
    %v1154 = vpop.f32.mrf.mxu0
    %v1155 = vadd.f32 0.0, %v1154
    %v1156 = vpop.f32.mrf.mxu0
    %1157 = vdwg.mxu0
    %v1158 = vadd.f32 %v1077, %v1150
    %v1159 = vadd.f32 %v1078, %v1155
    %v1160 = vxor.u32 %v1158, 2147483648
    %v1161 = vxor.u32 %v1159, 2147483648
    %v1162 = vmul.f32 %v1160, 1.442695
    %v1163 = vpow.pop %v1162
    %v1164 = vmul.f32 %v1161, 1.442695
    %v1165 = vpow.pop %v1164
    %v1166 = vadd.f32 %v1163, 1.0
    %v1167 = vadd.f32 %v1165, 1.0
    %v1168 = vrcp.pop %v1166
    %v1169 = vmul.f32 1.0, %v1168
    %v1170 = vrcp.pop %v1167
    %v1171 = vmul.f32 1.0, %v1170
    %v1172 = vadd.f32 %v1150, %v129
    %v1173 = vadd.f32 %v1155, %v129
    %1176 = vrot.lane.b32.xlu0 %v1172, 64
    %v1177 = vpop.permute.xlu0 %1176
    %1178 = vrot.lane.b32.xlu0 %v1173, 64
    %v1179 = vpop.permute.xlu0 %1178
    %v1182 = vmul.f32 %v1169, %v1177
    %v1183 = vmul.f32 %v1171, %v1179
    %1186 = vrot.lane.b32.xlu0 %v1182, 64
    %v1187 = vpop.permute.xlu0 %1186
    %1188 = vrot.lane.b32.xlu0 %v1183, 64
    %v1189 = vpop.permute.xlu0 %1188
    %v1192 = vadd.f32 %v1077, %v1187
    %v1193 = vadd.f32 %v1078, %v1189
    %v1194 = vtanh.pop %v1192
    %v1195 = vtanh.pop %v1193
    %v1196 = vsub.f32 %v1065, %v1194
    %v1197 = vsub.f32 %v1066, %v1195
    %1200 = vrot.lane.b32.xlu0 %v1196, 96
    %v1201 = vpop.permute.xlu0 %1200
    %1202 = vrot.lane.b32.xlu0 %v1197, 96
    %v1203 = vpop.permute.xlu0 %1202
    %v1206 = vmul.f32 %v1169, %v1201
    %v1207 = vmul.f32 %v1171, %v1203
    %1210 = vrot.lane.b32.xlu0 %v1206, 32
    %v1211 = vpop.permute.xlu0 %1210
    %1212 = vrot.lane.b32.xlu0 %v1207, 32
    %v1213 = vpop.permute.xlu0 %1212
    %v1216 = vadd.f32 %v1194, %v1211
    %v1217 = vadd.f32 %v1195, %v1213
    %v1218 = vld [vmem:[%s0 + $0x80] sm:$0xff]
    %v1219 = vld [vmem:[%s0 + $0x88] sm:$0xff]
    %1222 = vrot.lane.b32.xlu0 %v1216, 64
    %v1223 = vpop.permute.xlu0 %1222
    %1224 = vrot.lane.b32.xlu0 %v1217, 64
    %v1225 = vpop.permute.xlu0 %1224
    %v1226 = vsel %vm32, %v1223, 0
    %v1228 = vsel %vm32, %v1225, 0
    %1230 = vmatprep.subr.mxu0 0.0
    %1231 = vmatpush1.msra.mxu0 0.0
    %1232 = vmatprep.subr.mxu0 0.0
    %1233 = vmatpush1.msra.mxu0 0.0
    %1234 = vmatprep.subr.mxu0 0.0
    %1235 = vmatpush1.msra.mxu0 0.0
    %1236 = vmatprep.subr.mxu0 0.0
    %1237 = vmatpush1.msra.mxu0 0.0
    %1238 = vmatprep.subr.mxu0 0.0
    %1239 = vmatpush1.msra.mxu0 0.0
    %1240 = vmatprep.subr.mxu0 0.0
    %1241 = vmatpush1.msra.mxu0 0.0
    %1242 = vmatprep.subr.mxu0 0.0
    %1243 = vmatpush1.msra.mxu0 0.0
    %1244 = vmatprep.subr.mxu0 0.0
    %1245 = vmatpush1.msra.mxu0 0.0
    %1246 = vmatprep.subr.mxu0 0.0
    %1247 = vmatpush1.msra.mxu0 0.0
    %1248 = vmatprep.subr.mxu0 0.0
    %1249 = vmatpush1.msra.mxu0 0.0
    %1250 = vmatprep.subr.mxu0 0.0
    %1251 = vmatpush1.msra.mxu0 0.0
    %1252 = vmatprep.subr.mxu0 0.0
    %1253 = vmatpush1.msra.mxu0 0.0
    %1254 = vmatprep.subr.mxu0 0.0
    %1255 = vmatpush1.msra.mxu0 %v21
    %1256 = vmatprep.subr.mxu0 0.0
    %1257 = vmatpush1.msra.mxu0 %v20
    %1258 = vmatprep.subr.mxu0 0.0
    %1259 = vmatpush1.msra.mxu0 %v19
    %1260 = vmatprep.subr.mxu0 0.0
    %1261 = vmatpush1.msra.mxu0 %v18
    %1262 = vmatprep.subr.mxu0 0.0
    %1263 = vmatpush2.msra.mxu0 0.0
    %1264 = vmatprep.subr.mxu0 0.0
    %1265 = vmatpush2.msra.mxu0 0.0
    %1266 = vmatprep.subr.mxu0 0.0
    %1267 = vmatpush2.msra.mxu0 0.0
    %1268 = vmatprep.subr.mxu0 0.0
    %1269 = vmatpush2.msra.mxu0 0.0
    %1270 = vmatprep.subr.mxu0 0.0
    %1271 = vmatpush2.msra.mxu0 0.0
    %1272 = vmatprep.subr.mxu0 0.0
    %1273 = vmatpush2.msra.mxu0 0.0
    %1274 = vmatprep.subr.mxu0 0.0
    %1275 = vmatpush2.msra.mxu0 0.0
    %1276 = vmatprep.subr.mxu0 0.0
    %1277 = vmatpush2.msra.mxu0 0.0
    %1278 = vmatprep.subr.mxu0 0.0
    %1279 = vmatpush2.msra.mxu0 0.0
    %1280 = vmatprep.subr.mxu0 0.0
    %1281 = vmatpush2.msra.mxu0 0.0
    %1282 = vmatprep.subr.mxu0 0.0
    %1283 = vmatpush2.msra.mxu0 0.0
    %1284 = vmatprep.subr.mxu0 0.0
    %1285 = vmatpush2.msra.mxu0 0.0
    %1286 = vmatprep.subr.mxu0 0.0
    %1287 = vmatpush2.msra.mxu0 0.0
    %1288 = vmatprep.subr.mxu0 0.0
    %1289 = vmatpush2.msra.mxu0 0.0
    %1290 = vmatprep.subr.mxu0 0.0
    %1291 = vmatpush2.msra.mxu0 0.0
    %1292 = vmatprep.subr.mxu0 0.0
    %1293 = vmatpush2.msra.mxu0 0.0
    %1294 = vmatprep.mubr.f32.mxu0 0.0
    %1295 = vmatmul.mubr.f32.gmra.mxu0 %v1226
    %v1296 = vpop.f32.mrf.mxu0
    %v1297 = vadd.f32 0.0, %v1296
    %v1298 = vpop.f32.mrf.mxu0
    %1299 = vmatprep.mubr.f32.mxu0 0.0
    %1300 = vmatmul.mubr.f32.gmra.mxu0 %v1228
    %v1301 = vpop.f32.mrf.mxu0
    %v1302 = vadd.f32 0.0, %v1301
    %v1303 = vpop.f32.mrf.mxu0
    %1304 = vdwg.mxu0
    %v1305 = vadd.f32 %v1218, %v1297
    %v1306 = vadd.f32 %v1219, %v1302
    %v1307 = vxor.u32 %v1305, 2147483648
    %v1308 = vxor.u32 %v1306, 2147483648
    %v1309 = vmul.f32 %v1307, 1.442695
    %v1310 = vpow.pop %v1309
    %v1311 = vmul.f32 %v1308, 1.442695
    %v1312 = vpow.pop %v1311
    %v1313 = vadd.f32 %v1310, 1.0
    %v1314 = vadd.f32 %v1312, 1.0
    %v1315 = vrcp.pop %v1313
    %v1316 = vmul.f32 1.0, %v1315
    %v1317 = vrcp.pop %v1314
    %v1318 = vmul.f32 1.0, %v1317
    %v1319 = vadd.f32 %v1297, %v129
    %v1320 = vadd.f32 %v1302, %v129
    %1323 = vrot.lane.b32.xlu0 %v1319, 64
    %v1324 = vpop.permute.xlu0 %1323
    %1325 = vrot.lane.b32.xlu0 %v1320, 64
    %v1326 = vpop.permute.xlu0 %1325
    %v1329 = vmul.f32 %v1316, %v1324
    %v1330 = vmul.f32 %v1318, %v1326
    %1333 = vrot.lane.b32.xlu0 %v1329, 64
    %v1334 = vpop.permute.xlu0 %1333
    %1335 = vrot.lane.b32.xlu0 %v1330, 64
    %v1336 = vpop.permute.xlu0 %1335
    %v1339 = vadd.f32 %v1218, %v1334
    %v1340 = vadd.f32 %v1219, %v1336
    %v1341 = vtanh.pop %v1339
    %v1342 = vtanh.pop %v1340
    %v1343 = vsub.f32 %v1216, %v1341
    %v1344 = vsub.f32 %v1217, %v1342
    %1347 = vrot.lane.b32.xlu0 %v1343, 96
    %v1348 = vpop.permute.xlu0 %1347
    %1349 = vrot.lane.b32.xlu0 %v1344, 96
    %v1350 = vpop.permute.xlu0 %1349
    %v1353 = vmul.f32 %v1316, %v1348
    %v1354 = vmul.f32 %v1318, %v1350
    %1357 = vrot.lane.b32.xlu0 %v1353, 32
    %v1358 = vpop.permute.xlu0 %1357
    %1359 = vrot.lane.b32.xlu0 %v1354, 32
    %v1360 = vpop.permute.xlu0 %1359
    %v1363 = vadd.f32 %v1341, %v1358
    %v1364 = vadd.f32 %v1342, %v1360
    %v1365 = vld [vmem:[%s0 + $0x90] sm:$0xff]
    %v1366 = vld [vmem:[%s0 + $0x98] sm:$0xff]
    %1369 = vrot.lane.b32.xlu0 %v1363, 64
    %v1370 = vpop.permute.xlu0 %1369
    %1371 = vrot.lane.b32.xlu0 %v1364, 64
    %v1372 = vpop.permute.xlu0 %1371
    %v1373 = vsel %vm32, %v1370, 0
    %v1375 = vsel %vm32, %v1372, 0
    %1377 = vmatprep.subr.mxu0 0.0
    %1378 = vmatpush1.msra.mxu0 0.0
    %1379 = vmatprep.subr.mxu0 0.0
    %1380 = vmatpush1.msra.mxu0 0.0
    %1381 = vmatprep.subr.mxu0 0.0
    %1382 = vmatpush1.msra.mxu0 0.0
    %1383 = vmatprep.subr.mxu0 0.0
    %1384 = vmatpush1.msra.mxu0 0.0
    %1385 = vmatprep.subr.mxu0 0.0
    %1386 = vmatpush1.msra.mxu0 0.0
    %1387 = vmatprep.subr.mxu0 0.0
    %1388 = vmatpush1.msra.mxu0 0.0
    %1389 = vmatprep.subr.mxu0 0.0
    %1390 = vmatpush1.msra.mxu0 0.0
    %1391 = vmatprep.subr.mxu0 0.0
    %1392 = vmatpush1.msra.mxu0 0.0
    %1393 = vmatprep.subr.mxu0 0.0
    %1394 = vmatpush1.msra.mxu0 0.0
    %1395 = vmatprep.subr.mxu0 0.0
    %1396 = vmatpush1.msra.mxu0 0.0
    %1397 = vmatprep.subr.mxu0 0.0
    %1398 = vmatpush1.msra.mxu0 0.0
    %1399 = vmatprep.subr.mxu0 0.0
    %1400 = vmatpush1.msra.mxu0 0.0
    %1401 = vmatprep.subr.mxu0 0.0
    %1402 = vmatpush1.msra.mxu0 %v21
    %1403 = vmatprep.subr.mxu0 0.0
    %1404 = vmatpush1.msra.mxu0 %v20
    %1405 = vmatprep.subr.mxu0 0.0
    %1406 = vmatpush1.msra.mxu0 %v19
    %1407 = vmatprep.subr.mxu0 0.0
    %1408 = vmatpush1.msra.mxu0 %v18
    %1409 = vmatprep.subr.mxu0 0.0
    %1410 = vmatpush2.msra.mxu0 0.0
    %1411 = vmatprep.subr.mxu0 0.0
    %1412 = vmatpush2.msra.mxu0 0.0
    %1413 = vmatprep.subr.mxu0 0.0
    %1414 = vmatpush2.msra.mxu0 0.0
    %1415 = vmatprep.subr.mxu0 0.0
    %1416 = vmatpush2.msra.mxu0 0.0
    %1417 = vmatprep.subr.mxu0 0.0
    %1418 = vmatpush2.msra.mxu0 0.0
    %1419 = vmatprep.subr.mxu0 0.0
    %1420 = vmatpush2.msra.mxu0 0.0
    %1421 = vmatprep.subr.mxu0 0.0
    %1422 = vmatpush2.msra.mxu0 0.0
    %1423 = vmatprep.subr.mxu0 0.0
    %1424 = vmatpush2.msra.mxu0 0.0
    %1425 = vmatprep.subr.mxu0 0.0
    %1426 = vmatpush2.msra.mxu0 0.0
    %1427 = vmatprep.subr.mxu0 0.0
    %1428 = vmatpush2.msra.mxu0 0.0
    %1429 = vmatprep.subr.mxu0 0.0
    %1430 = vmatpush2.msra.mxu0 0.0
    %1431 = vmatprep.subr.mxu0 0.0
    %1432 = vmatpush2.msra.mxu0 0.0
    %1433 = vmatprep.subr.mxu0 0.0
    %1434 = vmatpush2.msra.mxu0 0.0
    %1435 = vmatprep.subr.mxu0 0.0
    %1436 = vmatpush2.msra.mxu0 0.0
    %1437 = vmatprep.subr.mxu0 0.0
    %1438 = vmatpush2.msra.mxu0 0.0
    %1439 = vmatprep.subr.mxu0 0.0
    %1440 = vmatpush2.msra.mxu0 0.0
    %1441 = vmatprep.mubr.f32.mxu0 0.0
    %1442 = vmatmul.mubr.f32.gmra.mxu0 %v1373
    %v1443 = vpop.f32.mrf.mxu0
    %v1444 = vadd.f32 0.0, %v1443
    %v1445 = vpop.f32.mrf.mxu0
    %1446 = vmatprep.mubr.f32.mxu0 0.0
    %1447 = vmatmul.mubr.f32.gmra.mxu0 %v1375
    %v1448 = vpop.f32.mrf.mxu0
    %v1449 = vadd.f32 0.0, %v1448
    %v1450 = vpop.f32.mrf.mxu0
    %1451 = vdwg.mxu0
    %v1452 = vadd.f32 %v1365, %v1444
    %v1453 = vadd.f32 %v1366, %v1449
    %v1454 = vxor.u32 %v1452, 2147483648
    %v1455 = vxor.u32 %v1453, 2147483648
    %v1456 = vmul.f32 %v1454, 1.442695
    %v1457 = vpow.pop %v1456
    %v1458 = vmul.f32 %v1455, 1.442695
    %v1459 = vpow.pop %v1458
    %v1460 = vadd.f32 %v1457, 1.0
    %v1461 = vadd.f32 %v1459, 1.0
    %v1462 = vrcp.pop %v1460
    %v1463 = vmul.f32 1.0, %v1462
    %v1464 = vrcp.pop %v1461
    %v1465 = vmul.f32 1.0, %v1464
    %v1466 = vadd.f32 %v1444, %v129
    %v1467 = vadd.f32 %v1449, %v129
    %1470 = vrot.lane.b32.xlu0 %v1466, 64
    %v1471 = vpop.permute.xlu0 %1470
    %1472 = vrot.lane.b32.xlu0 %v1467, 64
    %v1473 = vpop.permute.xlu0 %1472
    %v1476 = vmul.f32 %v1463, %v1471
    %v1477 = vmul.f32 %v1465, %v1473
    %1480 = vrot.lane.b32.xlu0 %v1476, 64
    %v1481 = vpop.permute.xlu0 %1480
    %1482 = vrot.lane.b32.xlu0 %v1477, 64
    %v1483 = vpop.permute.xlu0 %1482
    %v1486 = vadd.f32 %v1365, %v1481
    %v1487 = vadd.f32 %v1366, %v1483
    %v1488 = vtanh.pop %v1486
    %v1489 = vtanh.pop %v1487
    %v1490 = vsub.f32 %v1363, %v1488
    %v1491 = vsub.f32 %v1364, %v1489
    %1494 = vrot.lane.b32.xlu0 %v1490, 96
    %v1495 = vpop.permute.xlu0 %1494
    %1496 = vrot.lane.b32.xlu0 %v1491, 96
    %v1497 = vpop.permute.xlu0 %1496
    %v1500 = vmul.f32 %v1463, %v1495
    %v1501 = vmul.f32 %v1465, %v1497
    %1504 = vrot.lane.b32.xlu0 %v1500, 32
    %v1505 = vpop.permute.xlu0 %1504
    %1506 = vrot.lane.b32.xlu0 %v1501, 32
    %v1507 = vpop.permute.xlu0 %1506
    %v1510 = vadd.f32 %v1488, %v1505
    %v1511 = vadd.f32 %v1489, %v1507
    %v1512 = vld [vmem:[%s0 + $0xa0] sm:$0xff]
    %v1513 = vld [vmem:[%s0 + $0xa8] sm:$0xff]
    %1516 = vrot.lane.b32.xlu0 %v1510, 64
    %v1517 = vpop.permute.xlu0 %1516
    %1518 = vrot.lane.b32.xlu0 %v1511, 64
    %v1519 = vpop.permute.xlu0 %1518
    %v1520 = vsel %vm32, %v1517, 0
    %v1522 = vsel %vm32, %v1519, 0
    %1524 = vmatprep.subr.mxu0 0.0
    %1525 = vmatpush1.msra.mxu0 0.0
    %1526 = vmatprep.subr.mxu0 0.0
    %1527 = vmatpush1.msra.mxu0 0.0
    %1528 = vmatprep.subr.mxu0 0.0
    %1529 = vmatpush1.msra.mxu0 0.0
    %1530 = vmatprep.subr.mxu0 0.0
    %1531 = vmatpush1.msra.mxu0 0.0
    %1532 = vmatprep.subr.mxu0 0.0
    %1533 = vmatpush1.msra.mxu0 0.0
    %1534 = vmatprep.subr.mxu0 0.0
    %1535 = vmatpush1.msra.mxu0 0.0
    %1536 = vmatprep.subr.mxu0 0.0
    %1537 = vmatpush1.msra.mxu0 0.0
    %1538 = vmatprep.subr.mxu0 0.0
    %1539 = vmatpush1.msra.mxu0 0.0
    %1540 = vmatprep.subr.mxu0 0.0
    %1541 = vmatpush1.msra.mxu0 0.0
    %1542 = vmatprep.subr.mxu0 0.0
    %1543 = vmatpush1.msra.mxu0 0.0
    %1544 = vmatprep.subr.mxu0 0.0
    %1545 = vmatpush1.msra.mxu0 0.0
    %1546 = vmatprep.subr.mxu0 0.0
    %1547 = vmatpush1.msra.mxu0 0.0
    %1548 = vmatprep.subr.mxu0 0.0
    %1549 = vmatpush1.msra.mxu0 %v21
    %1550 = vmatprep.subr.mxu0 0.0
    %1551 = vmatpush1.msra.mxu0 %v20
    %1552 = vmatprep.subr.mxu0 0.0
    %1553 = vmatpush1.msra.mxu0 %v19
    %1554 = vmatprep.subr.mxu0 0.0
    %1555 = vmatpush1.msra.mxu0 %v18
    %1556 = vmatprep.subr.mxu0 0.0
    %1557 = vmatpush2.msra.mxu0 0.0
    %1558 = vmatprep.subr.mxu0 0.0
    %1559 = vmatpush2.msra.mxu0 0.0
    %1560 = vmatprep.subr.mxu0 0.0
    %1561 = vmatpush2.msra.mxu0 0.0
    %1562 = vmatprep.subr.mxu0 0.0
    %1563 = vmatpush2.msra.mxu0 0.0
    %1564 = vmatprep.subr.mxu0 0.0
    %1565 = vmatpush2.msra.mxu0 0.0
    %1566 = vmatprep.subr.mxu0 0.0
    %1567 = vmatpush2.msra.mxu0 0.0
    %1568 = vmatprep.subr.mxu0 0.0
    %1569 = vmatpush2.msra.mxu0 0.0
    %1570 = vmatprep.subr.mxu0 0.0
    %1571 = vmatpush2.msra.mxu0 0.0
    %1572 = vmatprep.subr.mxu0 0.0
    %1573 = vmatpush2.msra.mxu0 0.0
    %1574 = vmatprep.subr.mxu0 0.0
    %1575 = vmatpush2.msra.mxu0 0.0
    %1576 = vmatprep.subr.mxu0 0.0
    %1577 = vmatpush2.msra.mxu0 0.0
    %1578 = vmatprep.subr.mxu0 0.0
    %1579 = vmatpush2.msra.mxu0 0.0
    %1580 = vmatprep.subr.mxu0 0.0
    %1581 = vmatpush2.msra.mxu0 0.0
    %1582 = vmatprep.subr.mxu0 0.0
    %1583 = vmatpush2.msra.mxu0 0.0
    %1584 = vmatprep.subr.mxu0 0.0
    %1585 = vmatpush2.msra.mxu0 0.0
    %1586 = vmatprep.subr.mxu0 0.0
    %1587 = vmatpush2.msra.mxu0 0.0
    %1588 = vmatprep.mubr.f32.mxu0 0.0
    %1589 = vmatmul.mubr.f32.gmra.mxu0 %v1520
    %v1590 = vpop.f32.mrf.mxu0
    %v1591 = vadd.f32 0.0, %v1590
    %v1592 = vpop.f32.mrf.mxu0
    %1593 = vmatprep.mubr.f32.mxu0 0.0
    %1594 = vmatmul.mubr.f32.gmra.mxu0 %v1522
    %v1595 = vpop.f32.mrf.mxu0
    %v1596 = vadd.f32 0.0, %v1595
    %v1597 = vpop.f32.mrf.mxu0
    %1598 = vdwg.mxu0
    %v1599 = vadd.f32 %v1512, %v1591
    %v1600 = vadd.f32 %v1513, %v1596
    %v1601 = vxor.u32 %v1599, 2147483648
    %v1602 = vxor.u32 %v1600, 2147483648
    %v1603 = vmul.f32 %v1601, 1.442695
    %v1604 = vpow.pop %v1603
    %v1605 = vmul.f32 %v1602, 1.442695
    %v1606 = vpow.pop %v1605
    %v1607 = vadd.f32 %v1604, 1.0
    %v1608 = vadd.f32 %v1606, 1.0
    %v1609 = vrcp.pop %v1607
    %v1610 = vmul.f32 1.0, %v1609
    %v1611 = vrcp.pop %v1608
    %v1612 = vmul.f32 1.0, %v1611
    %v1613 = vadd.f32 %v1591, %v129
    %v1614 = vadd.f32 %v1596, %v129
    %1617 = vrot.lane.b32.xlu0 %v1613, 64
    %v1618 = vpop.permute.xlu0 %1617
    %1619 = vrot.lane.b32.xlu0 %v1614, 64
    %v1620 = vpop.permute.xlu0 %1619
    %v1623 = vmul.f32 %v1610, %v1618
    %v1624 = vmul.f32 %v1612, %v1620
    %1627 = vrot.lane.b32.xlu0 %v1623, 64
    %v1628 = vpop.permute.xlu0 %1627
    %1629 = vrot.lane.b32.xlu0 %v1624, 64
    %v1630 = vpop.permute.xlu0 %1629
    %v1633 = vadd.f32 %v1512, %v1628
    %v1634 = vadd.f32 %v1513, %v1630
    %v1635 = vtanh.pop %v1633
    %v1636 = vtanh.pop %v1634
    %v1637 = vsub.f32 %v1510, %v1635
    %v1638 = vsub.f32 %v1511, %v1636
    %1641 = vrot.lane.b32.xlu0 %v1637, 96
    %v1642 = vpop.permute.xlu0 %1641
    %1643 = vrot.lane.b32.xlu0 %v1638, 96
    %v1644 = vpop.permute.xlu0 %1643
    %v1647 = vmul.f32 %v1610, %v1642
    %v1648 = vmul.f32 %v1612, %v1644
    %1651 = vrot.lane.b32.xlu0 %v1647, 32
    %v1652 = vpop.permute.xlu0 %1651
    %1653 = vrot.lane.b32.xlu0 %v1648, 32
    %v1654 = vpop.permute.xlu0 %1653
    %v1657 = vadd.f32 %v1635, %v1652
    %v1658 = vadd.f32 %v1636, %v1654
    %v1659 = vld [vmem:[%s0 + $0xb0] sm:$0xff]
    %v1660 = vld [vmem:[%s0 + $0xb8] sm:$0xff]
    %1663 = vrot.lane.b32.xlu0 %v1657, 64
    %v1664 = vpop.permute.xlu0 %1663
    %1665 = vrot.lane.b32.xlu0 %v1658, 64
    %v1666 = vpop.permute.xlu0 %1665
    %v1667 = vsel %vm32, %v1664, 0
    %v1669 = vsel %vm32, %v1666, 0
    %1671 = vmatprep.subr.mxu0 0.0
    %1672 = vmatpush1.msra.mxu0 0.0
    %1673 = vmatprep.subr.mxu0 0.0
    %1674 = vmatpush1.msra.mxu0 0.0
    %1675 = vmatprep.subr.mxu0 0.0
    %1676 = vmatpush1.msra.mxu0 0.0
    %1677 = vmatprep.subr.mxu0 0.0
    %1678 = vmatpush1.msra.mxu0 0.0
    %1679 = vmatprep.subr.mxu0 0.0
    %1680 = vmatpush1.msra.mxu0 0.0
    %1681 = vmatprep.subr.mxu0 0.0
    %1682 = vmatpush1.msra.mxu0 0.0
    %1683 = vmatprep.subr.mxu0 0.0
    %1684 = vmatpush1.msra.mxu0 0.0
    %1685 = vmatprep.subr.mxu0 0.0
    %1686 = vmatpush1.msra.mxu0 0.0
    %1687 = vmatprep.subr.mxu0 0.0
    %1688 = vmatpush1.msra.mxu0 0.0
    %1689 = vmatprep.subr.mxu0 0.0
    %1690 = vmatpush1.msra.mxu0 0.0
    %1691 = vmatprep.subr.mxu0 0.0
    %1692 = vmatpush1.msra.mxu0 0.0
    %1693 = vmatprep.subr.mxu0 0.0
    %1694 = vmatpush1.msra.mxu0 0.0
    %1695 = vmatprep.subr.mxu0 0.0
    %1696 = vmatpush1.msra.mxu0 %v21
    %1697 = vmatprep.subr.mxu0 0.0
    %1698 = vmatpush1.msra.mxu0 %v20
    %1699 = vmatprep.subr.mxu0 0.0
    %1700 = vmatpush1.msra.mxu0 %v19
    %1701 = vmatprep.subr.mxu0 0.0
    %1702 = vmatpush1.msra.mxu0 %v18
    %1703 = vmatprep.subr.mxu0 0.0
    %1704 = vmatpush2.msra.mxu0 0.0
    %1705 = vmatprep.subr.mxu0 0.0
    %1706 = vmatpush2.msra.mxu0 0.0
    %1707 = vmatprep.subr.mxu0 0.0
    %1708 = vmatpush2.msra.mxu0 0.0
    %1709 = vmatprep.subr.mxu0 0.0
    %1710 = vmatpush2.msra.mxu0 0.0
    %1711 = vmatprep.subr.mxu0 0.0
    %1712 = vmatpush2.msra.mxu0 0.0
    %1713 = vmatprep.subr.mxu0 0.0
    %1714 = vmatpush2.msra.mxu0 0.0
    %1715 = vmatprep.subr.mxu0 0.0
    %1716 = vmatpush2.msra.mxu0 0.0
    %1717 = vmatprep.subr.mxu0 0.0
    %1718 = vmatpush2.msra.mxu0 0.0
    %1719 = vmatprep.subr.mxu0 0.0
    %1720 = vmatpush2.msra.mxu0 0.0
    %1721 = vmatprep.subr.mxu0 0.0
    %1722 = vmatpush2.msra.mxu0 0.0
    %1723 = vmatprep.subr.mxu0 0.0
    %1724 = vmatpush2.msra.mxu0 0.0
    %1725 = vmatprep.subr.mxu0 0.0
    %1726 = vmatpush2.msra.mxu0 0.0
    %1727 = vmatprep.subr.mxu0 0.0
    %1728 = vmatpush2.msra.mxu0 0.0
    %1729 = vmatprep.subr.mxu0 0.0
    %1730 = vmatpush2.msra.mxu0 0.0
    %1731 = vmatprep.subr.mxu0 0.0
    %1732 = vmatpush2.msra.mxu0 0.0
    %1733 = vmatprep.subr.mxu0 0.0
    %1734 = vmatpush2.msra.mxu0 0.0
    %1735 = vmatprep.mubr.f32.mxu0 0.0
    %1736 = vmatmul.mubr.f32.gmra.mxu0 %v1667
    %v1737 = vpop.f32.mrf.mxu0
    %v1738 = vadd.f32 0.0, %v1737
    %v1739 = vpop.f32.mrf.mxu0
    %1740 = vmatprep.mubr.f32.mxu0 0.0
    %1741 = vmatmul.mubr.f32.gmra.mxu0 %v1669
    %v1742 = vpop.f32.mrf.mxu0
    %v1743 = vadd.f32 0.0, %v1742
    %v1744 = vpop.f32.mrf.mxu0
    %1745 = vdwg.mxu0
    %v1746 = vadd.f32 %v1659, %v1738
    %v1747 = vadd.f32 %v1660, %v1743
    %v1748 = vxor.u32 %v1746, 2147483648
    %v1749 = vxor.u32 %v1747, 2147483648
    %v1750 = vmul.f32 %v1748, 1.442695
    %v1751 = vpow.pop %v1750
    %v1752 = vmul.f32 %v1749, 1.442695
    %v1753 = vpow.pop %v1752
    %v1754 = vadd.f32 %v1751, 1.0
    %v1755 = vadd.f32 %v1753, 1.0
    %v1756 = vrcp.pop %v1754
    %v1757 = vmul.f32 1.0, %v1756
    %v1758 = vrcp.pop %v1755
    %v1759 = vmul.f32 1.0, %v1758
    %v1760 = vadd.f32 %v1738, %v129
    %v1761 = vadd.f32 %v1743, %v129
    %1764 = vrot.lane.b32.xlu0 %v1760, 64
    %v1765 = vpop.permute.xlu0 %1764
    %1766 = vrot.lane.b32.xlu0 %v1761, 64
    %v1767 = vpop.permute.xlu0 %1766
    %v1770 = vmul.f32 %v1757, %v1765
    %v1771 = vmul.f32 %v1759, %v1767
    %1774 = vrot.lane.b32.xlu0 %v1770, 64
    %v1775 = vpop.permute.xlu0 %1774
    %1776 = vrot.lane.b32.xlu0 %v1771, 64
    %v1777 = vpop.permute.xlu0 %1776
    %v1780 = vadd.f32 %v1659, %v1775
    %v1781 = vadd.f32 %v1660, %v1777
    %v1782 = vtanh.pop %v1780
    %v1783 = vtanh.pop %v1781
    %v1784 = vsub.f32 %v1657, %v1782
    %v1785 = vsub.f32 %v1658, %v1783
    %1788 = vrot.lane.b32.xlu0 %v1784, 96
    %v1789 = vpop.permute.xlu0 %1788
    %1790 = vrot.lane.b32.xlu0 %v1785, 96
    %v1791 = vpop.permute.xlu0 %1790
    %v1794 = vmul.f32 %v1757, %v1789
    %v1795 = vmul.f32 %v1759, %v1791
    %1798 = vrot.lane.b32.xlu0 %v1794, 32
    %v1799 = vpop.permute.xlu0 %1798
    %1800 = vrot.lane.b32.xlu0 %v1795, 32
    %v1801 = vpop.permute.xlu0 %1800
    %v1804 = vadd.f32 %v1782, %v1799
    %v1805 = vadd.f32 %v1783, %v1801
    %v1806 = vld [vmem:[%s0 + $0xc0] sm:$0xff]
    %v1807 = vld [vmem:[%s0 + $0xc8] sm:$0xff]
    %1810 = vrot.lane.b32.xlu0 %v1804, 64
    %v1811 = vpop.permute.xlu0 %1810
    %1812 = vrot.lane.b32.xlu0 %v1805, 64
    %v1813 = vpop.permute.xlu0 %1812
    %v1814 = vsel %vm32, %v1811, 0
    %v1816 = vsel %vm32, %v1813, 0
    %1818 = vmatprep.subr.mxu0 0.0
    %1819 = vmatpush1.msra.mxu0 0.0
    %1820 = vmatprep.subr.mxu0 0.0
    %1821 = vmatpush1.msra.mxu0 0.0
    %1822 = vmatprep.subr.mxu0 0.0
    %1823 = vmatpush1.msra.mxu0 0.0
    %1824 = vmatprep.subr.mxu0 0.0
    %1825 = vmatpush1.msra.mxu0 0.0
    %1826 = vmatprep.subr.mxu0 0.0
    %1827 = vmatpush1.msra.mxu0 0.0
    %1828 = vmatprep.subr.mxu0 0.0
    %1829 = vmatpush1.msra.mxu0 0.0
    %1830 = vmatprep.subr.mxu0 0.0
    %1831 = vmatpush1.msra.mxu0 0.0
    %1832 = vmatprep.subr.mxu0 0.0
    %1833 = vmatpush1.msra.mxu0 0.0
    %1834 = vmatprep.subr.mxu0 0.0
    %1835 = vmatpush1.msra.mxu0 0.0
    %1836 = vmatprep.subr.mxu0 0.0
    %1837 = vmatpush1.msra.mxu0 0.0
    %1838 = vmatprep.subr.mxu0 0.0
    %1839 = vmatpush1.msra.mxu0 0.0
    %1840 = vmatprep.subr.mxu0 0.0
    %1841 = vmatpush1.msra.mxu0 0.0
    %1842 = vmatprep.subr.mxu0 0.0
    %1843 = vmatpush1.msra.mxu0 %v21
    %1844 = vmatprep.subr.mxu0 0.0
    %1845 = vmatpush1.msra.mxu0 %v20
    %1846 = vmatprep.subr.mxu0 0.0
    %1847 = vmatpush1.msra.mxu0 %v19
    %1848 = vmatprep.subr.mxu0 0.0
    %1849 = vmatpush1.msra.mxu0 %v18
    %1850 = vmatprep.subr.mxu0 0.0
    %1851 = vmatpush2.msra.mxu0 0.0
    %1852 = vmatprep.subr.mxu0 0.0
    %1853 = vmatpush2.msra.mxu0 0.0
    %1854 = vmatprep.subr.mxu0 0.0
    %1855 = vmatpush2.msra.mxu0 0.0
    %1856 = vmatprep.subr.mxu0 0.0
    %1857 = vmatpush2.msra.mxu0 0.0
    %1858 = vmatprep.subr.mxu0 0.0
    %1859 = vmatpush2.msra.mxu0 0.0
    %1860 = vmatprep.subr.mxu0 0.0
    %1861 = vmatpush2.msra.mxu0 0.0
    %1862 = vmatprep.subr.mxu0 0.0
    %1863 = vmatpush2.msra.mxu0 0.0
    %1864 = vmatprep.subr.mxu0 0.0
    %1865 = vmatpush2.msra.mxu0 0.0
    %1866 = vmatprep.subr.mxu0 0.0
    %1867 = vmatpush2.msra.mxu0 0.0
    %1868 = vmatprep.subr.mxu0 0.0
    %1869 = vmatpush2.msra.mxu0 0.0
    %1870 = vmatprep.subr.mxu0 0.0
    %1871 = vmatpush2.msra.mxu0 0.0
    %1872 = vmatprep.subr.mxu0 0.0
    %1873 = vmatpush2.msra.mxu0 0.0
    %1874 = vmatprep.subr.mxu0 0.0
    %1875 = vmatpush2.msra.mxu0 0.0
    %1876 = vmatprep.subr.mxu0 0.0
    %1877 = vmatpush2.msra.mxu0 0.0
    %1878 = vmatprep.subr.mxu0 0.0
    %1879 = vmatpush2.msra.mxu0 0.0
    %1880 = vmatprep.subr.mxu0 0.0
    %1881 = vmatpush2.msra.mxu0 0.0
    %1882 = vmatprep.mubr.f32.mxu0 0.0
    %1883 = vmatmul.mubr.f32.gmra.mxu0 %v1814
    %v1884 = vpop.f32.mrf.mxu0
    %v1885 = vadd.f32 0.0, %v1884
    %v1886 = vpop.f32.mrf.mxu0
    %1887 = vmatprep.mubr.f32.mxu0 0.0
    %1888 = vmatmul.mubr.f32.gmra.mxu0 %v1816
    %v1889 = vpop.f32.mrf.mxu0
    %v1890 = vadd.f32 0.0, %v1889
    %v1891 = vpop.f32.mrf.mxu0
    %1892 = vdwg.mxu0
    %v1893 = vadd.f32 %v1806, %v1885
    %v1894 = vadd.f32 %v1807, %v1890
    %v1895 = vxor.u32 %v1893, 2147483648
    %v1896 = vxor.u32 %v1894, 2147483648
    %v1897 = vmul.f32 %v1895, 1.442695
    %v1898 = vpow.pop %v1897
    %v1899 = vmul.f32 %v1896, 1.442695
    %v1900 = vpow.pop %v1899
    %v1901 = vadd.f32 %v1898, 1.0
    %v1902 = vadd.f32 %v1900, 1.0
    %v1903 = vrcp.pop %v1901
    %v1904 = vmul.f32 1.0, %v1903
    %v1905 = vrcp.pop %v1902
    %v1906 = vmul.f32 1.0, %v1905
    %v1907 = vadd.f32 %v1885, %v129
    %v1908 = vadd.f32 %v1890, %v129
    %1911 = vrot.lane.b32.xlu0 %v1907, 64
    %v1912 = vpop.permute.xlu0 %1911
    %1913 = vrot.lane.b32.xlu0 %v1908, 64
    %v1914 = vpop.permute.xlu0 %1913
    %v1917 = vmul.f32 %v1904, %v1912
    %v1918 = vmul.f32 %v1906, %v1914
    %1921 = vrot.lane.b32.xlu0 %v1917, 64
    %v1922 = vpop.permute.xlu0 %1921
    %1923 = vrot.lane.b32.xlu0 %v1918, 64
    %v1924 = vpop.permute.xlu0 %1923
    %v1927 = vadd.f32 %v1806, %v1922
    %v1928 = vadd.f32 %v1807, %v1924
    %v1929 = vtanh.pop %v1927
    %v1930 = vtanh.pop %v1928
    %v1931 = vsub.f32 %v1804, %v1929
    %v1932 = vsub.f32 %v1805, %v1930
    %1935 = vrot.lane.b32.xlu0 %v1931, 96
    %v1936 = vpop.permute.xlu0 %1935
    %1937 = vrot.lane.b32.xlu0 %v1932, 96
    %v1938 = vpop.permute.xlu0 %1937
    %v1941 = vmul.f32 %v1904, %v1936
    %v1942 = vmul.f32 %v1906, %v1938
    %1945 = vrot.lane.b32.xlu0 %v1941, 32
    %v1946 = vpop.permute.xlu0 %1945
    %1947 = vrot.lane.b32.xlu0 %v1942, 32
    %v1948 = vpop.permute.xlu0 %1947
    %v1951 = vadd.f32 %v1929, %v1946
    %v1952 = vadd.f32 %v1930, %v1948
    %v1953 = vld [vmem:[%s0 + $0xd0] sm:$0xff]
    %v1954 = vld [vmem:[%s0 + $0xd8] sm:$0xff]
    %1957 = vrot.lane.b32.xlu0 %v1951, 64
    %v1958 = vpop.permute.xlu0 %1957
    %1959 = vrot.lane.b32.xlu0 %v1952, 64
    %v1960 = vpop.permute.xlu0 %1959
    %v1961 = vsel %vm32, %v1958, 0
    %v1963 = vsel %vm32, %v1960, 0
    %1965 = vmatprep.subr.mxu0 0.0
    %1966 = vmatpush1.msra.mxu0 0.0
    %1967 = vmatprep.subr.mxu0 0.0
    %1968 = vmatpush1.msra.mxu0 0.0
    %1969 = vmatprep.subr.mxu0 0.0
    %1970 = vmatpush1.msra.mxu0 0.0
    %1971 = vmatprep.subr.mxu0 0.0
    %1972 = vmatpush1.msra.mxu0 0.0
    %1973 = vmatprep.subr.mxu0 0.0
    %1974 = vmatpush1.msra.mxu0 0.0
    %1975 = vmatprep.subr.mxu0 0.0
    %1976 = vmatpush1.msra.mxu0 0.0
    %1977 = vmatprep.subr.mxu0 0.0
    %1978 = vmatpush1.msra.mxu0 0.0
    %1979 = vmatprep.subr.mxu0 0.0
    %1980 = vmatpush1.msra.mxu0 0.0
    %1981 = vmatprep.subr.mxu0 0.0
    %1982 = vmatpush1.msra.mxu0 0.0
    %1983 = vmatprep.subr.mxu0 0.0
    %1984 = vmatpush1.msra.mxu0 0.0
    %1985 = vmatprep.subr.mxu0 0.0
    %1986 = vmatpush1.msra.mxu0 0.0
    %1987 = vmatprep.subr.mxu0 0.0
    %1988 = vmatpush1.msra.mxu0 0.0
    %1989 = vmatprep.subr.mxu0 0.0
    %1990 = vmatpush1.msra.mxu0 %v21
    %1991 = vmatprep.subr.mxu0 0.0
    %1992 = vmatpush1.msra.mxu0 %v20
    %1993 = vmatprep.subr.mxu0 0.0
    %1994 = vmatpush1.msra.mxu0 %v19
    %1995 = vmatprep.subr.mxu0 0.0
    %1996 = vmatpush1.msra.mxu0 %v18
    %1997 = vmatprep.subr.mxu0 0.0
    %1998 = vmatpush2.msra.mxu0 0.0
    %1999 = vmatprep.subr.mxu0 0.0
    %2000 = vmatpush2.msra.mxu0 0.0
    %2001 = vmatprep.subr.mxu0 0.0
    %2002 = vmatpush2.msra.mxu0 0.0
    %2003 = vmatprep.subr.mxu0 0.0
    %2004 = vmatpush2.msra.mxu0 0.0
    %2005 = vmatprep.subr.mxu0 0.0
    %2006 = vmatpush2.msra.mxu0 0.0
    %2007 = vmatprep.subr.mxu0 0.0
    %2008 = vmatpush2.msra.mxu0 0.0
    %2009 = vmatprep.subr.mxu0 0.0
    %2010 = vmatpush2.msra.mxu0 0.0
    %2011 = vmatprep.subr.mxu0 0.0
    %2012 = vmatpush2.msra.mxu0 0.0
    %2013 = vmatprep.subr.mxu0 0.0
    %2014 = vmatpush2.msra.mxu0 0.0
    %2015 = vmatprep.subr.mxu0 0.0
    %2016 = vmatpush2.msra.mxu0 0.0
    %2017 = vmatprep.subr.mxu0 0.0
    %2018 = vmatpush2.msra.mxu0 0.0
    %2019 = vmatprep.subr.mxu0 0.0
    %2020 = vmatpush2.msra.mxu0 0.0
    %2021 = vmatprep.subr.mxu0 0.0
    %2022 = vmatpush2.msra.mxu0 0.0
    %2023 = vmatprep.subr.mxu0 0.0
    %2024 = vmatpush2.msra.mxu0 0.0
    %2025 = vmatprep.subr.mxu0 0.0
    %2026 = vmatpush2.msra.mxu0 0.0
    %2027 = vmatprep.subr.mxu0 0.0
    %2028 = vmatpush2.msra.mxu0 0.0
    %2029 = vmatprep.mubr.f32.mxu0 0.0
    %2030 = vmatmul.mubr.f32.gmra.mxu0 %v1961
    %v2031 = vpop.f32.mrf.mxu0
    %v2032 = vadd.f32 0.0, %v2031
    %v2033 = vpop.f32.mrf.mxu0
    %2034 = vmatprep.mubr.f32.mxu0 0.0
    %2035 = vmatmul.mubr.f32.gmra.mxu0 %v1963
    %v2036 = vpop.f32.mrf.mxu0
    %v2037 = vadd.f32 0.0, %v2036
    %v2038 = vpop.f32.mrf.mxu0
    %2039 = vdwg.mxu0
    %v2040 = vadd.f32 %v1953, %v2032
    %v2041 = vadd.f32 %v1954, %v2037
    %v2042 = vxor.u32 %v2040, 2147483648
    %v2043 = vxor.u32 %v2041, 2147483648
    %v2044 = vmul.f32 %v2042, 1.442695
    %v2045 = vpow.pop %v2044
    %v2046 = vmul.f32 %v2043, 1.442695
    %v2047 = vpow.pop %v2046
    %v2048 = vadd.f32 %v2045, 1.0
    %v2049 = vadd.f32 %v2047, 1.0
    %v2050 = vrcp.pop %v2048
    %v2051 = vmul.f32 1.0, %v2050
    %v2052 = vrcp.pop %v2049
    %v2053 = vmul.f32 1.0, %v2052
    %v2054 = vadd.f32 %v2032, %v129
    %v2055 = vadd.f32 %v2037, %v129
    %2058 = vrot.lane.b32.xlu0 %v2054, 64
    %v2059 = vpop.permute.xlu0 %2058
    %2060 = vrot.lane.b32.xlu0 %v2055, 64
    %v2061 = vpop.permute.xlu0 %2060
    %v2064 = vmul.f32 %v2051, %v2059
    %v2065 = vmul.f32 %v2053, %v2061
    %2068 = vrot.lane.b32.xlu0 %v2064, 64
    %v2069 = vpop.permute.xlu0 %2068
    %2070 = vrot.lane.b32.xlu0 %v2065, 64
    %v2071 = vpop.permute.xlu0 %2070
    %v2074 = vadd.f32 %v1953, %v2069
    %v2075 = vadd.f32 %v1954, %v2071
    %v2076 = vtanh.pop %v2074
    %v2077 = vtanh.pop %v2075
    %v2078 = vsub.f32 %v1951, %v2076
    %v2079 = vsub.f32 %v1952, %v2077
    %2082 = vrot.lane.b32.xlu0 %v2078, 96
    %v2083 = vpop.permute.xlu0 %2082
    %2084 = vrot.lane.b32.xlu0 %v2079, 96
    %v2085 = vpop.permute.xlu0 %2084
    %v2088 = vmul.f32 %v2051, %v2083
    %v2089 = vmul.f32 %v2053, %v2085
    %2092 = vrot.lane.b32.xlu0 %v2088, 32
    %v2093 = vpop.permute.xlu0 %2092
    %2094 = vrot.lane.b32.xlu0 %v2089, 32
    %v2095 = vpop.permute.xlu0 %2094
    %v2098 = vadd.f32 %v2076, %v2093
    %v2099 = vadd.f32 %v2077, %v2095
    %2102 = vrot.lane.b32.xlu0 %v2098, 64
    %v2103 = vpop.permute.xlu0 %2102
    %2104 = vrot.lane.b32.xlu0 %v2099, 64
    %v2105 = vpop.permute.xlu0 %2104
    %s2108 = scalar_lea.vmem [#allocation2], 16
    %2109 = vst.msk [vmem:[%s2108] sm:$0xff] %vm32, %v2103
    %2110 = vst.msk [vmem:[%s2108 + $0x8] sm:$0xff] %vm32, %v2105
    %v2111 = vld [vmem:[%s0 + $0xe0] sm:$0xff]
    %v2112 = vld [vmem:[%s0 + $0xe8] sm:$0xff]
    %v2113 = vsel %vm32, %v2103, 0
    %v2115 = vsel %vm32, %v2105, 0
    %2117 = vmatprep.subr.mxu0 0.0
    %2118 = vmatpush1.msra.mxu0 0.0
    %2119 = vmatprep.subr.mxu0 0.0
    %2120 = vmatpush1.msra.mxu0 0.0
    %2121 = vmatprep.subr.mxu0 0.0
    %2122 = vmatpush1.msra.mxu0 0.0
    %2123 = vmatprep.subr.mxu0 0.0
    %2124 = vmatpush1.msra.mxu0 0.0
    %2125 = vmatprep.subr.mxu0 0.0
    %2126 = vmatpush1.msra.mxu0 0.0
    %2127 = vmatprep.subr.mxu0 0.0
    %2128 = vmatpush1.msra.mxu0 0.0
    %2129 = vmatprep.subr.mxu0 0.0
    %2130 = vmatpush1.msra.mxu0 0.0
    %2131 = vmatprep.subr.mxu0 0.0
    %2132 = vmatpush1.msra.mxu0 0.0
    %2133 = vmatprep.subr.mxu0 0.0
    %2134 = vmatpush1.msra.mxu0 0.0
    %2135 = vmatprep.subr.mxu0 0.0
    %2136 = vmatpush1.msra.mxu0 0.0
    %2137 = vmatprep.subr.mxu0 0.0
    %2138 = vmatpush1.msra.mxu0 0.0
    %2139 = vmatprep.subr.mxu0 0.0
    %2140 = vmatpush1.msra.mxu0 0.0
    %2141 = vmatprep.subr.mxu0 0.0
    %2142 = vmatpush1.msra.mxu0 %v21
    %2143 = vmatprep.subr.mxu0 0.0
    %2144 = vmatpush1.msra.mxu0 %v20
    %2145 = vmatprep.subr.mxu0 0.0
    %2146 = vmatpush1.msra.mxu0 %v19
    %2147 = vmatprep.subr.mxu0 0.0
    %2148 = vmatpush1.msra.mxu0 %v18
    %2149 = vmatprep.subr.mxu0 0.0
    %2150 = vmatpush2.msra.mxu0 0.0
    %2151 = vmatprep.subr.mxu0 0.0
    %2152 = vmatpush2.msra.mxu0 0.0
    %2153 = vmatprep.subr.mxu0 0.0
    %2154 = vmatpush2.msra.mxu0 0.0
    %2155 = vmatprep.subr.mxu0 0.0
    %2156 = vmatpush2.msra.mxu0 0.0
    %2157 = vmatprep.subr.mxu0 0.0
    %2158 = vmatpush2.msra.mxu0 0.0
    %2159 = vmatprep.subr.mxu0 0.0
    %2160 = vmatpush2.msra.mxu0 0.0
    %2161 = vmatprep.subr.mxu0 0.0
    %2162 = vmatpush2.msra.mxu0 0.0
    %2163 = vmatprep.subr.mxu0 0.0
    %2164 = vmatpush2.msra.mxu0 0.0
    %2165 = vmatprep.subr.mxu0 0.0
    %2166 = vmatpush2.msra.mxu0 0.0
    %2167 = vmatprep.subr.mxu0 0.0
    %2168 = vmatpush2.msra.mxu0 0.0
    %2169 = vmatprep.subr.mxu0 0.0
    %2170 = vmatpush2.msra.mxu0 0.0
    %2171 = vmatprep.subr.mxu0 0.0
    %2172 = vmatpush2.msra.mxu0 0.0
    %2173 = vmatprep.subr.mxu0 0.0
    %2174 = vmatpush2.msra.mxu0 0.0
    %2175 = vmatprep.subr.mxu0 0.0
    %2176 = vmatpush2.msra.mxu0 0.0
    %2177 = vmatprep.subr.mxu0 0.0
    %2178 = vmatpush2.msra.mxu0 0.0
    %2179 = vmatprep.subr.mxu0 0.0
    %2180 = vmatpush2.msra.mxu0 0.0
    %2181 = vmatprep.mubr.f32.mxu0 0.0
    %2182 = vmatmul.mubr.f32.gmra.mxu0 %v2113
    %v2183 = vpop.f32.mrf.mxu0
    %v2184 = vadd.f32 0.0, %v2183
    %v2185 = vpop.f32.mrf.mxu0
    %2186 = vmatprep.mubr.f32.mxu0 0.0
    %2187 = vmatmul.mubr.f32.gmra.mxu0 %v2115
    %v2188 = vpop.f32.mrf.mxu0
    %v2189 = vadd.f32 0.0, %v2188
    %v2190 = vpop.f32.mrf.mxu0
    %2191 = vdwg.mxu0
    %v2192 = vadd.f32 %v2111, %v2184
    %v2193 = vadd.f32 %v2112, %v2189
    %v2194 = vxor.u32 %v2192, 2147483648
    %v2195 = vxor.u32 %v2193, 2147483648
    %v2196 = vmul.f32 %v2194, 1.442695
    %v2197 = vpow.pop %v2196
    %v2198 = vmul.f32 %v2195, 1.442695
    %v2199 = vpow.pop %v2198
    %v2200 = vadd.f32 %v2197, 1.0
    %v2201 = vadd.f32 %v2199, 1.0
    %v2202 = vrcp.pop %v2200
    %v2203 = vmul.f32 1.0, %v2202
    %v2204 = vrcp.pop %v2201
    %v2205 = vmul.f32 1.0, %v2204
    %v2206 = vadd.f32 %v2184, %v129
    %v2207 = vadd.f32 %v2189, %v129
    %2210 = vrot.lane.b32.xlu0 %v2206, 64
    %v2211 = vpop.permute.xlu0 %2210
    %2212 = vrot.lane.b32.xlu0 %v2207, 64
    %v2213 = vpop.permute.xlu0 %2212
    %v2216 = vmul.f32 %v2203, %v2211
    %v2217 = vmul.f32 %v2205, %v2213
    %2220 = vrot.lane.b32.xlu0 %v2216, 64
    %v2221 = vpop.permute.xlu0 %2220
    %2222 = vrot.lane.b32.xlu0 %v2217, 64
    %v2223 = vpop.permute.xlu0 %2222
    %v2226 = vadd.f32 %v2111, %v2221
    %v2227 = vadd.f32 %v2112, %v2223
    %v2228 = vtanh.pop %v2226
    %v2229 = vtanh.pop %v2227
    %v2230 = vsub.f32 %v2098, %v2228
    %v2231 = vsub.f32 %v2099, %v2229
    %2234 = vrot.lane.b32.xlu0 %v2230, 96
    %v2235 = vpop.permute.xlu0 %2234
    %2236 = vrot.lane.b32.xlu0 %v2231, 96
    %v2237 = vpop.permute.xlu0 %2236
    %v2240 = vmul.f32 %v2203, %v2235
    %v2241 = vmul.f32 %v2205, %v2237
    %2244 = vrot.lane.b32.xlu0 %v2240, 32
    %v2245 = vpop.permute.xlu0 %2244
    %2246 = vrot.lane.b32.xlu0 %v2241, 32
    %v2247 = vpop.permute.xlu0 %2246
    %v2250 = vadd.f32 %v2228, %v2245
    %v2251 = vadd.f32 %v2229, %v2247
    %v2252 = vld [vmem:[%s0 + $0xf0] sm:$0xff]
    %v2253 = vld [vmem:[%s0 + $0xf8] sm:$0xff]
    %2256 = vrot.lane.b32.xlu0 %v2250, 64
    %v2257 = vpop.permute.xlu0 %2256
    %2258 = vrot.lane.b32.xlu0 %v2251, 64
    %v2259 = vpop.permute.xlu0 %2258
    %v2260 = vsel %vm32, %v2257, 0
    %v2262 = vsel %vm32, %v2259, 0
    %2264 = vmatprep.subr.mxu0 0.0
    %2265 = vmatpush1.msra.mxu0 0.0
    %2266 = vmatprep.subr.mxu0 0.0
    %2267 = vmatpush1.msra.mxu0 0.0
    %2268 = vmatprep.subr.mxu0 0.0
    %2269 = vmatpush1.msra.mxu0 0.0
    %2270 = vmatprep.subr.mxu0 0.0
    %2271 = vmatpush1.msra.mxu0 0.0
    %2272 = vmatprep.subr.mxu0 0.0
    %2273 = vmatpush1.msra.mxu0 0.0
    %2274 = vmatprep.subr.mxu0 0.0
    %2275 = vmatpush1.msra.mxu0 0.0
    %2276 = vmatprep.subr.mxu0 0.0
    %2277 = vmatpush1.msra.mxu0 0.0
    %2278 = vmatprep.subr.mxu0 0.0
    %2279 = vmatpush1.msra.mxu0 0.0
    %2280 = vmatprep.subr.mxu0 0.0
    %2281 = vmatpush1.msra.mxu0 0.0
    %2282 = vmatprep.subr.mxu0 0.0
    %2283 = vmatpush1.msra.mxu0 0.0
    %2284 = vmatprep.subr.mxu0 0.0
    %2285 = vmatpush1.msra.mxu0 0.0
    %2286 = vmatprep.subr.mxu0 0.0
    %2287 = vmatpush1.msra.mxu0 0.0
    %2288 = vmatprep.subr.mxu0 0.0
    %2289 = vmatpush1.msra.mxu0 %v21
    %2290 = vmatprep.subr.mxu0 0.0
    %2291 = vmatpush1.msra.mxu0 %v20
    %2292 = vmatprep.subr.mxu0 0.0
    %2293 = vmatpush1.msra.mxu0 %v19
    %2294 = vmatprep.subr.mxu0 0.0
    %2295 = vmatpush1.msra.mxu0 %v18
    %2296 = vmatprep.subr.mxu0 0.0
    %2297 = vmatpush2.msra.mxu0 0.0
    %2298 = vmatprep.subr.mxu0 0.0
    %2299 = vmatpush2.msra.mxu0 0.0
    %2300 = vmatprep.subr.mxu0 0.0
    %2301 = vmatpush2.msra.mxu0 0.0
    %2302 = vmatprep.subr.mxu0 0.0
    %2303 = vmatpush2.msra.mxu0 0.0
    %2304 = vmatprep.subr.mxu0 0.0
    %2305 = vmatpush2.msra.mxu0 0.0
    %2306 = vmatprep.subr.mxu0 0.0
    %2307 = vmatpush2.msra.mxu0 0.0
    %2308 = vmatprep.subr.mxu0 0.0
    %2309 = vmatpush2.msra.mxu0 0.0
    %2310 = vmatprep.subr.mxu0 0.0
    %2311 = vmatpush2.msra.mxu0 0.0
    %2312 = vmatprep.subr.mxu0 0.0
    %2313 = vmatpush2.msra.mxu0 0.0
    %2314 = vmatprep.subr.mxu0 0.0
    %2315 = vmatpush2.msra.mxu0 0.0
    %2316 = vmatprep.subr.mxu0 0.0
    %2317 = vmatpush2.msra.mxu0 0.0
    %2318 = vmatprep.subr.mxu0 0.0
    %2319 = vmatpush2.msra.mxu0 0.0
    %2320 = vmatprep.subr.mxu0 0.0
    %2321 = vmatpush2.msra.mxu0 0.0
    %2322 = vmatprep.subr.mxu0 0.0
    %2323 = vmatpush2.msra.mxu0 0.0
    %2324 = vmatprep.subr.mxu0 0.0
    %2325 = vmatpush2.msra.mxu0 0.0
    %2326 = vmatprep.subr.mxu0 0.0
    %2327 = vmatpush2.msra.mxu0 0.0
    %2328 = vmatprep.mubr.f32.mxu0 0.0
    %2329 = vmatmul.mubr.f32.gmra.mxu0 %v2260
    %v2330 = vpop.f32.mrf.mxu0
    %v2331 = vadd.f32 0.0, %v2330
    %v2332 = vpop.f32.mrf.mxu0
    %2333 = vmatprep.mubr.f32.mxu0 0.0
    %2334 = vmatmul.mubr.f32.gmra.mxu0 %v2262
    %v2335 = vpop.f32.mrf.mxu0
    %v2336 = vadd.f32 0.0, %v2335
    %v2337 = vpop.f32.mrf.mxu0
    %2338 = vdwg.mxu0
    %v2339 = vadd.f32 %v2252, %v2331
    %v2340 = vadd.f32 %v2253, %v2336
    %v2341 = vxor.u32 %v2339, 2147483648
    %v2342 = vxor.u32 %v2340, 2147483648
    %v2343 = vmul.f32 %v2341, 1.442695
    %v2344 = vpow.pop %v2343
    %v2345 = vmul.f32 %v2342, 1.442695
    %v2346 = vpow.pop %v2345
    %v2347 = vadd.f32 %v2344, 1.0
    %v2348 = vadd.f32 %v2346, 1.0
    %v2349 = vrcp.pop %v2347
    %v2350 = vmul.f32 1.0, %v2349
    %v2351 = vrcp.pop %v2348
    %v2352 = vmul.f32 1.0, %v2351
    %v2353 = vadd.f32 %v2331, %v129
    %v2354 = vadd.f32 %v2336, %v129
    %2357 = vrot.lane.b32.xlu0 %v2353, 64
    %v2358 = vpop.permute.xlu0 %2357
    %2359 = vrot.lane.b32.xlu0 %v2354, 64
    %v2360 = vpop.permute.xlu0 %2359
    %v2363 = vmul.f32 %v2350, %v2358
    %v2364 = vmul.f32 %v2352, %v2360
    %2367 = vrot.lane.b32.xlu0 %v2363, 64
    %v2368 = vpop.permute.xlu0 %2367
    %2369 = vrot.lane.b32.xlu0 %v2364, 64
    %v2370 = vpop.permute.xlu0 %2369
    %v2373 = vadd.f32 %v2252, %v2368
    %v2374 = vadd.f32 %v2253, %v2370
    %v2375 = vtanh.pop %v2373
    %v2376 = vtanh.pop %v2374
    %v2377 = vsub.f32 %v2250, %v2375
    %v2378 = vsub.f32 %v2251, %v2376
    %2381 = vrot.lane.b32.xlu0 %v2377, 96
    %v2382 = vpop.permute.xlu0 %2381
    %2383 = vrot.lane.b32.xlu0 %v2378, 96
    %v2384 = vpop.permute.xlu0 %2383
    %v2387 = vmul.f32 %v2350, %v2382
    %v2388 = vmul.f32 %v2352, %v2384
    %2391 = vrot.lane.b32.xlu0 %v2387, 32
    %v2392 = vpop.permute.xlu0 %2391
    %2393 = vrot.lane.b32.xlu0 %v2388, 32
    %v2394 = vpop.permute.xlu0 %2393
    %v2397 = vadd.f32 %v2375, %v2392
    %v2398 = vadd.f32 %v2376, %v2394
    %v2399 = vld [vmem:[%s0 + $0x100] sm:$0xff]
    %v2400 = vld [vmem:[%s0 + $0x108] sm:$0xff]
    %2403 = vrot.lane.b32.xlu0 %v2397, 64
    %v2404 = vpop.permute.xlu0 %2403
    %2405 = vrot.lane.b32.xlu0 %v2398, 64
    %v2406 = vpop.permute.xlu0 %2405
    %v2407 = vsel %vm32, %v2404, 0
    %v2409 = vsel %vm32, %v2406, 0
    %2411 = vmatprep.subr.mxu0 0.0
    %2412 = vmatpush1.msra.mxu0 0.0
    %2413 = vmatprep.subr.mxu0 0.0
    %2414 = vmatpush1.msra.mxu0 0.0
    %2415 = vmatprep.subr.mxu0 0.0
    %2416 = vmatpush1.msra.mxu0 0.0
    %2417 = vmatprep.subr.mxu0 0.0
    %2418 = vmatpush1.msra.mxu0 0.0
    %2419 = vmatprep.subr.mxu0 0.0
    %2420 = vmatpush1.msra.mxu0 0.0
    %2421 = vmatprep.subr.mxu0 0.0
    %2422 = vmatpush1.msra.mxu0 0.0
    %2423 = vmatprep.subr.mxu0 0.0
    %2424 = vmatpush1.msra.mxu0 0.0
    %2425 = vmatprep.subr.mxu0 0.0
    %2426 = vmatpush1.msra.mxu0 0.0
    %2427 = vmatprep.subr.mxu0 0.0
    %2428 = vmatpush1.msra.mxu0 0.0
    %2429 = vmatprep.subr.mxu0 0.0
    %2430 = vmatpush1.msra.mxu0 0.0
    %2431 = vmatprep.subr.mxu0 0.0
    %2432 = vmatpush1.msra.mxu0 0.0
    %2433 = vmatprep.subr.mxu0 0.0
    %2434 = vmatpush1.msra.mxu0 0.0
    %2435 = vmatprep.subr.mxu0 0.0
    %2436 = vmatpush1.msra.mxu0 %v21
    %2437 = vmatprep.subr.mxu0 0.0
    %2438 = vmatpush1.msra.mxu0 %v20
    %2439 = vmatprep.subr.mxu0 0.0
    %2440 = vmatpush1.msra.mxu0 %v19
    %2441 = vmatprep.subr.mxu0 0.0
    %2442 = vmatpush1.msra.mxu0 %v18
    %2443 = vmatprep.subr.mxu0 0.0
    %2444 = vmatpush2.msra.mxu0 0.0
    %2445 = vmatprep.subr.mxu0 0.0
    %2446 = vmatpush2.msra.mxu0 0.0
    %2447 = vmatprep.subr.mxu0 0.0
    %2448 = vmatpush2.msra.mxu0 0.0
    %2449 = vmatprep.subr.mxu0 0.0
    %2450 = vmatpush2.msra.mxu0 0.0
    %2451 = vmatprep.subr.mxu0 0.0
    %2452 = vmatpush2.msra.mxu0 0.0
    %2453 = vmatprep.subr.mxu0 0.0
    %2454 = vmatpush2.msra.mxu0 0.0
    %2455 = vmatprep.subr.mxu0 0.0
    %2456 = vmatpush2.msra.mxu0 0.0
    %2457 = vmatprep.subr.mxu0 0.0
    %2458 = vmatpush2.msra.mxu0 0.0
    %2459 = vmatprep.subr.mxu0 0.0
    %2460 = vmatpush2.msra.mxu0 0.0
    %2461 = vmatprep.subr.mxu0 0.0
    %2462 = vmatpush2.msra.mxu0 0.0
    %2463 = vmatprep.subr.mxu0 0.0
    %2464 = vmatpush2.msra.mxu0 0.0
    %2465 = vmatprep.subr.mxu0 0.0
    %2466 = vmatpush2.msra.mxu0 0.0
    %2467 = vmatprep.subr.mxu0 0.0
    %2468 = vmatpush2.msra.mxu0 0.0
    %2469 = vmatprep.subr.mxu0 0.0
    %2470 = vmatpush2.msra.mxu0 0.0
    %2471 = vmatprep.subr.mxu0 0.0
    %2472 = vmatpush2.msra.mxu0 0.0
    %2473 = vmatprep.subr.mxu0 0.0
    %2474 = vmatpush2.msra.mxu0 0.0
    %2475 = vmatprep.mubr.f32.mxu0 0.0
    %2476 = vmatmul.mubr.f32.gmra.mxu0 %v2407
    %v2477 = vpop.f32.mrf.mxu0
    %v2478 = vadd.f32 0.0, %v2477
    %v2479 = vpop.f32.mrf.mxu0
    %2480 = vmatprep.mubr.f32.mxu0 0.0
    %2481 = vmatmul.mubr.f32.gmra.mxu0 %v2409
    %v2482 = vpop.f32.mrf.mxu0
    %v2483 = vadd.f32 0.0, %v2482
    %v2484 = vpop.f32.mrf.mxu0
    %2485 = vdwg.mxu0
    %v2486 = vadd.f32 %v2399, %v2478
    %v2487 = vadd.f32 %v2400, %v2483
    %v2488 = vxor.u32 %v2486, 2147483648
    %v2489 = vxor.u32 %v2487, 2147483648
    %v2490 = vmul.f32 %v2488, 1.442695
    %v2491 = vpow.pop %v2490
    %v2492 = vmul.f32 %v2489, 1.442695
    %v2493 = vpow.pop %v2492
    %v2494 = vadd.f32 %v2491, 1.0
    %v2495 = vadd.f32 %v2493, 1.0
    %v2496 = vrcp.pop %v2494
    %v2497 = vmul.f32 1.0, %v2496
    %v2498 = vrcp.pop %v2495
    %v2499 = vmul.f32 1.0, %v2498
    %v2500 = vadd.f32 %v2478, %v129
    %v2501 = vadd.f32 %v2483, %v129
    %2504 = vrot.lane.b32.xlu0 %v2500, 64
    %v2505 = vpop.permute.xlu0 %2504
    %2506 = vrot.lane.b32.xlu0 %v2501, 64
    %v2507 = vpop.permute.xlu0 %2506
    %v2510 = vmul.f32 %v2497, %v2505
    %v2511 = vmul.f32 %v2499, %v2507
    %2514 = vrot.lane.b32.xlu0 %v2510, 64
    %v2515 = vpop.permute.xlu0 %2514
    %2516 = vrot.lane.b32.xlu0 %v2511, 64
    %v2517 = vpop.permute.xlu0 %2516
    %v2520 = vadd.f32 %v2399, %v2515
    %v2521 = vadd.f32 %v2400, %v2517
    %v2522 = vtanh.pop %v2520
    %v2523 = vtanh.pop %v2521
    %v2524 = vsub.f32 %v2397, %v2522
    %v2525 = vsub.f32 %v2398, %v2523
    %2528 = vrot.lane.b32.xlu0 %v2524, 96
    %v2529 = vpop.permute.xlu0 %2528
    %2530 = vrot.lane.b32.xlu0 %v2525, 96
    %v2531 = vpop.permute.xlu0 %2530
    %v2534 = vmul.f32 %v2497, %v2529
    %v2535 = vmul.f32 %v2499, %v2531
    %2538 = vrot.lane.b32.xlu0 %v2534, 32
    %v2539 = vpop.permute.xlu0 %2538
    %2540 = vrot.lane.b32.xlu0 %v2535, 32
    %v2541 = vpop.permute.xlu0 %2540
    %v2544 = vadd.f32 %v2522, %v2539
    %v2545 = vadd.f32 %v2523, %v2541
    %v2546 = vld [vmem:[%s0 + $0x110] sm:$0xff]
    %v2547 = vld [vmem:[%s0 + $0x118] sm:$0xff]
    %2550 = vrot.lane.b32.xlu0 %v2544, 64
    %v2551 = vpop.permute.xlu0 %2550
    %2552 = vrot.lane.b32.xlu0 %v2545, 64
    %v2553 = vpop.permute.xlu0 %2552
    %v2554 = vsel %vm32, %v2551, 0
    %v2556 = vsel %vm32, %v2553, 0
    %2558 = vmatprep.subr.mxu0 0.0
    %2559 = vmatpush1.msra.mxu0 0.0
    %2560 = vmatprep.subr.mxu0 0.0
    %2561 = vmatpush1.msra.mxu0 0.0
    %2562 = vmatprep.subr.mxu0 0.0
    %2563 = vmatpush1.msra.mxu0 0.0
    %2564 = vmatprep.subr.mxu0 0.0
    %2565 = vmatpush1.msra.mxu0 0.0
    %2566 = vmatprep.subr.mxu0 0.0
    %2567 = vmatpush1.msra.mxu0 0.0
    %2568 = vmatprep.subr.mxu0 0.0
    %2569 = vmatpush1.msra.mxu0 0.0
    %2570 = vmatprep.subr.mxu0 0.0
    %2571 = vmatpush1.msra.mxu0 0.0
    %2572 = vmatprep.subr.mxu0 0.0
    %2573 = vmatpush1.msra.mxu0 0.0
    %2574 = vmatprep.subr.mxu0 0.0
    %2575 = vmatpush1.msra.mxu0 0.0
    %2576 = vmatprep.subr.mxu0 0.0
    %2577 = vmatpush1.msra.mxu0 0.0
    %2578 = vmatprep.subr.mxu0 0.0
    %2579 = vmatpush1.msra.mxu0 0.0
    %2580 = vmatprep.subr.mxu0 0.0
    %2581 = vmatpush1.msra.mxu0 0.0
    %2582 = vmatprep.subr.mxu0 0.0
    %2583 = vmatpush1.msra.mxu0 %v21
    %2584 = vmatprep.subr.mxu0 0.0
    %2585 = vmatpush1.msra.mxu0 %v20
    %2586 = vmatprep.subr.mxu0 0.0
    %2587 = vmatpush1.msra.mxu0 %v19
    %2588 = vmatprep.subr.mxu0 0.0
    %2589 = vmatpush1.msra.mxu0 %v18
    %2590 = vmatprep.subr.mxu0 0.0
    %2591 = vmatpush2.msra.mxu0 0.0
    %2592 = vmatprep.subr.mxu0 0.0
    %2593 = vmatpush2.msra.mxu0 0.0
    %2594 = vmatprep.subr.mxu0 0.0
    %2595 = vmatpush2.msra.mxu0 0.0
    %2596 = vmatprep.subr.mxu0 0.0
    %2597 = vmatpush2.msra.mxu0 0.0
    %2598 = vmatprep.subr.mxu0 0.0
    %2599 = vmatpush2.msra.mxu0 0.0
    %2600 = vmatprep.subr.mxu0 0.0
    %2601 = vmatpush2.msra.mxu0 0.0
    %2602 = vmatprep.subr.mxu0 0.0
    %2603 = vmatpush2.msra.mxu0 0.0
    %2604 = vmatprep.subr.mxu0 0.0
    %2605 = vmatpush2.msra.mxu0 0.0
    %2606 = vmatprep.subr.mxu0 0.0
    %2607 = vmatpush2.msra.mxu0 0.0
    %2608 = vmatprep.subr.mxu0 0.0
    %2609 = vmatpush2.msra.mxu0 0.0
    %2610 = vmatprep.subr.mxu0 0.0
    %2611 = vmatpush2.msra.mxu0 0.0
    %2612 = vmatprep.subr.mxu0 0.0
    %2613 = vmatpush2.msra.mxu0 0.0
    %2614 = vmatprep.subr.mxu0 0.0
    %2615 = vmatpush2.msra.mxu0 0.0
    %2616 = vmatprep.subr.mxu0 0.0
    %2617 = vmatpush2.msra.mxu0 0.0
    %2618 = vmatprep.subr.mxu0 0.0
    %2619 = vmatpush2.msra.mxu0 0.0
    %2620 = vmatprep.subr.mxu0 0.0
    %2621 = vmatpush2.msra.mxu0 0.0
    %2622 = vmatprep.mubr.f32.mxu0 0.0
    %2623 = vmatmul.mubr.f32.gmra.mxu0 %v2554
    %v2624 = vpop.f32.mrf.mxu0
    %v2625 = vadd.f32 0.0, %v2624
    %v2626 = vpop.f32.mrf.mxu0
    %2627 = vmatprep.mubr.f32.mxu0 0.0
    %2628 = vmatmul.mubr.f32.gmra.mxu0 %v2556
    %v2629 = vpop.f32.mrf.mxu0
    %v2630 = vadd.f32 0.0, %v2629
    %v2631 = vpop.f32.mrf.mxu0
    %2632 = vdwg.mxu0
    %v2633 = vadd.f32 %v2546, %v2625
    %v2634 = vadd.f32 %v2547, %v2630
    %v2635 = vxor.u32 %v2633, 2147483648
    %v2636 = vxor.u32 %v2634, 2147483648
    %v2637 = vmul.f32 %v2635, 1.442695
    %v2638 = vpow.pop %v2637
    %v2639 = vmul.f32 %v2636, 1.442695
    %v2640 = vpow.pop %v2639
    %v2641 = vadd.f32 %v2638, 1.0
    %v2642 = vadd.f32 %v2640, 1.0
    %v2643 = vrcp.pop %v2641
    %v2644 = vmul.f32 1.0, %v2643
    %v2645 = vrcp.pop %v2642
    %v2646 = vmul.f32 1.0, %v2645
    %v2647 = vadd.f32 %v2625, %v129
    %v2648 = vadd.f32 %v2630, %v129
    %2651 = vrot.lane.b32.xlu0 %v2647, 64
    %v2652 = vpop.permute.xlu0 %2651
    %2653 = vrot.lane.b32.xlu0 %v2648, 64
    %v2654 = vpop.permute.xlu0 %2653
    %v2657 = vmul.f32 %v2644, %v2652
    %v2658 = vmul.f32 %v2646, %v2654
    %2661 = vrot.lane.b32.xlu0 %v2657, 64
    %v2662 = vpop.permute.xlu0 %2661
    %2663 = vrot.lane.b32.xlu0 %v2658, 64
    %v2664 = vpop.permute.xlu0 %2663
    %v2667 = vadd.f32 %v2546, %v2662
    %v2668 = vadd.f32 %v2547, %v2664
    %v2669 = vtanh.pop %v2667
    %v2670 = vtanh.pop %v2668
    %v2671 = vsub.f32 %v2544, %v2669
    %v2672 = vsub.f32 %v2545, %v2670
    %2675 = vrot.lane.b32.xlu0 %v2671, 96
    %v2676 = vpop.permute.xlu0 %2675
    %2677 = vrot.lane.b32.xlu0 %v2672, 96
    %v2678 = vpop.permute.xlu0 %2677
    %v2681 = vmul.f32 %v2644, %v2676
    %v2682 = vmul.f32 %v2646, %v2678
    %2685 = vrot.lane.b32.xlu0 %v2681, 32
    %v2686 = vpop.permute.xlu0 %2685
    %2687 = vrot.lane.b32.xlu0 %v2682, 32
    %v2688 = vpop.permute.xlu0 %2687
    %v2691 = vadd.f32 %v2669, %v2686
    %v2692 = vadd.f32 %v2670, %v2688
    %v2693 = vld [vmem:[%s0 + $0x120] sm:$0xff]
    %v2694 = vld [vmem:[%s0 + $0x128] sm:$0xff]
    %2697 = vrot.lane.b32.xlu0 %v2691, 64
    %v2698 = vpop.permute.xlu0 %2697
    %2699 = vrot.lane.b32.xlu0 %v2692, 64
    %v2700 = vpop.permute.xlu0 %2699
    %v2701 = vsel %vm32, %v2698, 0
    %v2703 = vsel %vm32, %v2700, 0
    %2705 = vmatprep.subr.mxu0 0.0
    %2706 = vmatpush1.msra.mxu0 0.0
    %2707 = vmatprep.subr.mxu0 0.0
    %2708 = vmatpush1.msra.mxu0 0.0
    %2709 = vmatprep.subr.mxu0 0.0
    %2710 = vmatpush1.msra.mxu0 0.0
    %2711 = vmatprep.subr.mxu0 0.0
    %2712 = vmatpush1.msra.mxu0 0.0
    %2713 = vmatprep.subr.mxu0 0.0
    %2714 = vmatpush1.msra.mxu0 0.0
    %2715 = vmatprep.subr.mxu0 0.0
    %2716 = vmatpush1.msra.mxu0 0.0
    %2717 = vmatprep.subr.mxu0 0.0
    %2718 = vmatpush1.msra.mxu0 0.0
    %2719 = vmatprep.subr.mxu0 0.0
    %2720 = vmatpush1.msra.mxu0 0.0
    %2721 = vmatprep.subr.mxu0 0.0
    %2722 = vmatpush1.msra.mxu0 0.0
    %2723 = vmatprep.subr.mxu0 0.0
    %2724 = vmatpush1.msra.mxu0 0.0
    %2725 = vmatprep.subr.mxu0 0.0
    %2726 = vmatpush1.msra.mxu0 0.0
    %2727 = vmatprep.subr.mxu0 0.0
    %2728 = vmatpush1.msra.mxu0 0.0
    %2729 = vmatprep.subr.mxu0 0.0
    %2730 = vmatpush1.msra.mxu0 %v21
    %2731 = vmatprep.subr.mxu0 0.0
    %2732 = vmatpush1.msra.mxu0 %v20
    %2733 = vmatprep.subr.mxu0 0.0
    %2734 = vmatpush1.msra.mxu0 %v19
    %2735 = vmatprep.subr.mxu0 0.0
    %2736 = vmatpush1.msra.mxu0 %v18
    %2737 = vmatprep.subr.mxu0 0.0
    %2738 = vmatpush2.msra.mxu0 0.0
    %2739 = vmatprep.subr.mxu0 0.0
    %2740 = vmatpush2.msra.mxu0 0.0
    %2741 = vmatprep.subr.mxu0 0.0
    %2742 = vmatpush2.msra.mxu0 0.0
    %2743 = vmatprep.subr.mxu0 0.0
    %2744 = vmatpush2.msra.mxu0 0.0
    %2745 = vmatprep.subr.mxu0 0.0
    %2746 = vmatpush2.msra.mxu0 0.0
    %2747 = vmatprep.subr.mxu0 0.0
    %2748 = vmatpush2.msra.mxu0 0.0
    %2749 = vmatprep.subr.mxu0 0.0
    %2750 = vmatpush2.msra.mxu0 0.0
    %2751 = vmatprep.subr.mxu0 0.0
    %2752 = vmatpush2.msra.mxu0 0.0
    %2753 = vmatprep.subr.mxu0 0.0
    %2754 = vmatpush2.msra.mxu0 0.0
    %2755 = vmatprep.subr.mxu0 0.0
    %2756 = vmatpush2.msra.mxu0 0.0
    %2757 = vmatprep.subr.mxu0 0.0
    %2758 = vmatpush2.msra.mxu0 0.0
    %2759 = vmatprep.subr.mxu0 0.0
    %2760 = vmatpush2.msra.mxu0 0.0
    %2761 = vmatprep.subr.mxu0 0.0
    %2762 = vmatpush2.msra.mxu0 0.0
    %2763 = vmatprep.subr.mxu0 0.0
    %2764 = vmatpush2.msra.mxu0 0.0
    %2765 = vmatprep.subr.mxu0 0.0
    %2766 = vmatpush2.msra.mxu0 0.0
    %2767 = vmatprep.subr.mxu0 0.0
    %2768 = vmatpush2.msra.mxu0 0.0
    %2769 = vmatprep.mubr.f32.mxu0 0.0
    %2770 = vmatmul.mubr.f32.gmra.mxu0 %v2701
    %v2771 = vpop.f32.mrf.mxu0
    %v2772 = vadd.f32 0.0, %v2771
    %v2773 = vpop.f32.mrf.mxu0
    %2774 = vmatprep.mubr.f32.mxu0 0.0
    %2775 = vmatmul.mubr.f32.gmra.mxu0 %v2703
    %v2776 = vpop.f32.mrf.mxu0
    %v2777 = vadd.f32 0.0, %v2776
    %v2778 = vpop.f32.mrf.mxu0
    %2779 = vdwg.mxu0
    %v2780 = vadd.f32 %v2693, %v2772
    %v2781 = vadd.f32 %v2694, %v2777
    %v2782 = vxor.u32 %v2780, 2147483648
    %v2783 = vxor.u32 %v2781, 2147483648
    %v2784 = vmul.f32 %v2782, 1.442695
    %v2785 = vpow.pop %v2784
    %v2786 = vmul.f32 %v2783, 1.442695
    %v2787 = vpow.pop %v2786
    %v2788 = vadd.f32 %v2785, 1.0
    %v2789 = vadd.f32 %v2787, 1.0
    %v2790 = vrcp.pop %v2788
    %v2791 = vmul.f32 1.0, %v2790
    %v2792 = vrcp.pop %v2789
    %v2793 = vmul.f32 1.0, %v2792
    %v2794 = vadd.f32 %v2772, %v129
    %v2795 = vadd.f32 %v2777, %v129
    %2798 = vrot.lane.b32.xlu0 %v2794, 64
    %v2799 = vpop.permute.xlu0 %2798
    %2800 = vrot.lane.b32.xlu0 %v2795, 64
    %v2801 = vpop.permute.xlu0 %2800
    %v2804 = vmul.f32 %v2791, %v2799
    %v2805 = vmul.f32 %v2793, %v2801
    %2808 = vrot.lane.b32.xlu0 %v2804, 64
    %v2809 = vpop.permute.xlu0 %2808
    %2810 = vrot.lane.b32.xlu0 %v2805, 64
    %v2811 = vpop.permute.xlu0 %2810
    %v2814 = vadd.f32 %v2693, %v2809
    %v2815 = vadd.f32 %v2694, %v2811
    %v2816 = vtanh.pop %v2814
    %v2817 = vtanh.pop %v2815
    %v2818 = vsub.f32 %v2691, %v2816
    %v2819 = vsub.f32 %v2692, %v2817
    %2822 = vrot.lane.b32.xlu0 %v2818, 96
    %v2823 = vpop.permute.xlu0 %2822
    %2824 = vrot.lane.b32.xlu0 %v2819, 96
    %v2825 = vpop.permute.xlu0 %2824
    %v2828 = vmul.f32 %v2791, %v2823
    %v2829 = vmul.f32 %v2793, %v2825
    %2832 = vrot.lane.b32.xlu0 %v2828, 32
    %v2833 = vpop.permute.xlu0 %2832
    %2834 = vrot.lane.b32.xlu0 %v2829, 32
    %v2835 = vpop.permute.xlu0 %2834
    %v2838 = vadd.f32 %v2816, %v2833
    %v2839 = vadd.f32 %v2817, %v2835
    %v2840 = vld [vmem:[%s0 + $0x130] sm:$0xff]
    %v2841 = vld [vmem:[%s0 + $0x138] sm:$0xff]
    %2844 = vrot.lane.b32.xlu0 %v2838, 64
    %v2845 = vpop.permute.xlu0 %2844
    %2846 = vrot.lane.b32.xlu0 %v2839, 64
    %v2847 = vpop.permute.xlu0 %2846
    %v2848 = vsel %vm32, %v2845, 0
    %v2850 = vsel %vm32, %v2847, 0
    %2852 = vmatprep.subr.mxu0 0.0
    %2853 = vmatpush1.msra.mxu0 0.0
    %2854 = vmatprep.subr.mxu0 0.0
    %2855 = vmatpush1.msra.mxu0 0.0
    %2856 = vmatprep.subr.mxu0 0.0
    %2857 = vmatpush1.msra.mxu0 0.0
    %2858 = vmatprep.subr.mxu0 0.0
    %2859 = vmatpush1.msra.mxu0 0.0
    %2860 = vmatprep.subr.mxu0 0.0
    %2861 = vmatpush1.msra.mxu0 0.0
    %2862 = vmatprep.subr.mxu0 0.0
    %2863 = vmatpush1.msra.mxu0 0.0
    %2864 = vmatprep.subr.mxu0 0.0
    %2865 = vmatpush1.msra.mxu0 0.0
    %2866 = vmatprep.subr.mxu0 0.0
    %2867 = vmatpush1.msra.mxu0 0.0
    %2868 = vmatprep.subr.mxu0 0.0
    %2869 = vmatpush1.msra.mxu0 0.0
    %2870 = vmatprep.subr.mxu0 0.0
    %2871 = vmatpush1.msra.mxu0 0.0
    %2872 = vmatprep.subr.mxu0 0.0
    %2873 = vmatpush1.msra.mxu0 0.0
    %2874 = vmatprep.subr.mxu0 0.0
    %2875 = vmatpush1.msra.mxu0 0.0
    %2876 = vmatprep.subr.mxu0 0.0
    %2877 = vmatpush1.msra.mxu0 %v21
    %2878 = vmatprep.subr.mxu0 0.0
    %2879 = vmatpush1.msra.mxu0 %v20
    %2880 = vmatprep.subr.mxu0 0.0
    %2881 = vmatpush1.msra.mxu0 %v19
    %2882 = vmatprep.subr.mxu0 0.0
    %2883 = vmatpush1.msra.mxu0 %v18
    %2884 = vmatprep.subr.mxu0 0.0
    %2885 = vmatpush2.msra.mxu0 0.0
    %2886 = vmatprep.subr.mxu0 0.0
    %2887 = vmatpush2.msra.mxu0 0.0
    %2888 = vmatprep.subr.mxu0 0.0
    %2889 = vmatpush2.msra.mxu0 0.0
    %2890 = vmatprep.subr.mxu0 0.0
    %2891 = vmatpush2.msra.mxu0 0.0
    %2892 = vmatprep.subr.mxu0 0.0
    %2893 = vmatpush2.msra.mxu0 0.0
    %2894 = vmatprep.subr.mxu0 0.0
    %2895 = vmatpush2.msra.mxu0 0.0
    %2896 = vmatprep.subr.mxu0 0.0
    %2897 = vmatpush2.msra.mxu0 0.0
    %2898 = vmatprep.subr.mxu0 0.0
    %2899 = vmatpush2.msra.mxu0 0.0
    %2900 = vmatprep.subr.mxu0 0.0
    %2901 = vmatpush2.msra.mxu0 0.0
    %2902 = vmatprep.subr.mxu0 0.0
    %2903 = vmatpush2.msra.mxu0 0.0
    %2904 = vmatprep.subr.mxu0 0.0
    %2905 = vmatpush2.msra.mxu0 0.0
    %2906 = vmatprep.subr.mxu0 0.0
    %2907 = vmatpush2.msra.mxu0 0.0
    %2908 = vmatprep.subr.mxu0 0.0
    %2909 = vmatpush2.msra.mxu0 0.0
    %2910 = vmatprep.subr.mxu0 0.0
    %2911 = vmatpush2.msra.mxu0 0.0
    %2912 = vmatprep.subr.mxu0 0.0
    %2913 = vmatpush2.msra.mxu0 0.0
    %2914 = vmatprep.subr.mxu0 0.0
    %2915 = vmatpush2.msra.mxu0 0.0
    %2916 = vmatprep.mubr.f32.mxu0 0.0
    %2917 = vmatmul.mubr.f32.gmra.mxu0 %v2848
    %v2918 = vpop.f32.mrf.mxu0
    %v2919 = vadd.f32 0.0, %v2918
    %v2920 = vpop.f32.mrf.mxu0
    %2921 = vmatprep.mubr.f32.mxu0 0.0
    %2922 = vmatmul.mubr.f32.gmra.mxu0 %v2850
    %v2923 = vpop.f32.mrf.mxu0
    %v2924 = vadd.f32 0.0, %v2923
    %v2925 = vpop.f32.mrf.mxu0
    %2926 = vdwg.mxu0
    %v2927 = vadd.f32 %v2840, %v2919
    %v2928 = vadd.f32 %v2841, %v2924
    %v2929 = vxor.u32 %v2927, 2147483648
    %v2930 = vxor.u32 %v2928, 2147483648
    %v2931 = vmul.f32 %v2929, 1.442695
    %v2932 = vpow.pop %v2931
    %v2933 = vmul.f32 %v2930, 1.442695
    %v2934 = vpow.pop %v2933
    %v2935 = vadd.f32 %v2932, 1.0
    %v2936 = vadd.f32 %v2934, 1.0
    %v2937 = vrcp.pop %v2935
    %v2938 = vmul.f32 1.0, %v2937
    %v2939 = vrcp.pop %v2936
    %v2940 = vmul.f32 1.0, %v2939
    %v2941 = vadd.f32 %v2919, %v129
    %v2942 = vadd.f32 %v2924, %v129
    %2945 = vrot.lane.b32.xlu0 %v2941, 64
    %v2946 = vpop.permute.xlu0 %2945
    %2947 = vrot.lane.b32.xlu0 %v2942, 64
    %v2948 = vpop.permute.xlu0 %2947
    %v2951 = vmul.f32 %v2938, %v2946
    %v2952 = vmul.f32 %v2940, %v2948
    %2955 = vrot.lane.b32.xlu0 %v2951, 64
    %v2956 = vpop.permute.xlu0 %2955
    %2957 = vrot.lane.b32.xlu0 %v2952, 64
    %v2958 = vpop.permute.xlu0 %2957
    %v2961 = vadd.f32 %v2840, %v2956
    %v2962 = vadd.f32 %v2841, %v2958
    %v2963 = vtanh.pop %v2961
    %v2964 = vtanh.pop %v2962
    %v2965 = vsub.f32 %v2838, %v2963
    %v2966 = vsub.f32 %v2839, %v2964
    %2969 = vrot.lane.b32.xlu0 %v2965, 96
    %v2970 = vpop.permute.xlu0 %2969
    %2971 = vrot.lane.b32.xlu0 %v2966, 96
    %v2972 = vpop.permute.xlu0 %2971
    %v2975 = vmul.f32 %v2938, %v2970
    %v2976 = vmul.f32 %v2940, %v2972
    %2979 = vrot.lane.b32.xlu0 %v2975, 32
    %v2980 = vpop.permute.xlu0 %2979
    %2981 = vrot.lane.b32.xlu0 %v2976, 32
    %v2982 = vpop.permute.xlu0 %2981
    %v2985 = vadd.f32 %v2963, %v2980
    %v2986 = vadd.f32 %v2964, %v2982
    %v2987 = vld [vmem:[%s0 + $0x140] sm:$0xff]
    %v2988 = vld [vmem:[%s0 + $0x148] sm:$0xff]
    %2991 = vrot.lane.b32.xlu0 %v2985, 64
    %v2992 = vpop.permute.xlu0 %2991
    %2993 = vrot.lane.b32.xlu0 %v2986, 64
    %v2994 = vpop.permute.xlu0 %2993
    %v2995 = vsel %vm32, %v2992, 0
    %v2997 = vsel %vm32, %v2994, 0
    %2999 = vmatprep.subr.mxu0 0.0
    %3000 = vmatpush1.msra.mxu0 0.0
    %3001 = vmatprep.subr.mxu0 0.0
    %3002 = vmatpush1.msra.mxu0 0.0
    %3003 = vmatprep.subr.mxu0 0.0
    %3004 = vmatpush1.msra.mxu0 0.0
    %3005 = vmatprep.subr.mxu0 0.0
    %3006 = vmatpush1.msra.mxu0 0.0
    %3007 = vmatprep.subr.mxu0 0.0
    %3008 = vmatpush1.msra.mxu0 0.0
    %3009 = vmatprep.subr.mxu0 0.0
    %3010 = vmatpush1.msra.mxu0 0.0
    %3011 = vmatprep.subr.mxu0 0.0
    %3012 = vmatpush1.msra.mxu0 0.0
    %3013 = vmatprep.subr.mxu0 0.0
    %3014 = vmatpush1.msra.mxu0 0.0
    %3015 = vmatprep.subr.mxu0 0.0
    %3016 = vmatpush1.msra.mxu0 0.0
    %3017 = vmatprep.subr.mxu0 0.0
    %3018 = vmatpush1.msra.mxu0 0.0
    %3019 = vmatprep.subr.mxu0 0.0
    %3020 = vmatpush1.msra.mxu0 0.0
    %3021 = vmatprep.subr.mxu0 0.0
    %3022 = vmatpush1.msra.mxu0 0.0
    %3023 = vmatprep.subr.mxu0 0.0
    %3024 = vmatpush1.msra.mxu0 %v21
    %3025 = vmatprep.subr.mxu0 0.0
    %3026 = vmatpush1.msra.mxu0 %v20
    %3027 = vmatprep.subr.mxu0 0.0
    %3028 = vmatpush1.msra.mxu0 %v19
    %3029 = vmatprep.subr.mxu0 0.0
    %3030 = vmatpush1.msra.mxu0 %v18
    %3031 = vmatprep.subr.mxu0 0.0
    %3032 = vmatpush2.msra.mxu0 0.0
    %3033 = vmatprep.subr.mxu0 0.0
    %3034 = vmatpush2.msra.mxu0 0.0
    %3035 = vmatprep.subr.mxu0 0.0
    %3036 = vmatpush2.msra.mxu0 0.0
    %3037 = vmatprep.subr.mxu0 0.0
    %3038 = vmatpush2.msra.mxu0 0.0
    %3039 = vmatprep.subr.mxu0 0.0
    %3040 = vmatpush2.msra.mxu0 0.0
    %3041 = vmatprep.subr.mxu0 0.0
    %3042 = vmatpush2.msra.mxu0 0.0
    %3043 = vmatprep.subr.mxu0 0.0
    %3044 = vmatpush2.msra.mxu0 0.0
    %3045 = vmatprep.subr.mxu0 0.0
    %3046 = vmatpush2.msra.mxu0 0.0
    %3047 = vmatprep.subr.mxu0 0.0
    %3048 = vmatpush2.msra.mxu0 0.0
    %3049 = vmatprep.subr.mxu0 0.0
    %3050 = vmatpush2.msra.mxu0 0.0
    %3051 = vmatprep.subr.mxu0 0.0
    %3052 = vmatpush2.msra.mxu0 0.0
    %3053 = vmatprep.subr.mxu0 0.0
    %3054 = vmatpush2.msra.mxu0 0.0
    %3055 = vmatprep.subr.mxu0 0.0
    %3056 = vmatpush2.msra.mxu0 0.0
    %3057 = vmatprep.subr.mxu0 0.0
    %3058 = vmatpush2.msra.mxu0 0.0
    %3059 = vmatprep.subr.mxu0 0.0
    %3060 = vmatpush2.msra.mxu0 0.0
    %3061 = vmatprep.subr.mxu0 0.0
    %3062 = vmatpush2.msra.mxu0 0.0
    %3063 = vmatprep.mubr.f32.mxu0 0.0
    %3064 = vmatmul.mubr.f32.gmra.mxu0 %v2995
    %v3065 = vpop.f32.mrf.mxu0
    %v3066 = vadd.f32 0.0, %v3065
    %v3067 = vpop.f32.mrf.mxu0
    %3068 = vmatprep.mubr.f32.mxu0 0.0
    %3069 = vmatmul.mubr.f32.gmra.mxu0 %v2997
    %v3070 = vpop.f32.mrf.mxu0
    %v3071 = vadd.f32 0.0, %v3070
    %v3072 = vpop.f32.mrf.mxu0
    %3073 = vdwg.mxu0
    %v3074 = vadd.f32 %v2987, %v3066
    %v3075 = vadd.f32 %v2988, %v3071
    %v3076 = vxor.u32 %v3074, 2147483648
    %v3077 = vxor.u32 %v3075, 2147483648
    %v3078 = vmul.f32 %v3076, 1.442695
    %v3079 = vpow.pop %v3078
    %v3080 = vmul.f32 %v3077, 1.442695
    %v3081 = vpow.pop %v3080
    %v3082 = vadd.f32 %v3079, 1.0
    %v3083 = vadd.f32 %v3081, 1.0
    %v3084 = vrcp.pop %v3082
    %v3085 = vmul.f32 1.0, %v3084
    %v3086 = vrcp.pop %v3083
    %v3087 = vmul.f32 1.0, %v3086
    %v3088 = vadd.f32 %v3066, %v129
    %v3089 = vadd.f32 %v3071, %v129
    %3092 = vrot.lane.b32.xlu0 %v3088, 64
    %v3093 = vpop.permute.xlu0 %3092
    %3094 = vrot.lane.b32.xlu0 %v3089, 64
    %v3095 = vpop.permute.xlu0 %3094
    %v3098 = vmul.f32 %v3085, %v3093
    %v3099 = vmul.f32 %v3087, %v3095
    %3102 = vrot.lane.b32.xlu0 %v3098, 64
    %v3103 = vpop.permute.xlu0 %3102
    %3104 = vrot.lane.b32.xlu0 %v3099, 64
    %v3105 = vpop.permute.xlu0 %3104
    %v3108 = vadd.f32 %v2987, %v3103
    %v3109 = vadd.f32 %v2988, %v3105
    %v3110 = vtanh.pop %v3108
    %v3111 = vtanh.pop %v3109
    %v3112 = vsub.f32 %v2985, %v3110
    %v3113 = vsub.f32 %v2986, %v3111
    %3116 = vrot.lane.b32.xlu0 %v3112, 96
    %v3117 = vpop.permute.xlu0 %3116
    %3118 = vrot.lane.b32.xlu0 %v3113, 96
    %v3119 = vpop.permute.xlu0 %3118
    %v3122 = vmul.f32 %v3085, %v3117
    %v3123 = vmul.f32 %v3087, %v3119
    %3126 = vrot.lane.b32.xlu0 %v3122, 32
    %v3127 = vpop.permute.xlu0 %3126
    %3128 = vrot.lane.b32.xlu0 %v3123, 32
    %v3129 = vpop.permute.xlu0 %3128
    %v3132 = vadd.f32 %v3110, %v3127
    %v3133 = vadd.f32 %v3111, %v3129
    %3136 = vrot.lane.b32.xlu0 %v3132, 64
    %v3137 = vpop.permute.xlu0 %3136
    %3138 = vrot.lane.b32.xlu0 %v3133, 64
    %v3139 = vpop.permute.xlu0 %3138
    %s3142 = scalar_lea.vmem [#allocation2], 32
    %3143 = vst.msk [vmem:[%s3142] sm:$0xff] %vm32, %v3137
    %3144 = vst.msk [vmem:[%s3142 + $0x8] sm:$0xff] %vm32, %v3139
    // Predicated region
    $region18: #{tpu_custom_call.1} parent=1 // pred_check
      _
    $region19: #{tpu_custom_call.1} parent=1 // pred_check_branch
      %3146 = sbr.rel (0) target = $region21
    $region20: #{tpu_custom_call.1} parent=1 // pred_region
      %s3148 = ssub.s32 768, 768
      %3149 = vsyncadd [#allocation3], %s3148
      %s3150 = sshll.u32 [#allocation2], 4
      %s3151 = int_to_ptr.vmem [resolvable:$true] %s3150
      %3156 = dma.vmem_to_hbm [thread:$0]  %s3151, 768, %s4, [#allocation3], 128, 128, 8
    $region21: #{tpu_custom_call.1} parent=1 // pred_fallthru
      _
    // Predicated region
    $region22: #{tpu_custom_call.1} parent=1 // pred_check
      _
    $region23: #{tpu_custom_call.1} parent=1 // pred_check_branch
      %3158 = sbr.rel (0) target = $region25
    $region24: #{tpu_custom_call.1} parent=1 // pred_region
      %3159 = dma.done [#allocation3], 768
    $region25: #{tpu_custom_call.1} parent=1 // pred_fallthru
      _
    %3160 = vsyncpa [#allocation3], 1

</llo_original>
